<compile_context>
chip_gen: v6e
topology: v6e:2x2x1
jax: 0.10.0
libtpu: 0.0.40
codegen_flags: <defaults>
</compile_context>

<pallas_src>
import math
import functools

import jax
import jax.numpy as jnp
from jax.experimental import pallas as pl
from jax.experimental.pallas import tpu as pltpu


_POINTNET_TILE_ROWS = 512            # row tile (over polylines) for the fused PointNet kernel
_VMEM_LIMIT_BYTES = 32 * 1024 * 1024  # explicit scoped-VMEM cap (portable to v7x 64 MiB)


def _compiler_params(n_parallel_axes=1):
    return pltpu.CompilerParams(
        dimension_semantics=("parallel",) * n_parallel_axes,
        vmem_limit_bytes=_VMEM_LIMIT_BYTES)


def _round_up(x, m):
    return ((x + m - 1) // m) * m


# ---------------------------------------------------------------------------
# Kernel 1: fused PointNet polyline encoder
# ---------------------------------------------------------------------------

def _pointnet_kernel(x_ref, m_ref, *refs, n_pre, n_mid, n_out, acts_out):
    """pre-MLP -> masked max-pool -> main MLP (split first-layer weights) ->
    masked max-pool -> out-MLP -> zero invalid polylines.  One block of polyline rows."""
    f32, bf16 = jnp.float32, jnp.bfloat16
    o_ref = refs[-1]
    wr = refs[:-1]
    TR, T, C = x_ref.shape

    m = m_ref[...]                                   # (TR, T, 1) in {0, 1}
    h = x_ref[...].reshape(TR * T, C)
    idx = 0
    # pre-MLP (Linear(+folded BN)+ReLU per layer); pointwise, so run on all points
    # and zero the invalid ones afterwards (matches the reference scatter-into-zeros).
    for _ in range(n_pre):
        w = wr[idx][...]
        b = wr[idx + 1][...]
        idx += 2
        h = jnp.dot(h.astype(bf16), w.astype(bf16), preferred_element_type=f32) + b
        h = jnp.maximum(h, 0.0)
    H = h.shape[-1]
    h3 = h.reshape(TR, T, H) * m                     # post-ReLU (>=0), so zero-fill is exact
    pooled = jnp.max(h3, axis=1)                     # (TR, H) first max-pool

    # first main-MLP layer with the (2H -> H1) weight split into top/bottom halves:
    #   relu(concat([feat, pooled]) @ W) == relu(feat @ W_top + pooled @ W_bot)
    w_top = wr[idx][...]
    w_bot = wr[idx + 1][...]
    b0 = wr[idx + 2][...]
    idx += 3
    part_x = jnp.dot(h3.reshape(TR * T, H).astype(bf16), w_top.astype(bf16),
                     preferred_element_type=f32)     # (TR*T, H1)
    part_p = jnp.dot(pooled.astype(bf16), w_bot.astype(bf16),
                     preferred_element_type=f32)     # (TR, H1)
    H1 = part_x.shape[-1]
    g = jnp.maximum(part_x.reshape(TR, T, H1) + part_p[:, None, :] + b0, 0.0)
    g = g.reshape(TR * T, H1)
    # remaining main-MLP layers (invalid points get zeroed before the second pool)
    for _ in range(n_mid - 1):
        w = wr[idx][...]
        b = wr[idx + 1][...]
        idx += 2
        g = jnp.dot(g.astype(bf16), w.astype(bf16), preferred_element_type=f32) + b
        g = jnp.maximum(g, 0.0)
    Hm = g.shape[-1]
    pooled2 = jnp.max(g.reshape(TR, T, Hm) * m, axis=1)   # (TR, Hm) second max-pool

    # out-MLP on pooled polyline features
    z = pooled2
    for li in range(n_out):
        w = wr[idx][...]
        b = wr[idx + 1][...]
        idx += 2
        z = jnp.dot(z.astype(bf16), w.astype(bf16), preferred_element_type=f32) + b
        if acts_out[li] == "relu":
            z = jnp.maximum(z, 0.0)
    valid = jnp.max(m, axis=1)                        # (TR, 1): 1 iff any valid point
    o_ref[...] = (z * valid).astype(o_ref.dtype)


def _pointnet_row_tile(R):
    """Row tile: multiple of 8 (output (TR, out_ch) alignment) or the full extent; prefer
    >=2 grid steps so both v7x TensorCores get work on a 'parallel' grid axis."""
    if R <= _POINTNET_TILE_ROWS:
        half = _round_up(-(-R // 2), 8)
        if half < R:
            return half                               # >=2 grid steps
        return R                                      # too small to split under 8-row alignment
    return _POINTNET_TILE_ROWS


def pallas_pointnet_encoder(polylines, polylines_mask, p):
    """polylines: (B, P, T, C) float32, polylines_mask: (B, P, T) bool -> (B, P, out_ch)."""
    B, P, T, C = polylines.shape
    R = B * P
    x = polylines.reshape(R, T, C).astype(jnp.float32)
    m = polylines_mask.reshape(R, T, 1).astype(jnp.float32)

    pre_w, pre_b = p["pre"]["w"], p["pre"]["b"]
    mid_w, mid_b = p["mlps"]["w"], p["mlps"]["b"]
    out_w, out_b = p["out"]["w"], p["out"]["b"]
    hid = pre_w[-1].shape[1]
    # split the first main-MLP weight: rows [:hid] multiply the per-point features,
    # rows [hid:] multiply the pooled feature (concat order of the reference).
    w_top, w_bot = mid_w[0][:hid], mid_w[0][hid:]

    weights, specs = [], []

    def _add(a):
        weights.append(a)
        specs.append(pl.BlockSpec(a.shape, lambda i: (0, 0)))

    for w, b in zip(pre_w, pre_b):
        _add(w)
        _add(b.reshape(1, -1))
    _add(w_top)
    _add(w_bot)
    _add(mid_b[0].reshape(1, -1))
    for w, b in zip(mid_w[1:], mid_b[1:]):
        _add(w)
        _add(b.reshape(1, -1))
    for w, b in zip(out_w, out_b):
        _add(w)
        _add(b.reshape(1, -1))

    out_ch = out_w[-1].shape[1]
    n_out = len(out_w)
    acts_out = tuple(["relu"] * (n_out - 1) + [None])   # out-MLP: ret_before_act on last layer
    TR = _pointnet_row_tile(R)

    feat = pl.pallas_call(
        functools.partial(_pointnet_kernel, n_pre=len(pre_w), n_mid=len(mid_w),
                          n_out=n_out, acts_out=acts_out),
        out_shape=jax.ShapeDtypeStruct((R, out_ch), jnp.float32),
        grid=(pl.cdiv(R, TR),),
        in_specs=[pl.BlockSpec((TR, T, C), lambda i: (i, 0, 0)),
                  pl.BlockSpec((TR, T, 1), lambda i: (i, 0, 0))] + specs,
        out_specs=pl.BlockSpec((TR, out_ch), lambda i: (i, 0)),
        compiler_params=_compiler_params(),
    )(x, m, *weights)
    return feat.reshape(B, P, out_ch)


# ---------------------------------------------------------------------------
# Kernel 2: fully fused transformer encoder layer (post-norm, eval/dropout=identity)
#   (x+pos) @ [Wq|Wk], x @ Wv  ->  per-head masked softmax attention
#   -> per-head accumulated out-projection -> +residual -> LayerNorm1
#   -> Linear/ReLU/Linear FFN -> +residual -> LayerNorm2
# ---------------------------------------------------------------------------

def _layer_norm(y, gamma, beta, eps):
    mu = jnp.mean(y, axis=-1, keepdims=True)
    yc = y - mu
    var = jnp.mean(yc * yc, axis=-1, keepdims=True)
    return yc * jax.lax.rsqrt(var + eps) * gamma + beta


def _encoder_layer_kernel(x_ref, pos_ref, bias_ref, wqk_ref, bqk_ref, wv_ref, bv_ref,
                          wo_ref, bo_ref, ln1g_ref, ln1b_ref, w1_ref, b1_ref,
                          w2_ref, b2_ref, ln2g_ref, ln2b_ref, o_ref, *, nhead, eps):
    f32, bf16 = jnp.float32, jnp.bfloat16
    TB, N, D = x_ref.shape
    hd = D // nhead

    x3 = x_ref[...]
    x2 = x3.reshape(TB * N, D)
    xp2 = (x3 + pos_ref[...]).reshape(TB * N, D)

    # fused Q|K projection of (x+pos) and V projection of x (1/sqrt(hd) folded into Wq/bq)
    qk = jnp.dot(xp2.astype(bf16), wqk_ref[...].astype(bf16),
                 preferred_element_type=f32) + bqk_ref[...]
    v = jnp.dot(x2.astype(bf16), wv_ref[...].astype(bf16),
                preferred_element_type=f32) + bv_ref[...]
    q3 = qk[:, :D].reshape(TB, N, D)
    k3 = qk[:, D:].reshape(TB, N, D)
    v3 = v.reshape(TB, N, D)

    bias = bias_ref[...]                              # (TB, 1, N): 0 valid / -1e30 padded keys
    wo = wo_ref[...]
    y = jnp.zeros((TB * N, D), f32)
    for h in range(nhead):                            # static unroll; heads = lane slices
        lo, hi = h * hd, (h + 1) * hd
        s = jnp.einsum("bqd,bkd->bqk", q3[:, :, lo:hi].astype(bf16),
                       k3[:, :, lo:hi].astype(bf16), preferred_element_type=f32)
        s = s + bias                                  # key-padding mask (additive)
        s = s - jnp.max(s, axis=-1, keepdims=True)
        e = jnp.exp(s)
        pa = e / jnp.sum(e, axis=-1, keepdims=True)   # exact softmax (matches torch)
        oh = jnp.einsum("bqk,bkd->bqd", pa.astype(bf16), v3[:, :, lo:hi].astype(bf16),
                        preferred_element_type=f32)
        # accumulate this head through its slice of the output projection:
        #   concat_h(oh) @ Wo == sum_h oh @ Wo[h*hd:(h+1)*hd]  -> no head concat/relayout
        y = y + jnp.dot(oh.reshape(TB * N, hd).astype(bf16), wo[lo:hi, :].astype(bf16),
                        preferred_element_type=f32)

    # out-projection bias + residual + LayerNorm 1 (dropout = identity in eval)
    src = _layer_norm(x2 + y + bo_ref[...], ln1g_ref[...], ln1b_ref[...], eps)
    # FFN + residual + LayerNorm 2
    h1 = jnp.maximum(jnp.dot(src.astype(bf16), w1_ref[...].astype(bf16),
                             preferred_element_type=f32) + b1_ref[...], 0.0)
    h2 = jnp.dot(h1.astype(bf16), w2_ref[...].astype(bf16),
                 preferred_element_type=f32) + b2_ref[...]
    out = _layer_norm(src + h2, ln2g_ref[...], ln2b_ref[...], eps)
    o_ref[...] = out.reshape(TB, N, D).astype(o_ref.dtype)


def pallas_transformer_encoder_layer(x, pos, attn_bias, p, nhead):
    """x, pos: (B, N, D); attn_bias: (B, 1, N) additive key mask.  One fused pallas_call,
    grid over the batch ('parallel' -> sharded across both TCs on v7x)."""
    B, N, D = x.shape
    Dffn = p["w1"].shape[1]
    weights = [p["wqk"], p["bqk"].reshape(1, 2 * D), p["wv"], p["bv"].reshape(1, D),
               p["wo"], p["bo"].reshape(1, D),
               p["ln1_g"].reshape(1, D), p["ln1_b"].reshape(1, D),
               p["w1"], p["b1"].reshape(1, Dffn), p["w2"], p["b2"].reshape(1, D),
               p["ln2_g"].reshape(1, D), p["ln2_b"].reshape(1, D)]
    w_specs = [pl.BlockSpec(w.shape, lambda i: (0, 0)) for w in weights]

    return pl.pallas_call(
        functools.partial(_encoder_layer_kernel, nhead=nhead, eps=1e-5),
        out_shape=jax.ShapeDtypeStruct((B, N, D), jnp.float32),
        grid=(B,),
        in_specs=[pl.BlockSpec((1, N, D), lambda i: (i, 0, 0)),
                  pl.BlockSpec((1, N, D), lambda i: (i, 0, 0)),
                  pl.BlockSpec((1, 1, N), lambda i: (i, 0, 0))] + w_specs,
        out_specs=pl.BlockSpec((1, N, D), lambda i: (i, 0, 0)),
        compiler_params=_compiler_params(),
    )(x, pos, attn_bias, *weights)


# ---------------------------------------------------------------------------
# Parameter construction (deterministic, torch-default-style uniform init)
# Pytrees contain ONLY arrays (jit-friendly); activation patterns are implied.
# ---------------------------------------------------------------------------

def _init_linear(key, c_in, c_out):
    k1, k2 = jax.random.split(key)
    bound = 1.0 / math.sqrt(c_in)
    w = jax.random.uniform(k1, (c_in, c_out), jnp.float32, -bound, bound)
    b = jax.random.uniform(k2, (c_out,), jnp.float32, -bound, bound)
    return w, b


def build_mlps_params(key, c_in, mlp_channels, ret_before_act=False, without_norm=False):
    """Mirrors MTR common_layers.build_mlps; BatchNorm1d (eval, default running stats)
    is folded into the preceding bias-free Linear."""
    ws, bs = [], []
    n = len(mlp_channels)
    for i, c_out in enumerate(mlp_channels):
        key, sub = jax.random.split(key)
        w, b = _init_linear(sub, c_in, c_out)
        if not ((i + 1 == n and ret_before_act) or without_norm):
            bn_scale = 1.0 / math.sqrt(1.0 + 1e-5)
            w = w * bn_scale
            b = jnp.zeros((c_out,), jnp.float32)
        ws.append(w)
        bs.append(b)
        c_in = c_out
    return dict(w=ws, b=bs)


def build_polyline_encoder_params(key, in_channels, hidden_dim, num_layers,
                                  num_pre_layers=1, out_channels=None):
    k1, k2, k3 = jax.random.split(key, 3)
    pre = build_mlps_params(k1, in_channels, [hidden_dim] * num_pre_layers)
    mlps = build_mlps_params(k2, hidden_dim * 2, [hidden_dim] * (num_layers - num_pre_layers))
    out = build_mlps_params(k3, hidden_dim, [hidden_dim, out_channels],
                            ret_before_act=True, without_norm=True)
    return dict(pre=pre, mlps=mlps, out=out)


def build_attn_layer_params(key, d_model, nhead):
    assert d_model % nhead == 0
    ks = jax.random.split(key, 6)
    wq, bq = _init_linear(ks[0], d_model, d_model)
    wk, bk = _init_linear(ks[1], d_model, d_model)
    wv, bv = _init_linear(ks[2], d_model, d_model)
    wo, bo = _init_linear(ks[3], d_model, d_model)
    w1, b1 = _init_linear(ks[4], d_model, d_model * 4)
    w2, b2 = _init_linear(ks[5], d_model * 4, d_model)
    scale = 1.0 / math.sqrt(d_model // nhead)         # fold 1/sqrt(head_dim) into Wq/bq
    return dict(
        wqk=jnp.concatenate([wq * scale, wk], axis=1),  # fused (scaled Q)|K projection weight
        bqk=jnp.concatenate([bq * scale, bk], axis=0),
        wv=wv, bv=bv, wo=wo, bo=bo, w1=w1, b1=b1, w2=w2, b2=b2,
        ln1_g=jnp.ones((d_model,), jnp.float32), ln1_b=jnp.zeros((d_model,), jnp.float32),
        ln2_g=jnp.ones((d_model,), jnp.float32), ln2_b=jnp.zeros((d_model,), jnp.float32))


# ---------------------------------------------------------------------------
# Model components
# ---------------------------------------------------------------------------

def gen_sineembed_for_position(pos_xy, hidden_dim):
    """pos_xy: (B, N, 2) -> (B, N, hidden_dim). Same math as MTR position_encoding_utils."""
    half = hidden_dim // 2
    scale = 2.0 * math.pi
    dim_t = jnp.arange(half, dtype=jnp.float32)
    dim_t = 10000.0 ** (2.0 * jnp.floor(dim_t / 2.0) / half)
    x_embed = pos_xy[..., 0] * scale
    y_embed = pos_xy[..., 1] * scale
    pos_x = x_embed[..., None] / dim_t
    pos_y = y_embed[..., None] / dim_t
    B, N = pos_xy.shape[0], pos_xy.shape[1]
    pos_x = jnp.stack((jnp.sin(pos_x[..., 0::2]), jnp.cos(pos_x[..., 1::2])), axis=-1).reshape(B, N, half)
    pos_y = jnp.stack((jnp.sin(pos_y[..., 0::2]), jnp.cos(pos_y[..., 1::2])), axis=-1).reshape(B, N, half)
    return jnp.concatenate((pos_y, pos_x), axis=-1)


@functools.partial(jax.jit, static_argnames=("nhead",))
def mtr_encoder_forward(params, obj_trajs, obj_trajs_mask, map_polylines, map_polylines_mask,
                        obj_trajs_last_pos, map_polylines_center, track_index_to_predict,
                        *, nhead):
    num_center_objects, num_objects = obj_trajs.shape[0], obj_trajs.shape[1]
    obj_trajs_in = jnp.concatenate(
        (obj_trajs, obj_trajs_mask[..., None].astype(obj_trajs.dtype)), axis=-1)

    obj_feature = pallas_pointnet_encoder(obj_trajs_in, obj_trajs_mask, params["agent"])
    map_feature = pallas_pointnet_encoder(map_polylines, map_polylines_mask, params["map"])

    obj_valid_mask = jnp.sum(obj_trajs_mask, axis=-1) > 0
    map_valid_mask = jnp.sum(map_polylines_mask, axis=-1) > 0

    tokens = jnp.concatenate((obj_feature, map_feature), axis=1)
    token_mask = jnp.concatenate((obj_valid_mask, map_valid_mask), axis=1)
    token_pos = jnp.concatenate((obj_trajs_last_pos, map_polylines_center), axis=1)
    # NOTE: the reference's host-sync `assert all(mask.sum(-1) > 0)` is dropped so the whole
    # forward stays jittable; an all-invalid row would degenerate to uniform attention.

    D = tokens.shape[-1]
    pos_embedding = gen_sineembed_for_position(token_pos[..., 0:2], hidden_dim=D)
    # additive key-padding mask, precomputed once and reused by every layer: (B, 1, N)
    attn_bias = jnp.where(token_mask, 0.0, -1e30).astype(jnp.float32)[:, None, :]

    out = tokens
    for p in params["attn"]:
        out = pallas_transformer_encoder_layer(out, pos_embedding, attn_bias, p, nhead)

    obj_out = out[:, :num_objects]
    map_out = out[:, num_objects:]
    center = obj_out[jnp.arange(num_center_objects), track_index_to_predict]
    return center, obj_out, map_out, obj_valid_mask, map_valid_mask


class MTREncoderPallas:
    def __init__(self, config, key):
        self.cfg = config
        self.nhead = config["NUM_ATTN_HEAD"]
        k1, k2, k3 = jax.random.split(key, 3)
        agent = build_polyline_encoder_params(
            k1, in_channels=config["NUM_INPUT_ATTR_AGENT"] + 1,
            hidden_dim=config["NUM_CHANNEL_IN_MLP_AGENT"],
            num_layers=config["NUM_LAYER_IN_MLP_AGENT"],
            num_pre_layers=1, out_channels=config["D_MODEL"])
        map_p = build_polyline_encoder_params(
            k2, in_channels=config["NUM_INPUT_ATTR_MAP"],
            hidden_dim=config["NUM_CHANNEL_IN_MLP_MAP"],
            num_layers=config["NUM_LAYER_IN_MLP_MAP"],
            num_pre_layers=config["NUM_LAYER_IN_PRE_MLP_MAP"],
            out_channels=config["D_MODEL"])
        attn_keys = jax.random.split(k3, config["NUM_ATTN_LAYERS"])
        attn = [build_attn_layer_params(k, config["D_MODEL"], self.nhead) for k in attn_keys]
        self.params = dict(agent=agent, map=map_p, attn=attn)
        # TODO(synk): USE_POSES=True branch (MLP/PointNet/Transformer pose encoders + GRU
        # pose_sequencer + feature fuser) and USE_LOCAL_ATTN=True branch (knn_batch_mlogk
        # local attention) are not implemented; this config disables both.

    def forward(self, batch_dict):
        input_dict = batch_dict["input_dict"]
        obj_trajs = input_dict["obj_trajs"]
        obj_trajs_mask = input_dict["obj_trajs_mask"]
        map_polylines = input_dict["map_polylines"]
        map_polylines_mask = input_dict["map_polylines_mask"]
        obj_trajs_last_pos = input_dict["obj_trajs_last_pos"]
        map_polylines_center = input_dict["map_polylines_center"]
        track_index_to_predict = input_dict["track_index_to_predict"]

        assert obj_trajs_mask.dtype == jnp.bool_ and map_polylines_mask.dtype == jnp.bool_
        num_polylines = map_polylines.shape[1]

        (center_objects_feature, obj_feature, map_feature,
         obj_valid_mask, map_valid_mask) = mtr_encoder_forward(
            self.params, obj_trajs, obj_trajs_mask, map_polylines, map_polylines_mask,
            obj_trajs_last_pos, map_polylines_center, track_index_to_predict,
            nhead=self.nhead)

        assert map_feature.shape[1] == num_polylines

        batch_dict["center_objects_feature"] = center_objects_feature
        batch_dict["obj_feature"] = obj_feature
        batch_dict["map_feature"] = map_feature
        batch_dict["obj_mask"] = obj_valid_mask
        batch_dict["map_mask"] = map_valid_mask
        batch_dict["obj_pos"] = obj_trajs_last_pos
        batch_dict["map_pos"] = map_polylines_center
        return batch_dict


# ---------------------------------------------------------------------------
# Main
# ---------------------------------------------------------------------------

if __name__ == "__main__":
    cfg = dict(
        NUM_INPUT_ATTR_AGENT=9, NUM_CHANNEL_IN_MLP_AGENT=32, NUM_LAYER_IN_MLP_AGENT=3,
        NUM_INPUT_ATTR_MAP=9, NUM_CHANNEL_IN_MLP_MAP=32, NUM_LAYER_IN_MLP_MAP=3,
        NUM_LAYER_IN_PRE_MLP_MAP=1,
        D_MODEL=32, NUM_ATTN_LAYERS=2, NUM_ATTN_HEAD=2,
        USE_LOCAL_ATTN=False, USE_POSES=False,
    )

    Bc, No, T = 2, 4, 8        # center objects, objects, timestamps
    Np, Pp = 4, 8              # map polylines, points per polyline

    root = jax.random.PRNGKey(0)
    k_model, k_a, k_am, k_m, k_mm, k_p1, k_p2 = jax.random.split(root, 7)

    obj_trajs = jax.random.normal(k_a, (Bc, No, T, cfg["NUM_INPUT_ATTR_AGENT"]), jnp.float32)
    obj_trajs_mask = jax.random.uniform(k_am, (Bc, No, T)) > 0.3
    obj_trajs_mask = obj_trajs_mask.at[:, 0, :].set(True)   # ensure at least one valid token
    map_polylines = jax.random.normal(k_m, (Bc, Np, Pp, cfg["NUM_INPUT_ATTR_MAP"]), jnp.float32)
    map_polylines_mask = jax.random.uniform(k_mm, (Bc, Np, Pp)) > 0.3
    map_polylines_mask = map_polylines_mask.at[:, 0, :].set(True)
    obj_trajs_last_pos = jax.random.normal(k_p1, (Bc, No, 3), jnp.float32)
    map_polylines_center = jax.random.normal(k_p2, (Bc, Np, 3), jnp.float32)
    track_index_to_predict = jnp.array([0, 2], dtype=jnp.int32)

    batch_dict = {
        "input_dict": {
            "obj_trajs": obj_trajs,
            "obj_trajs_mask": obj_trajs_mask,
            "map_polylines": map_polylines,
            "map_polylines_mask": map_polylines_mask,
            "obj_trajs_last_pos": obj_trajs_last_pos,
            "map_polylines_center": map_polylines_center,
            "track_index_to_predict": track_index_to_predict,
        }
    }

    model = MTREncoderPallas(cfg, k_model)
    out = model.forward(batch_dict)

    jax.block_until_ready(out["center_objects_feature"])
    jax.block_until_ready(out["obj_feature"])
    jax.block_until_ready(out["map_feature"])

    assert out["center_objects_feature"].shape == (Bc, cfg["D_MODEL"])
    assert out["obj_feature"].shape == (Bc, No, cfg["D_MODEL"])
    assert out["map_feature"].shape == (Bc, Np, cfg["D_MODEL"])
    assert bool(jnp.all(jnp.isfinite(out["center_objects_feature"])))
    print("KERNEL_OK")
</pallas_src>

<mosaic_0001>
module attributes {stable_mosaic.version = 11 : i64} {
  func.func @_pointnet_kernel(%arg0: i32, %arg1: memref<8x8x9xf32, #tpu.memory_space<vmem>>, %arg2: memref<8x8x1xf32, #tpu.memory_space<vmem>>, %arg3: memref<9x32xf32, #tpu.memory_space<vmem>>, %arg4: memref<1x32xf32, #tpu.memory_space<vmem>>, %arg5: memref<32x32xf32, #tpu.memory_space<vmem>>, %arg6: memref<32x32xf32, #tpu.memory_space<vmem>>, %arg7: memref<1x32xf32, #tpu.memory_space<vmem>>, %arg8: memref<32x32xf32, #tpu.memory_space<vmem>>, %arg9: memref<1x32xf32, #tpu.memory_space<vmem>>, %arg10: memref<32x32xf32, #tpu.memory_space<vmem>>, %arg11: memref<1x32xf32, #tpu.memory_space<vmem>>, %arg12: memref<32x32xf32, #tpu.memory_space<vmem>>, %arg13: memref<1x32xf32, #tpu.memory_space<vmem>>, %arg14: memref<8x32xf32, #tpu.memory_space<vmem>>) attributes {dimension_semantics = [#tpu.dimension_semantics<parallel>], iteration_bounds = array<i64: 1>, scalar_prefetch = 0 : i64, scratch_operands = 0 : i64, tpu.core_type = #tpu.core_type<tc>, window_params = [{transform_indices = @transform_0, window_bounds = array<i64: 8, 8, 9>}, {transform_indices = @transform_1, window_bounds = array<i64: 8, 8, 1>}, {pipeline_mode = #tpu.pipeline_mode<synchronous>, transform_indices = @transform_2, window_bounds = array<i64: 9, 32>}, {pipeline_mode = #tpu.pipeline_mode<synchronous>, transform_indices = @transform_3, window_bounds = array<i64: 1, 32>}, {pipeline_mode = #tpu.pipeline_mode<synchronous>, transform_indices = @transform_4, window_bounds = array<i64: 32, 32>}, {pipeline_mode = #tpu.pipeline_mode<synchronous>, transform_indices = @transform_5, window_bounds = array<i64: 32, 32>}, {pipeline_mode = #tpu.pipeline_mode<synchronous>, transform_indices = @transform_6, window_bounds = array<i64: 1, 32>}, {pipeline_mode = #tpu.pipeline_mode<synchronous>, transform_indices = @transform_7, window_bounds = array<i64: 32, 32>}, {pipeline_mode = #tpu.pipeline_mode<synchronous>, transform_indices = @transform_8, window_bounds = array<i64: 1, 32>}, {pipeline_mode = #tpu.pipeline_mode<synchronous>, transform_indices = @transform_9, window_bounds = array<i64: 32, 32>}, {pipeline_mode = #tpu.pipeline_mode<synchronous>, transform_indices = @transform_10, window_bounds = array<i64: 1, 32>}, {pipeline_mode = #tpu.pipeline_mode<synchronous>, transform_indices = @transform_11, window_bounds = array<i64: 32, 32>}, {pipeline_mode = #tpu.pipeline_mode<synchronous>, transform_indices = @transform_12, window_bounds = array<i64: 1, 32>}, {transform_indices = @transform_13, window_bounds = array<i64: 8, 32>}]} {
    %c0 = arith.constant 0 : index
    %c0_0 = arith.constant 0 : index
    %c0_1 = arith.constant 0 : index
    %0 = vector.load %arg2[%c0, %c0_0, %c0_1] : memref<8x8x1xf32, #tpu.memory_space<vmem>>, vector<8x8x1xf32>
    %c0_2 = arith.constant 0 : index
    %c0_3 = arith.constant 0 : index
    %c0_4 = arith.constant 0 : index
    %1 = vector.load %arg1[%c0_2, %c0_3, %c0_4] : memref<8x8x9xf32, #tpu.memory_space<vmem>>, vector<8x8x9xf32>
    %2 = vector.shape_cast %1 : vector<8x8x9xf32> to vector<64x9xf32>
    %c0_5 = arith.constant 0 : index
    %c0_6 = arith.constant 0 : index
    %3 = vector.load %arg3[%c0_5, %c0_6] : memref<9x32xf32, #tpu.memory_space<vmem>>, vector<9x32xf32>
    %c0_7 = arith.constant 0 : index
    %c0_8 = arith.constant 0 : index
    %4 = vector.load %arg4[%c0_7, %c0_8] : memref<1x32xf32, #tpu.memory_space<vmem>>, vector<1x32xf32>
    %5 = arith.truncf %2 : vector<64x9xf32> to vector<64x9xbf16>
    %6 = arith.truncf %3 : vector<9x32xf32> to vector<9x32xbf16>
    %cst = arith.constant dense<0.000000e+00> : vector<64x32xf32>
    %7 = tpu.matmul %5, %6, %cst {dimension_numbers = #tpu.dot_dimension_numbers<[1], [0], [0], [1], [0, 0, 1, 1], [], []>} : vector<64x9xbf16>, vector<9x32xbf16>, vector<64x32xf32> -> vector<64x32xf32>
    %8 = vector.broadcast %4 : vector<1x32xf32> to vector<64x32xf32>
    %9 = arith.addf %7, %8 : vector<64x32xf32>
    %cst_9 = arith.constant 0.000000e+00 : f32
    %10 = vector.broadcast %cst_9 : f32 to vector<64x32xf32>
    %11 = arith.maximumf %9, %10 : vector<64x32xf32>
    %12 = vector.shape_cast %11 : vector<64x32xf32> to vector<8x8x32xf32>
    %13 = vector.broadcast %0 : vector<8x8x1xf32> to vector<8x8x32xf32>
    %14 = arith.mulf %12, %13 : vector<8x8x32xf32>
    %cst_10 = arith.constant dense<0xFF800000> : vector<8x32xf32>
    %15 = vector.multi_reduction <maximumf>, %14, %cst_10 [1] : vector<8x8x32xf32> to vector<8x32xf32>
    %c0_11 = arith.constant 0 : index
    %c0_12 = arith.constant 0 : index
    %16 = vector.load %arg5[%c0_11, %c0_12] : memref<32x32xf32, #tpu.memory_space<vmem>>, vector<32x32xf32>
    %c0_13 = arith.constant 0 : index
    %c0_14 = arith.constant 0 : index
    %17 = vector.load %arg6[%c0_13, %c0_14] : memref<32x32xf32, #tpu.memory_space<vmem>>, vector<32x32xf32>
    %c0_15 = arith.constant 0 : index
    %c0_16 = arith.constant 0 : index
    %18 = vector.load %arg7[%c0_15, %c0_16] : memref<1x32xf32, #tpu.memory_space<vmem>>, vector<1x32xf32>
    %19 = vector.shape_cast %14 : vector<8x8x32xf32> to vector<64x32xf32>
    %20 = arith.truncf %19 : vector<64x32xf32> to vector<64x32xbf16>
    %21 = arith.truncf %16 : vector<32x32xf32> to vector<32x32xbf16>
    %cst_17 = arith.constant dense<0.000000e+00> : vector<64x32xf32>
    %22 = tpu.matmul %20, %21, %cst_17 {dimension_numbers = #tpu.dot_dimension_numbers<[1], [0], [0], [1], [0, 0, 1, 1], [], []>} : vector<64x32xbf16>, vector<32x32xbf16>, vector<64x32xf32> -> vector<64x32xf32>
    %23 = arith.truncf %15 : vector<8x32xf32> to vector<8x32xbf16>
    %24 = arith.truncf %17 : vector<32x32xf32> to vector<32x32xbf16>
    %cst_18 = arith.constant dense<0.000000e+00> : vector<8x32xf32>
    %25 = tpu.matmul %23, %24, %cst_18 {dimension_numbers = #tpu.dot_dimension_numbers<[1], [0], [0], [1], [0, 0, 1, 1], [], []>} : vector<8x32xbf16>, vector<32x32xbf16>, vector<8x32xf32> -> vector<8x32xf32>
    %26 = vector.shape_cast %22 : vector<64x32xf32> to vector<8x8x32xf32>
    %27 = vector.shape_cast %25 : vector<8x32xf32> to vector<8x1x32xf32>
    %28 = vector.broadcast %27 : vector<8x1x32xf32> to vector<8x8x32xf32>
    %29 = arith.addf %26, %28 : vector<8x8x32xf32>
    %30 = vector.shape_cast %18 : vector<1x32xf32> to vector<1x1x32xf32>
    %31 = vector.broadcast %30 : vector<1x1x32xf32> to vector<8x8x32xf32>
    %32 = arith.addf %29, %31 : vector<8x8x32xf32>
    %cst_19 = arith.constant 0.000000e+00 : f32
    %33 = vector.broadcast %cst_19 : f32 to vector<8x8x32xf32>
    %34 = arith.maximumf %32, %33 : vector<8x8x32xf32>
    %35 = vector.shape_cast %34 : vector<8x8x32xf32> to vector<64x32xf32>
    %c0_20 = arith.constant 0 : index
    %c0_21 = arith.constant 0 : index
    %36 = vector.load %arg8[%c0_20, %c0_21] : memref<32x32xf32, #tpu.memory_space<vmem>>, vector<32x32xf32>
    %c0_22 = arith.constant 0 : index
    %c0_23 = arith.constant 0 : index
    %37 = vector.load %arg9[%c0_22, %c0_23] : memref<1x32xf32, #tpu.memory_space<vmem>>, vector<1x32xf32>
    %38 = arith.truncf %35 : vector<64x32xf32> to vector<64x32xbf16>
    %39 = arith.truncf %36 : vector<32x32xf32> to vector<32x32xbf16>
    %cst_24 = arith.constant dense<0.000000e+00> : vector<64x32xf32>
    %40 = tpu.matmul %38, %39, %cst_24 {dimension_numbers = #tpu.dot_dimension_numbers<[1], [0], [0], [1], [0, 0, 1, 1], [], []>} : vector<64x32xbf16>, vector<32x32xbf16>, vector<64x32xf32> -> vector<64x32xf32>
    %41 = vector.broadcast %37 : vector<1x32xf32> to vector<64x32xf32>
    %42 = arith.addf %40, %41 : vector<64x32xf32>
    %cst_25 = arith.constant 0.000000e+00 : f32
    %43 = vector.broadcast %cst_25 : f32 to vector<64x32xf32>
    %44 = arith.maximumf %42, %43 : vector<64x32xf32>
    %45 = vector.shape_cast %44 : vector<64x32xf32> to vector<8x8x32xf32>
    %46 = vector.broadcast %0 : vector<8x8x1xf32> to vector<8x8x32xf32>
    %47 = arith.mulf %45, %46 : vector<8x8x32xf32>
    %cst_26 = arith.constant dense<0xFF800000> : vector<8x32xf32>
    %48 = vector.multi_reduction <maximumf>, %47, %cst_26 [1] : vector<8x8x32xf32> to vector<8x32xf32>
    %c0_27 = arith.constant 0 : index
    %c0_28 = arith.constant 0 : index
    %49 = vector.load %arg10[%c0_27, %c0_28] : memref<32x32xf32, #tpu.memory_space<vmem>>, vector<32x32xf32>
    %c0_29 = arith.constant 0 : index
    %c0_30 = arith.constant 0 : index
    %50 = vector.load %arg11[%c0_29, %c0_30] : memref<1x32xf32, #tpu.memory_space<vmem>>, vector<1x32xf32>
    %51 = arith.truncf %48 : vector<8x32xf32> to vector<8x32xbf16>
    %52 = arith.truncf %49 : vector<32x32xf32> to vector<32x32xbf16>
    %cst_31 = arith.constant dense<0.000000e+00> : vector<8x32xf32>
    %53 = tpu.matmul %51, %52, %cst_31 {dimension_numbers = #tpu.dot_dimension_numbers<[1], [0], [0], [1], [0, 0, 1, 1], [], []>} : vector<8x32xbf16>, vector<32x32xbf16>, vector<8x32xf32> -> vector<8x32xf32>
    %54 = vector.broadcast %50 : vector<1x32xf32> to vector<8x32xf32>
    %55 = arith.addf %53, %54 : vector<8x32xf32>
    %cst_32 = arith.constant 0.000000e+00 : f32
    %56 = vector.broadcast %cst_32 : f32 to vector<8x32xf32>
    %57 = arith.maximumf %55, %56 : vector<8x32xf32>
    %c0_33 = arith.constant 0 : index
    %c0_34 = arith.constant 0 : index
    %58 = vector.load %arg12[%c0_33, %c0_34] : memref<32x32xf32, #tpu.memory_space<vmem>>, vector<32x32xf32>
    %c0_35 = arith.constant 0 : index
    %c0_36 = arith.constant 0 : index
    %59 = vector.load %arg13[%c0_35, %c0_36] : memref<1x32xf32, #tpu.memory_space<vmem>>, vector<1x32xf32>
    %60 = arith.truncf %57 : vector<8x32xf32> to vector<8x32xbf16>
    %61 = arith.truncf %58 : vector<32x32xf32> to vector<32x32xbf16>
    %cst_37 = arith.constant dense<0.000000e+00> : vector<8x32xf32>
    %62 = tpu.matmul %60, %61, %cst_37 {dimension_numbers = #tpu.dot_dimension_numbers<[1], [0], [0], [1], [0, 0, 1, 1], [], []>} : vector<8x32xbf16>, vector<32x32xbf16>, vector<8x32xf32> -> vector<8x32xf32>
    %63 = vector.broadcast %59 : vector<1x32xf32> to vector<8x32xf32>
    %64 = arith.addf %62, %63 : vector<8x32xf32>
    %cst_38 = arith.constant dense<0xFF800000> : vector<8x1xf32>
    %65 = vector.multi_reduction <maximumf>, %0, %cst_38 [1] : vector<8x8x1xf32> to vector<8x1xf32>
    %66 = vector.broadcast %65 : vector<8x1xf32> to vector<8x32xf32>
    %67 = arith.mulf %64, %66 : vector<8x32xf32>
    %c0_39 = arith.constant 0 : index
    %c0_40 = arith.constant 0 : index
    %68 = vector.load %arg14[%c0_39, %c0_40] : memref<8x32xf32, #tpu.memory_space<vmem>>, vector<8x32xf32>
    tpu.vector_store %arg14[%c0_39, %c0_40], %67 {strides = array<i32>} : memref<8x32xf32, #tpu.memory_space<vmem>>, vector<8x32xf32>,
    return
  }
  func.func @transform_0(%arg0: i32) -> (i32, i32, i32) {
    %c0_i32 = arith.constant 0 : i32
    %c0_i32_0 = arith.constant 0 : i32
    %c0_i32_1 = arith.constant 0 : i32
    return %arg0, %c0_i32, %c0_i32_0 : i32, i32, i32
  }
  func.func @transform_1(%arg0: i32) -> (i32, i32, i32) {
    %c0_i32 = arith.constant 0 : i32
    %c0_i32_0 = arith.constant 0 : i32
    %c0_i32_1 = arith.constant 0 : i32
    return %arg0, %c0_i32, %c0_i32_0 : i32, i32, i32
  }
  func.func @transform_2(%arg0: i32) -> (i32, i32) {
    %c0_i32 = arith.constant 0 : i32
    %c0_i32_0 = arith.constant 0 : i32
    %c0_i32_1 = arith.constant 0 : i32
    return %c0_i32, %c0_i32_0 : i32, i32
  }
  func.func @transform_3(%arg0: i32) -> (i32, i32) {
    %c0_i32 = arith.constant 0 : i32
    %c0_i32_0 = arith.constant 0 : i32
    %c0_i32_1 = arith.constant 0 : i32
    return %c0_i32, %c0_i32_0 : i32, i32
  }
  func.func @transform_4(%arg0: i32) -> (i32, i32) {
    %c0_i32 = arith.constant 0 : i32
    %c0_i32_0 = arith.constant 0 : i32
    %c0_i32_1 = arith.constant 0 : i32
    return %c0_i32, %c0_i32_0 : i32, i32
  }
  func.func @transform_5(%arg0: i32) -> (i32, i32) {
    %c0_i32 = arith.constant 0 : i32
    %c0_i32_0 = arith.constant 0 : i32
    %c0_i32_1 = arith.constant 0 : i32
    return %c0_i32, %c0_i32_0 : i32, i32
  }
  func.func @transform_6(%arg0: i32) -> (i32, i32) {
    %c0_i32 = arith.constant 0 : i32
    %c0_i32_0 = arith.constant 0 : i32
    %c0_i32_1 = arith.constant 0 : i32
    return %c0_i32, %c0_i32_0 : i32, i32
  }
  func.func @transform_7(%arg0: i32) -> (i32, i32) {
    %c0_i32 = arith.constant 0 : i32
    %c0_i32_0 = arith.constant 0 : i32
    %c0_i32_1 = arith.constant 0 : i32
    return %c0_i32, %c0_i32_0 : i32, i32
  }
  func.func @transform_8(%arg0: i32) -> (i32, i32) {
    %c0_i32 = arith.constant 0 : i32
    %c0_i32_0 = arith.constant 0 : i32
    %c0_i32_1 = arith.constant 0 : i32
    return %c0_i32, %c0_i32_0 : i32, i32
  }
  func.func @transform_9(%arg0: i32) -> (i32, i32) {
    %c0_i32 = arith.constant 0 : i32
    %c0_i32_0 = arith.constant 0 : i32
    %c0_i32_1 = arith.constant 0 : i32
    return %c0_i32, %c0_i32_0 : i32, i32
  }
  func.func @transform_10(%arg0: i32) -> (i32, i32) {
    %c0_i32 = arith.constant 0 : i32
    %c0_i32_0 = arith.constant 0 : i32
    %c0_i32_1 = arith.constant 0 : i32
    return %c0_i32, %c0_i32_0 : i32, i32
  }
  func.func @transform_11(%arg0: i32) -> (i32, i32) {
    %c0_i32 = arith.constant 0 : i32
    %c0_i32_0 = arith.constant 0 : i32
    %c0_i32_1 = arith.constant 0 : i32
    return %c0_i32, %c0_i32_0 : i32, i32
  }
  func.func @transform_12(%arg0: i32) -> (i32, i32) {
    %c0_i32 = arith.constant 0 : i32
    %c0_i32_0 = arith.constant 0 : i32
    %c0_i32_1 = arith.constant 0 : i32
    return %c0_i32, %c0_i32_0 : i32, i32
  }
  func.func @transform_13(%arg0: i32) -> (i32, i32) {
    %c0_i32 = arith.constant 0 : i32
    %c0_i32_0 = arith.constant 0 : i32
    return %arg0, %c0_i32 : i32, i32
  }
}

module attributes {stable_mosaic.version = 11 : i64} {
  func.func @_pointnet_kernel(%arg0: i32, %arg1: memref<8x8x10xf32, #tpu.memory_space<vmem>>, %arg2: memref<8x8x1xf32, #tpu.memory_space<vmem>>, %arg3: memref<10x32xf32, #tpu.memory_space<vmem>>, %arg4: memref<1x32xf32, #tpu.memory_space<vmem>>, %arg5: memref<32x32xf32, #tpu.memory_space<vmem>>, %arg6: memref<32x32xf32, #tpu.memory_space<vmem>>, %arg7: memref<1x32xf32, #tpu.memory_space<vmem>>, %arg8: memref<32x32xf32, #tpu.memory_space<vmem>>, %arg9: memref<1x32xf32, #tpu.memory_space<vmem>>, %arg10: memref<32x32xf32, #tpu.memory_space<vmem>>, %arg11: memref<1x32xf32, #tpu.memory_space<vmem>>, %arg12: memref<32x32xf32, #tpu.memory_space<vmem>>, %arg13: memref<1x32xf32, #tpu.memory_space<vmem>>, %arg14: memref<8x32xf32, #tpu.memory_space<vmem>>) attributes {dimension_semantics = [#tpu.dimension_semantics<parallel>], iteration_bounds = array<i64: 1>, scalar_prefetch = 0 : i64, scratch_operands = 0 : i64, tpu.core_type = #tpu.core_type<tc>, window_params = [{transform_indices = @transform_0, window_bounds = array<i64: 8, 8, 10>}, {transform_indices = @transform_1, window_bounds = array<i64: 8, 8, 1>}, {pipeline_mode = #tpu.pipeline_mode<synchronous>, transform_indices = @transform_2, window_bounds = array<i64: 10, 32>}, {pipeline_mode = #tpu.pipeline_mode<synchronous>, transform_indices = @transform_3, window_bounds = array<i64: 1, 32>}, {pipeline_mode = #tpu.pipeline_mode<synchronous>, transform_indices = @transform_4, window_bounds = array<i64: 32, 32>}, {pipeline_mode = #tpu.pipeline_mode<synchronous>, transform_indices = @transform_5, window_bounds = array<i64: 32, 32>}, {pipeline_mode = #tpu.pipeline_mode<synchronous>, transform_indices = @transform_6, window_bounds = array<i64: 1, 32>}, {pipeline_mode = #tpu.pipeline_mode<synchronous>, transform_indices = @transform_7, window_bounds = array<i64: 32, 32>}, {pipeline_mode = #tpu.pipeline_mode<synchronous>, transform_indices = @transform_8, window_bounds = array<i64: 1, 32>}, {pipeline_mode = #tpu.pipeline_mode<synchronous>, transform_indices = @transform_9, window_bounds = array<i64: 32, 32>}, {pipeline_mode = #tpu.pipeline_mode<synchronous>, transform_indices = @transform_10, window_bounds = array<i64: 1, 32>}, {pipeline_mode = #tpu.pipeline_mode<synchronous>, transform_indices = @transform_11, window_bounds = array<i64: 32, 32>}, {pipeline_mode = #tpu.pipeline_mode<synchronous>, transform_indices = @transform_12, window_bounds = array<i64: 1, 32>}, {transform_indices = @transform_13, window_bounds = array<i64: 8, 32>}]} {
    %c0 = arith.constant 0 : index
    %c0_0 = arith.constant 0 : index
    %c0_1 = arith.constant 0 : index
    %0 = vector.load %arg2[%c0, %c0_0, %c0_1] : memref<8x8x1xf32, #tpu.memory_space<vmem>>, vector<8x8x1xf32>
    %c0_2 = arith.constant 0 : index
    %c0_3 = arith.constant 0 : index
    %c0_4 = arith.constant 0 : index
    %1 = vector.load %arg1[%c0_2, %c0_3, %c0_4] : memref<8x8x10xf32, #tpu.memory_space<vmem>>, vector<8x8x10xf32>
    %2 = vector.shape_cast %1 : vector<8x8x10xf32> to vector<64x10xf32>
    %c0_5 = arith.constant 0 : index
    %c0_6 = arith.constant 0 : index
    %3 = vector.load %arg3[%c0_5, %c0_6] : memref<10x32xf32, #tpu.memory_space<vmem>>, vector<10x32xf32>
    %c0_7 = arith.constant 0 : index
    %c0_8 = arith.constant 0 : index
    %4 = vector.load %arg4[%c0_7, %c0_8] : memref<1x32xf32, #tpu.memory_space<vmem>>, vector<1x32xf32>
    %5 = arith.truncf %2 : vector<64x10xf32> to vector<64x10xbf16>
    %6 = arith.truncf %3 : vector<10x32xf32> to vector<10x32xbf16>
    %cst = arith.constant dense<0.000000e+00> : vector<64x32xf32>
    %7 = tpu.matmul %5, %6, %cst {dimension_numbers = #tpu.dot_dimension_numbers<[1], [0], [0], [1], [0, 0, 1, 1], [], []>} : vector<64x10xbf16>, vector<10x32xbf16>, vector<64x32xf32> -> vector<64x32xf32>
    %8 = vector.broadcast %4 : vector<1x32xf32> to vector<64x32xf32>
    %9 = arith.addf %7, %8 : vector<64x32xf32>
    %cst_9 = arith.constant 0.000000e+00 : f32
    %10 = vector.broadcast %cst_9 : f32 to vector<64x32xf32>
    %11 = arith.maximumf %9, %10 : vector<64x32xf32>
    %12 = vector.shape_cast %11 : vector<64x32xf32> to vector<8x8x32xf32>
    %13 = vector.broadcast %0 : vector<8x8x1xf32> to vector<8x8x32xf32>
    %14 = arith.mulf %12, %13 : vector<8x8x32xf32>
    %cst_10 = arith.constant dense<0xFF800000> : vector<8x32xf32>
    %15 = vector.multi_reduction <maximumf>, %14, %cst_10 [1] : vector<8x8x32xf32> to vector<8x32xf32>
    %c0_11 = arith.constant 0 : index
    %c0_12 = arith.constant 0 : index
    %16 = vector.load %arg5[%c0_11, %c0_12] : memref<32x32xf32, #tpu.memory_space<vmem>>, vector<32x32xf32>
    %c0_13 = arith.constant 0 : index
    %c0_14 = arith.constant 0 : index
    %17 = vector.load %arg6[%c0_13, %c0_14] : memref<32x32xf32, #tpu.memory_space<vmem>>, vector<32x32xf32>
    %c0_15 = arith.constant 0 : index
    %c0_16 = arith.constant 0 : index
    %18 = vector.load %arg7[%c0_15, %c0_16] : memref<1x32xf32, #tpu.memory_space<vmem>>, vector<1x32xf32>
    %19 = vector.shape_cast %14 : vector<8x8x32xf32> to vector<64x32xf32>
    %20 = arith.truncf %19 : vector<64x32xf32> to vector<64x32xbf16>
    %21 = arith.truncf %16 : vector<32x32xf32> to vector<32x32xbf16>
    %cst_17 = arith.constant dense<0.000000e+00> : vector<64x32xf32>
    %22 = tpu.matmul %20, %21, %cst_17 {dimension_numbers = #tpu.dot_dimension_numbers<[1], [0], [0], [1], [0, 0, 1, 1], [], []>} : vector<64x32xbf16>, vector<32x32xbf16>, vector<64x32xf32> -> vector<64x32xf32>
    %23 = arith.truncf %15 : vector<8x32xf32> to vector<8x32xbf16>
    %24 = arith.truncf %17 : vector<32x32xf32> to vector<32x32xbf16>
    %cst_18 = arith.constant dense<0.000000e+00> : vector<8x32xf32>
    %25 = tpu.matmul %23, %24, %cst_18 {dimension_numbers = #tpu.dot_dimension_numbers<[1], [0], [0], [1], [0, 0, 1, 1], [], []>} : vector<8x32xbf16>, vector<32x32xbf16>, vector<8x32xf32> -> vector<8x32xf32>
    %26 = vector.shape_cast %22 : vector<64x32xf32> to vector<8x8x32xf32>
    %27 = vector.shape_cast %25 : vector<8x32xf32> to vector<8x1x32xf32>
    %28 = vector.broadcast %27 : vector<8x1x32xf32> to vector<8x8x32xf32>
    %29 = arith.addf %26, %28 : vector<8x8x32xf32>
    %30 = vector.shape_cast %18 : vector<1x32xf32> to vector<1x1x32xf32>
    %31 = vector.broadcast %30 : vector<1x1x32xf32> to vector<8x8x32xf32>
    %32 = arith.addf %29, %31 : vector<8x8x32xf32>
    %cst_19 = arith.constant 0.000000e+00 : f32
    %33 = vector.broadcast %cst_19 : f32 to vector<8x8x32xf32>
    %34 = arith.maximumf %32, %33 : vector<8x8x32xf32>
    %35 = vector.shape_cast %34 : vector<8x8x32xf32> to vector<64x32xf32>
    %c0_20 = arith.constant 0 : index
    %c0_21 = arith.constant 0 : index
    %36 = vector.load %arg8[%c0_20, %c0_21] : memref<32x32xf32, #tpu.memory_space<vmem>>, vector<32x32xf32>
    %c0_22 = arith.constant 0 : index
    %c0_23 = arith.constant 0 : index
    %37 = vector.load %arg9[%c0_22, %c0_23] : memref<1x32xf32, #tpu.memory_space<vmem>>, vector<1x32xf32>
    %38 = arith.truncf %35 : vector<64x32xf32> to vector<64x32xbf16>
    %39 = arith.truncf %36 : vector<32x32xf32> to vector<32x32xbf16>
    %cst_24 = arith.constant dense<0.000000e+00> : vector<64x32xf32>
    %40 = tpu.matmul %38, %39, %cst_24 {dimension_numbers = #tpu.dot_dimension_numbers<[1], [0], [0], [1], [0, 0, 1, 1], [], []>} : vector<64x32xbf16>, vector<32x32xbf16>, vector<64x32xf32> -> vector<64x32xf32>
    %41 = vector.broadcast %37 : vector<1x32xf32> to vector<64x32xf32>
    %42 = arith.addf %40, %41 : vector<64x32xf32>
    %cst_25 = arith.constant 0.000000e+00 : f32
    %43 = vector.broadcast %cst_25 : f32 to vector<64x32xf32>
    %44 = arith.maximumf %42, %43 : vector<64x32xf32>
    %45 = vector.shape_cast %44 : vector<64x32xf32> to vector<8x8x32xf32>
    %46 = vector.broadcast %0 : vector<8x8x1xf32> to vector<8x8x32xf32>
    %47 = arith.mulf %45, %46 : vector<8x8x32xf32>
    %cst_26 = arith.constant dense<0xFF800000> : vector<8x32xf32>
    %48 = vector.multi_reduction <maximumf>, %47, %cst_26 [1] : vector<8x8x32xf32> to vector<8x32xf32>
    %c0_27 = arith.constant 0 : index
    %c0_28 = arith.constant 0 : index
    %49 = vector.load %arg10[%c0_27, %c0_28] : memref<32x32xf32, #tpu.memory_space<vmem>>, vector<32x32xf32>
    %c0_29 = arith.constant 0 : index
    %c0_30 = arith.constant 0 : index
    %50 = vector.load %arg11[%c0_29, %c0_30] : memref<1x32xf32, #tpu.memory_space<vmem>>, vector<1x32xf32>
    %51 = arith.truncf %48 : vector<8x32xf32> to vector<8x32xbf16>
    %52 = arith.truncf %49 : vector<32x32xf32> to vector<32x32xbf16>
    %cst_31 = arith.constant dense<0.000000e+00> : vector<8x32xf32>
    %53 = tpu.matmul %51, %52, %cst_31 {dimension_numbers = #tpu.dot_dimension_numbers<[1], [0], [0], [1], [0, 0, 1, 1], [], []>} : vector<8x32xbf16>, vector<32x32xbf16>, vector<8x32xf32> -> vector<8x32xf32>
    %54 = vector.broadcast %50 : vector<1x32xf32> to vector<8x32xf32>
    %55 = arith.addf %53, %54 : vector<8x32xf32>
    %cst_32 = arith.constant 0.000000e+00 : f32
    %56 = vector.broadcast %cst_32 : f32 to vector<8x32xf32>
    %57 = arith.maximumf %55, %56 : vector<8x32xf32>
    %c0_33 = arith.constant 0 : index
    %c0_34 = arith.constant 0 : index
    %58 = vector.load %arg12[%c0_33, %c0_34] : memref<32x32xf32, #tpu.memory_space<vmem>>, vector<32x32xf32>
    %c0_35 = arith.constant 0 : index
    %c0_36 = arith.constant 0 : index
    %59 = vector.load %arg13[%c0_35, %c0_36] : memref<1x32xf32, #tpu.memory_space<vmem>>, vector<1x32xf32>
    %60 = arith.truncf %57 : vector<8x32xf32> to vector<8x32xbf16>
    %61 = arith.truncf %58 : vector<32x32xf32> to vector<32x32xbf16>
    %cst_37 = arith.constant dense<0.000000e+00> : vector<8x32xf32>
    %62 = tpu.matmul %60, %61, %cst_37 {dimension_numbers = #tpu.dot_dimension_numbers<[1], [0], [0], [1], [0, 0, 1, 1], [], []>} : vector<8x32xbf16>, vector<32x32xbf16>, vector<8x32xf32> -> vector<8x32xf32>
    %63 = vector.broadcast %59 : vector<1x32xf32> to vector<8x32xf32>
    %64 = arith.addf %62, %63 : vector<8x32xf32>
    %cst_38 = arith.constant dense<0xFF800000> : vector<8x1xf32>
    %65 = vector.multi_reduction <maximumf>, %0, %cst_38 [1] : vector<8x8x1xf32> to vector<8x1xf32>
    %66 = vector.broadcast %65 : vector<8x1xf32> to vector<8x32xf32>
    %67 = arith.mulf %64, %66 : vector<8x32xf32>
    %c0_39 = arith.constant 0 : index
    %c0_40 = arith.constant 0 : index
    %68 = vector.load %arg14[%c0_39, %c0_40] : memref<8x32xf32, #tpu.memory_space<vmem>>, vector<8x32xf32>
    tpu.vector_store %arg14[%c0_39, %c0_40], %67 {strides = array<i32>} : memref<8x32xf32, #tpu.memory_space<vmem>>, vector<8x32xf32>,
    return
  }
  func.func @transform_0(%arg0: i32) -> (i32, i32, i32) {
    %c0_i32 = arith.constant 0 : i32
    %c0_i32_0 = arith.constant 0 : i32
    %c0_i32_1 = arith.constant 0 : i32
    return %arg0, %c0_i32, %c0_i32_0 : i32, i32, i32
  }
  func.func @transform_1(%arg0: i32) -> (i32, i32, i32) {
    %c0_i32 = arith.constant 0 : i32
    %c0_i32_0 = arith.constant 0 : i32
    %c0_i32_1 = arith.constant 0 : i32
    return %arg0, %c0_i32, %c0_i32_0 : i32, i32, i32
  }
  func.func @transform_2(%arg0: i32) -> (i32, i32) {
    %c0_i32 = arith.constant 0 : i32
    %c0_i32_0 = arith.constant 0 : i32
    %c0_i32_1 = arith.constant 0 : i32
    return %c0_i32, %c0_i32_0 : i32, i32
  }
  func.func @transform_3(%arg0: i32) -> (i32, i32) {
    %c0_i32 = arith.constant 0 : i32
    %c0_i32_0 = arith.constant 0 : i32
    %c0_i32_1 = arith.constant 0 : i32
    return %c0_i32, %c0_i32_0 : i32, i32
  }
  func.func @transform_4(%arg0: i32) -> (i32, i32) {
    %c0_i32 = arith.constant 0 : i32
    %c0_i32_0 = arith.constant 0 : i32
    %c0_i32_1 = arith.constant 0 : i32
    return %c0_i32, %c0_i32_0 : i32, i32
  }
  func.func @transform_5(%arg0: i32) -> (i32, i32) {
    %c0_i32 = arith.constant 0 : i32
    %c0_i32_0 = arith.constant 0 : i32
    %c0_i32_1 = arith.constant 0 : i32
    return %c0_i32, %c0_i32_0 : i32, i32
  }
  func.func @transform_6(%arg0: i32) -> (i32, i32) {
    %c0_i32 = arith.constant 0 : i32
    %c0_i32_0 = arith.constant 0 : i32
    %c0_i32_1 = arith.constant 0 : i32
    return %c0_i32, %c0_i32_0 : i32, i32
  }
  func.func @transform_7(%arg0: i32) -> (i32, i32) {
    %c0_i32 = arith.constant 0 : i32
    %c0_i32_0 = arith.constant 0 : i32
    %c0_i32_1 = arith.constant 0 : i32
    return %c0_i32, %c0_i32_0 : i32, i32
  }
  func.func @transform_8(%arg0: i32) -> (i32, i32) {
    %c0_i32 = arith.constant 0 : i32
    %c0_i32_0 = arith.constant 0 : i32
    %c0_i32_1 = arith.constant 0 : i32
    return %c0_i32, %c0_i32_0 : i32, i32
  }
  func.func @transform_9(%arg0: i32) -> (i32, i32) {
    %c0_i32 = arith.constant 0 : i32
    %c0_i32_0 = arith.constant 0 : i32
    %c0_i32_1 = arith.constant 0 : i32
    return %c0_i32, %c0_i32_0 : i32, i32
  }
  func.func @transform_10(%arg0: i32) -> (i32, i32) {
    %c0_i32 = arith.constant 0 : i32
    %c0_i32_0 = arith.constant 0 : i32
    %c0_i32_1 = arith.constant 0 : i32
    return %c0_i32, %c0_i32_0 : i32, i32
  }
  func.func @transform_11(%arg0: i32) -> (i32, i32) {
    %c0_i32 = arith.constant 0 : i32
    %c0_i32_0 = arith.constant 0 : i32
    %c0_i32_1 = arith.constant 0 : i32
    return %c0_i32, %c0_i32_0 : i32, i32
  }
  func.func @transform_12(%arg0: i32) -> (i32, i32) {
    %c0_i32 = arith.constant 0 : i32
    %c0_i32_0 = arith.constant 0 : i32
    %c0_i32_1 = arith.constant 0 : i32
    return %c0_i32, %c0_i32_0 : i32, i32
  }
  func.func @transform_13(%arg0: i32) -> (i32, i32) {
    %c0_i32 = arith.constant 0 : i32
    %c0_i32_0 = arith.constant 0 : i32
    return %arg0, %c0_i32 : i32, i32
  }
}

module attributes {stable_mosaic.version = 11 : i64} {
  func.func @_encoder_layer_kernel(%arg0: i32, %arg1: memref<1x8x32xf32, #tpu.memory_space<vmem>>, %arg2: memref<1x8x32xf32, #tpu.memory_space<vmem>>, %arg3: memref<1x1x8xf32, #tpu.memory_space<vmem>>, %arg4: memref<32x64xf32, #tpu.memory_space<vmem>>, %arg5: memref<1x64xf32, #tpu.memory_space<vmem>>, %arg6: memref<32x32xf32, #tpu.memory_space<vmem>>, %arg7: memref<1x32xf32, #tpu.memory_space<vmem>>, %arg8: memref<32x32xf32, #tpu.memory_space<vmem>>, %arg9: memref<1x32xf32, #tpu.memory_space<vmem>>, %arg10: memref<1x32xf32, #tpu.memory_space<vmem>>, %arg11: memref<1x32xf32, #tpu.memory_space<vmem>>, %arg12: memref<32x128xf32, #tpu.memory_space<vmem>>, %arg13: memref<1x128xf32, #tpu.memory_space<vmem>>, %arg14: memref<128x32xf32, #tpu.memory_space<vmem>>, %arg15: memref<1x32xf32, #tpu.memory_space<vmem>>, %arg16: memref<1x32xf32, #tpu.memory_space<vmem>>, %arg17: memref<1x32xf32, #tpu.memory_space<vmem>>, %arg18: memref<1x8x32xf32, #tpu.memory_space<vmem>>) attributes {dimension_semantics = [#tpu.dimension_semantics<parallel>], iteration_bounds = array<i64: 2>, scalar_prefetch = 0 : i64, scratch_operands = 0 : i64, tpu.core_type = #tpu.core_type<tc>, window_params = [{transform_indices = @transform_0, window_bounds = array<i64: 1, 8, 32>}, {transform_indices = @transform_1, window_bounds = array<i64: 1, 8, 32>}, {transform_indices = @transform_2, window_bounds = array<i64: 1, 1, 8>}, {pipeline_mode = #tpu.pipeline_mode<synchronous>, transform_indices = @transform_3, window_bounds = array<i64: 32, 64>}, {pipeline_mode = #tpu.pipeline_mode<synchronous>, transform_indices = @transform_4, window_bounds = array<i64: 1, 64>}, {pipeline_mode = #tpu.pipeline_mode<synchronous>, transform_indices = @transform_5, window_bounds = array<i64: 32, 32>}, {pipeline_mode = #tpu.pipeline_mode<synchronous>, transform_indices = @transform_6, window_bounds = array<i64: 1, 32>}, {pipeline_mode = #tpu.pipeline_mode<synchronous>, transform_indices = @transform_7, window_bounds = array<i64: 32, 32>}, {pipeline_mode = #tpu.pipeline_mode<synchronous>, transform_indices = @transform_8, window_bounds = array<i64: 1, 32>}, {pipeline_mode = #tpu.pipeline_mode<synchronous>, transform_indices = @transform_9, window_bounds = array<i64: 1, 32>}, {pipeline_mode = #tpu.pipeline_mode<synchronous>, transform_indices = @transform_10, window_bounds = array<i64: 1, 32>}, {pipeline_mode = #tpu.pipeline_mode<synchronous>, transform_indices = @transform_11, window_bounds = array<i64: 32, 128>}, {pipeline_mode = #tpu.pipeline_mode<synchronous>, transform_indices = @transform_12, window_bounds = array<i64: 1, 128>}, {pipeline_mode = #tpu.pipeline_mode<synchronous>, transform_indices = @transform_13, window_bounds = array<i64: 128, 32>}, {pipeline_mode = #tpu.pipeline_mode<synchronous>, transform_indices = @transform_14, window_bounds = array<i64: 1, 32>}, {pipeline_mode = #tpu.pipeline_mode<synchronous>, transform_indices = @transform_15, window_bounds = array<i64: 1, 32>}, {pipeline_mode = #tpu.pipeline_mode<synchronous>, transform_indices = @transform_16, window_bounds = array<i64: 1, 32>}, {transform_indices = @transform_17, window_bounds = array<i64: 1, 8, 32>}]} {
    %c0 = arith.constant 0 : index
    %c0_0 = arith.constant 0 : index
    %c0_1 = arith.constant 0 : index
    %0 = vector.load %arg1[%c0, %c0_0, %c0_1] : memref<1x8x32xf32, #tpu.memory_space<vmem>>, vector<1x8x32xf32>
    %1 = vector.shape_cast %0 : vector<1x8x32xf32> to vector<8x32xf32>
    %c0_2 = arith.constant 0 : index
    %c0_3 = arith.constant 0 : index
    %c0_4 = arith.constant 0 : index
    %2 = vector.load %arg2[%c0_2, %c0_3, %c0_4] : memref<1x8x32xf32, #tpu.memory_space<vmem>>, vector<1x8x32xf32>
    %3 = arith.addf %0, %2 : vector<1x8x32xf32>
    %4 = vector.shape_cast %3 : vector<1x8x32xf32> to vector<8x32xf32>
    %5 = arith.truncf %4 : vector<8x32xf32> to vector<8x32xbf16>
    %c0_5 = arith.constant 0 : index
    %c0_6 = arith.constant 0 : index
    %6 = vector.load %arg4[%c0_5, %c0_6] : memref<32x64xf32, #tpu.memory_space<vmem>>, vector<32x64xf32>
    %7 = arith.truncf %6 : vector<32x64xf32> to vector<32x64xbf16>
    %cst = arith.constant dense<0.000000e+00> : vector<8x64xf32>
    %8 = tpu.matmul %5, %7, %cst {dimension_numbers = #tpu.dot_dimension_numbers<[1], [0], [0], [1], [0, 0, 1, 1], [], []>} : vector<8x32xbf16>, vector<32x64xbf16>, vector<8x64xf32> -> vector<8x64xf32>
    %c0_7 = arith.constant 0 : index
    %c0_8 = arith.constant 0 : index
    %9 = vector.load %arg5[%c0_7, %c0_8] : memref<1x64xf32, #tpu.memory_space<vmem>>, vector<1x64xf32>
    %10 = vector.broadcast %9 : vector<1x64xf32> to vector<8x64xf32>
    %11 = arith.addf %8, %10 : vector<8x64xf32>
    %12 = arith.truncf %1 : vector<8x32xf32> to vector<8x32xbf16>
    %c0_9 = arith.constant 0 : index
    %c0_10 = arith.constant 0 : index
    %13 = vector.load %arg6[%c0_9, %c0_10] : memref<32x32xf32, #tpu.memory_space<vmem>>, vector<32x32xf32>
    %14 = arith.truncf %13 : vector<32x32xf32> to vector<32x32xbf16>
    %cst_11 = arith.constant dense<0.000000e+00> : vector<8x32xf32>
    %15 = tpu.matmul %12, %14, %cst_11 {dimension_numbers = #tpu.dot_dimension_numbers<[1], [0], [0], [1], [0, 0, 1, 1], [], []>} : vector<8x32xbf16>, vector<32x32xbf16>, vector<8x32xf32> -> vector<8x32xf32>
    %c0_12 = arith.constant 0 : index
    %c0_13 = arith.constant 0 : index
    %16 = vector.load %arg7[%c0_12, %c0_13] : memref<1x32xf32, #tpu.memory_space<vmem>>, vector<1x32xf32>
    %17 = vector.broadcast %16 : vector<1x32xf32> to vector<8x32xf32>
    %18 = arith.addf %15, %17 : vector<8x32xf32>
    %19 = vector.extract_strided_slice %11 {offsets = [0, 0], sizes = [8, 32], strides = [1, 1]} : vector<8x64xf32> to vector<8x32xf32>
    %20 = vector.shape_cast %19 : vector<8x32xf32> to vector<1x8x32xf32>
    %21 = vector.extract_strided_slice %11 {offsets = [0, 32], sizes = [8, 32], strides = [1, 1]} : vector<8x64xf32> to vector<8x32xf32>
    %22 = vector.shape_cast %21 : vector<8x32xf32> to vector<1x8x32xf32>
    %23 = vector.shape_cast %18 : vector<8x32xf32> to vector<1x8x32xf32>
    %c0_14 = arith.constant 0 : index
    %c0_15 = arith.constant 0 : index
    %c0_16 = arith.constant 0 : index
    %24 = vector.load %arg3[%c0_14, %c0_15, %c0_16] : memref<1x1x8xf32, #tpu.memory_space<vmem>>, vector<1x1x8xf32>
    %c0_17 = arith.constant 0 : index
    %c0_18 = arith.constant 0 : index
    %25 = vector.load %arg8[%c0_17, %c0_18] : memref<32x32xf32, #tpu.memory_space<vmem>>, vector<32x32xf32>
    %cst_19 = arith.constant 0.000000e+00 : f32
    %26 = vector.broadcast %cst_19 : f32 to vector<8x32xf32>
    %27 = vector.extract_strided_slice %20 {offsets = [0, 0, 0], sizes = [1, 8, 16], strides = [1, 1, 1]} : vector<1x8x32xf32> to vector<1x8x16xf32>
    %28 = arith.truncf %27 : vector<1x8x16xf32> to vector<1x8x16xbf16>
    %29 = vector.extract_strided_slice %22 {offsets = [0, 0, 0], sizes = [1, 8, 16], strides = [1, 1, 1]} : vector<1x8x32xf32> to vector<1x8x16xf32>
    %30 = arith.truncf %29 : vector<1x8x16xf32> to vector<1x8x16xbf16>
    "tpu.trace_start"() <{level = 10 : i32, message = "bqd,bkd->bqk"}> : () -> ()
    %cst_20 = arith.constant dense<0.000000e+00> : vector<1x8x8xf32>
    %31 = tpu.matmul %28, %30, %cst_20 {dimension_numbers = #tpu.dot_dimension_numbers<[2], [2], [1], [1], [0, 0, 0, 1, 1, 1], [0], [0]>} : vector<1x8x16xbf16>, vector<1x8x16xbf16>, vector<1x8x8xf32> -> vector<1x8x8xf32>
    "tpu.trace_stop"() : () -> ()
    %32 = vector.broadcast %24 : vector<1x1x8xf32> to vector<1x8x8xf32>
    %33 = arith.addf %31, %32 : vector<1x8x8xf32>
    %cst_21 = arith.constant dense<0xFF800000> : vector<1x8xf32>
    %34 = vector.multi_reduction <maximumf>, %33, %cst_21 [2] : vector<1x8x8xf32> to vector<1x8xf32>
    %35 = vector.shape_cast %34 : vector<1x8xf32> to vector<1x8x1xf32>
    %36 = vector.broadcast %35 : vector<1x8x1xf32> to vector<1x8x8xf32>
    %37 = arith.subf %33, %36 : vector<1x8x8xf32>
    %38 = math.exp %37 : vector<1x8x8xf32>
    %cst_22 = arith.constant dense<0.000000e+00> : vector<1x8xf32>
    %39 = vector.multi_reduction <add>, %38, %cst_22 [2] : vector<1x8x8xf32> to vector<1x8xf32>
    %40 = vector.shape_cast %39 : vector<1x8xf32> to vector<1x8x1xf32>
    %41 = vector.broadcast %40 : vector<1x8x1xf32> to vector<1x8x8xf32>
    %42 = arith.divf %38, %41 : vector<1x8x8xf32>
    %43 = arith.truncf %42 : vector<1x8x8xf32> to vector<1x8x8xbf16>
    %44 = vector.extract_strided_slice %23 {offsets = [0, 0, 0], sizes = [1, 8, 16], strides = [1, 1, 1]} : vector<1x8x32xf32> to vector<1x8x16xf32>
    %45 = arith.truncf %44 : vector<1x8x16xf32> to vector<1x8x16xbf16>
    "tpu.trace_start"() <{level = 10 : i32, message = "bqk,bkd->bqd"}> : () -> ()
    %cst_23 = arith.constant dense<0.000000e+00> : vector<1x8x16xf32>
    %46 = tpu.matmul %43, %45, %cst_23 {dimension_numbers = #tpu.dot_dimension_numbers<[2], [1], [1], [2], [0, 0, 0, 1, 1, 2], [0], [0]>} : vector<1x8x8xbf16>, vector<1x8x16xbf16>, vector<1x8x16xf32> -> vector<1x8x16xf32>
    "tpu.trace_stop"() : () -> ()
    %47 = vector.shape_cast %46 : vector<1x8x16xf32> to vector<8x16xf32>
    %48 = arith.truncf %47 : vector<8x16xf32> to vector<8x16xbf16>
    %49 = vector.extract_strided_slice %25 {offsets = [0, 0], sizes = [16, 32], strides = [1, 1]} : vector<32x32xf32> to vector<16x32xf32>
    %50 = arith.truncf %49 : vector<16x32xf32> to vector<16x32xbf16>
    %cst_24 = arith.constant dense<0.000000e+00> : vector<8x32xf32>
    %51 = tpu.matmul %48, %50, %cst_24 {dimension_numbers = #tpu.dot_dimension_numbers<[1], [0], [0], [1], [0, 0, 1, 1], [], []>} : vector<8x16xbf16>, vector<16x32xbf16>, vector<8x32xf32> -> vector<8x32xf32>
    %52 = arith.addf %26, %51 : vector<8x32xf32>
    %53 = vector.extract_strided_slice %20 {offsets = [0, 0, 16], sizes = [1, 8, 16], strides = [1, 1, 1]} : vector<1x8x32xf32> to vector<1x8x16xf32>
    %54 = arith.truncf %53 : vector<1x8x16xf32> to vector<1x8x16xbf16>
    %55 = vector.extract_strided_slice %22 {offsets = [0, 0, 16], sizes = [1, 8, 16], strides = [1, 1, 1]} : vector<1x8x32xf32> to vector<1x8x16xf32>
    %56 = arith.truncf %55 : vector<1x8x16xf32> to vector<1x8x16xbf16>
    "tpu.trace_start"() <{level = 10 : i32, message = "bqd,bkd->bqk"}> : () -> ()
    %cst_25 = arith.constant dense<0.000000e+00> : vector<1x8x8xf32>
    %57 = tpu.matmul %54, %56, %cst_25 {dimension_numbers = #tpu.dot_dimension_numbers<[2], [2], [1], [1], [0, 0, 0, 1, 1, 1], [0], [0]>} : vector<1x8x16xbf16>, vector<1x8x16xbf16>, vector<1x8x8xf32> -> vector<1x8x8xf32>
    "tpu.trace_stop"() : () -> ()
    %58 = vector.broadcast %24 : vector<1x1x8xf32> to vector<1x8x8xf32>
    %59 = arith.addf %57, %58 : vector<1x8x8xf32>
    %cst_26 = arith.constant dense<0xFF800000> : vector<1x8xf32>
    %60 = vector.multi_reduction <maximumf>, %59, %cst_26 [2] : vector<1x8x8xf32> to vector<1x8xf32>
    %61 = vector.shape_cast %60 : vector<1x8xf32> to vector<1x8x1xf32>
    %62 = vector.broadcast %61 : vector<1x8x1xf32> to vector<1x8x8xf32>
    %63 = arith.subf %59, %62 : vector<1x8x8xf32>
    %64 = math.exp %63 : vector<1x8x8xf32>
    %cst_27 = arith.constant dense<0.000000e+00> : vector<1x8xf32>
    %65 = vector.multi_reduction <add>, %64, %cst_27 [2] : vector<1x8x8xf32> to vector<1x8xf32>
    %66 = vector.shape_cast %65 : vector<1x8xf32> to vector<1x8x1xf32>
    %67 = vector.broadcast %66 : vector<1x8x1xf32> to vector<1x8x8xf32>
    %68 = arith.divf %64, %67 : vector<1x8x8xf32>
    %69 = arith.truncf %68 : vector<1x8x8xf32> to vector<1x8x8xbf16>
    %70 = vector.extract_strided_slice %23 {offsets = [0, 0, 16], sizes = [1, 8, 16], strides = [1, 1, 1]} : vector<1x8x32xf32> to vector<1x8x16xf32>
    %71 = arith.truncf %70 : vector<1x8x16xf32> to vector<1x8x16xbf16>
    "tpu.trace_start"() <{level = 10 : i32, message = "bqk,bkd->bqd"}> : () -> ()
    %cst_28 = arith.constant dense<0.000000e+00> : vector<1x8x16xf32>
    %72 = tpu.matmul %69, %71, %cst_28 {dimension_numbers = #tpu.dot_dimension_numbers<[2], [1], [1], [2], [0, 0, 0, 1, 1, 2], [0], [0]>} : vector<1x8x8xbf16>, vector<1x8x16xbf16>, vector<1x8x16xf32> -> vector<1x8x16xf32>
    "tpu.trace_stop"() : () -> ()
    %73 = vector.shape_cast %72 : vector<1x8x16xf32> to vector<8x16xf32>
    %74 = arith.truncf %73 : vector<8x16xf32> to vector<8x16xbf16>
    %75 = vector.extract_strided_slice %25 {offsets = [16, 0], sizes = [16, 32], strides = [1, 1]} : vector<32x32xf32> to vector<16x32xf32>
    %76 = arith.truncf %75 : vector<16x32xf32> to vector<16x32xbf16>
    %cst_29 = arith.constant dense<0.000000e+00> : vector<8x32xf32>
    %77 = tpu.matmul %74, %76, %cst_29 {dimension_numbers = #tpu.dot_dimension_numbers<[1], [0], [0], [1], [0, 0, 1, 1], [], []>} : vector<8x16xbf16>, vector<16x32xbf16>, vector<8x32xf32> -> vector<8x32xf32>
    %78 = arith.addf %52, %77 : vector<8x32xf32>
    %79 = arith.addf %1, %78 : vector<8x32xf32>
    %c0_30 = arith.constant 0 : index
    %c0_31 = arith.constant 0 : index
    %80 = vector.load %arg9[%c0_30, %c0_31] : memref<1x32xf32, #tpu.memory_space<vmem>>, vector<1x32xf32>
    %81 = vector.broadcast %80 : vector<1x32xf32> to vector<8x32xf32>
    %82 = arith.addf %79, %81 : vector<8x32xf32>
    %c0_32 = arith.constant 0 : index
    %c0_33 = arith.constant 0 : index
    %83 = vector.load %arg10[%c0_32, %c0_33] : memref<1x32xf32, #tpu.memory_space<vmem>>, vector<1x32xf32>
    %c0_34 = arith.constant 0 : index
    %c0_35 = arith.constant 0 : index
    %84 = vector.load %arg11[%c0_34, %c0_35] : memref<1x32xf32, #tpu.memory_space<vmem>>, vector<1x32xf32>
    %cst_36 = arith.constant dense<0.000000e+00> : vector<8xf32>
    %85 = vector.multi_reduction <add>, %82, %cst_36 [1] : vector<8x32xf32> to vector<8xf32>
    %86 = vector.shape_cast %85 : vector<8xf32> to vector<8x1xf32>
    %cst_37 = arith.constant 3.200000e+01 : f32
    %87 = vector.broadcast %cst_37 : f32 to vector<8x1xf32>
    %88 = arith.divf %86, %87 : vector<8x1xf32>
    %89 = vector.broadcast %88 : vector<8x1xf32> to vector<8x32xf32>
    %90 = arith.subf %82, %89 : vector<8x32xf32>
    %91 = arith.mulf %90, %90 : vector<8x32xf32>
    %cst_38 = arith.constant dense<0.000000e+00> : vector<8xf32>
    %92 = vector.multi_reduction <add>, %91, %cst_38 [1] : vector<8x32xf32> to vector<8xf32>
    %93 = vector.shape_cast %92 : vector<8xf32> to vector<8x1xf32>
    %cst_39 = arith.constant 3.200000e+01 : f32
    %94 = vector.broadcast %cst_39 : f32 to vector<8x1xf32>
    %95 = arith.divf %93, %94 : vector<8x1xf32>
    %cst_40 = arith.constant 9.99999974E-6 : f32
    %96 = vector.broadcast %cst_40 : f32 to vector<8x1xf32>
    %97 = arith.addf %95, %96 : vector<8x1xf32>
    %98 = math.rsqrt %97 : vector<8x1xf32>
    %99 = vector.broadcast %98 : vector<8x1xf32> to vector<8x32xf32>
    %100 = arith.mulf %90, %99 : vector<8x32xf32>
    %101 = vector.broadcast %83 : vector<1x32xf32> to vector<8x32xf32>
    %102 = arith.mulf %100, %101 : vector<8x32xf32>
    %103 = vector.broadcast %84 : vector<1x32xf32> to vector<8x32xf32>
    %104 = arith.addf %102, %103 : vector<8x32xf32>
    %105 = arith.truncf %104 : vector<8x32xf32> to vector<8x32xbf16>
    %c0_41 = arith.constant 0 : index
    %c0_42 = arith.constant 0 : index
    %106 = vector.load %arg12[%c0_41, %c0_42] : memref<32x128xf32, #tpu.memory_space<vmem>>, vector<32x128xf32>
    %107 = arith.truncf %106 : vector<32x128xf32> to vector<32x128xbf16>
    %cst_43 = arith.constant dense<0.000000e+00> : vector<8x128xf32>
    %108 = tpu.matmul %105, %107, %cst_43 {dimension_numbers = #tpu.dot_dimension_numbers<[1], [0], [0], [1], [0, 0, 1, 1], [], []>} : vector<8x32xbf16>, vector<32x128xbf16>, vector<8x128xf32> -> vector<8x128xf32>
    %c0_44 = arith.constant 0 : index
    %c0_45 = arith.constant 0 : index
    %109 = vector.load %arg13[%c0_44, %c0_45] : memref<1x128xf32, #tpu.memory_space<vmem>>, vector<1x128xf32>
    %110 = vector.broadcast %109 : vector<1x128xf32> to vector<8x128xf32>
    %111 = arith.addf %108, %110 : vector<8x128xf32>
    %cst_46 = arith.constant 0.000000e+00 : f32
    %112 = vector.broadcast %cst_46 : f32 to vector<8x128xf32>
    %113 = arith.maximumf %111, %112 : vector<8x128xf32>
    %114 = arith.truncf %113 : vector<8x128xf32> to vector<8x128xbf16>
    %c0_47 = arith.constant 0 : index
    %c0_48 = arith.constant 0 : index
    %115 = vector.load %arg14[%c0_47, %c0_48] : memref<128x32xf32, #tpu.memory_space<vmem>>, vector<128x32xf32>
    %116 = arith.truncf %115 : vector<128x32xf32> to vector<128x32xbf16>
    %cst_49 = arith.constant dense<0.000000e+00> : vector<8x32xf32>
    %117 = tpu.matmul %114, %116, %cst_49 {dimension_numbers = #tpu.dot_dimension_numbers<[1], [0], [0], [1], [0, 0, 1, 1], [], []>} : vector<8x128xbf16>, vector<128x32xbf16>, vector<8x32xf32> -> vector<8x32xf32>
    %c0_50 = arith.constant 0 : index
    %c0_51 = arith.constant 0 : index
    %118 = vector.load %arg15[%c0_50, %c0_51] : memref<1x32xf32, #tpu.memory_space<vmem>>, vector<1x32xf32>
    %119 = vector.broadcast %118 : vector<1x32xf32> to vector<8x32xf32>
    %120 = arith.addf %117, %119 : vector<8x32xf32>
    %121 = arith.addf %104, %120 : vector<8x32xf32>
    %c0_52 = arith.constant 0 : index
    %c0_53 = arith.constant 0 : index
    %122 = vector.load %arg16[%c0_52, %c0_53] : memref<1x32xf32, #tpu.memory_space<vmem>>, vector<1x32xf32>
    %c0_54 = arith.constant 0 : index
    %c0_55 = arith.constant 0 : index
    %123 = vector.load %arg17[%c0_54, %c0_55] : memref<1x32xf32, #tpu.memory_space<vmem>>, vector<1x32xf32>
    %cst_56 = arith.constant dense<0.000000e+00> : vector<8xf32>
    %124 = vector.multi_reduction <add>, %121, %cst_56 [1] : vector<8x32xf32> to vector<8xf32>
    %125 = vector.shape_cast %124 : vector<8xf32> to vector<8x1xf32>
    %cst_57 = arith.constant 3.200000e+01 : f32
    %126 = vector.broadcast %cst_57 : f32 to vector<8x1xf32>
    %127 = arith.divf %125, %126 : vector<8x1xf32>
    %128 = vector.broadcast %127 : vector<8x1xf32> to vector<8x32xf32>
    %129 = arith.subf %121, %128 : vector<8x32xf32>
    %130 = arith.mulf %129, %129 : vector<8x32xf32>
    %cst_58 = arith.constant dense<0.000000e+00> : vector<8xf32>
    %131 = vector.multi_reduction <add>, %130, %cst_58 [1] : vector<8x32xf32> to vector<8xf32>
    %132 = vector.shape_cast %131 : vector<8xf32> to vector<8x1xf32>
    %cst_59 = arith.constant 3.200000e+01 : f32
    %133 = vector.broadcast %cst_59 : f32 to vector<8x1xf32>
    %134 = arith.divf %132, %133 : vector<8x1xf32>
    %cst_60 = arith.constant 9.99999974E-6 : f32
    %135 = vector.broadcast %cst_60 : f32 to vector<8x1xf32>
    %136 = arith.addf %134, %135 : vector<8x1xf32>
    %137 = math.rsqrt %136 : vector<8x1xf32>
    %138 = vector.broadcast %137 : vector<8x1xf32> to vector<8x32xf32>
    %139 = arith.mulf %129, %138 : vector<8x32xf32>
    %140 = vector.broadcast %122 : vector<1x32xf32> to vector<8x32xf32>
    %141 = arith.mulf %139, %140 : vector<8x32xf32>
    %142 = vector.broadcast %123 : vector<1x32xf32> to vector<8x32xf32>
    %143 = arith.addf %141, %142 : vector<8x32xf32>
    %144 = vector.shape_cast %143 : vector<8x32xf32> to vector<1x8x32xf32>
    %c0_61 = arith.constant 0 : index
    %c0_62 = arith.constant 0 : index
    %c0_63 = arith.constant 0 : index
    %145 = vector.load %arg18[%c0_61, %c0_62, %c0_63] : memref<1x8x32xf32, #tpu.memory_space<vmem>>, vector<1x8x32xf32>
    tpu.vector_store %arg18[%c0_61, %c0_62, %c0_63], %144 {strides = array<i32>} : memref<1x8x32xf32, #tpu.memory_space<vmem>>, vector<1x8x32xf32>,
    return
  }
  func.func @transform_0(%arg0: i32) -> (i32, i32, i32) {
    %c0_i32 = arith.constant 0 : i32
    %c0_i32_0 = arith.constant 0 : i32
    %c0_i32_1 = arith.constant 0 : i32
    return %arg0, %c0_i32, %c0_i32_0 : i32, i32, i32
  }
  func.func @transform_1(%arg0: i32) -> (i32, i32, i32) {
    %c0_i32 = arith.constant 0 : i32
    %c0_i32_0 = arith.constant 0 : i32
    %c0_i32_1 = arith.constant 0 : i32
    return %arg0, %c0_i32, %c0_i32_0 : i32, i32, i32
  }
  func.func @transform_2(%arg0: i32) -> (i32, i32, i32) {
    %c0_i32 = arith.constant 0 : i32
    %c0_i32_0 = arith.constant 0 : i32
    %c0_i32_1 = arith.constant 0 : i32
    return %arg0, %c0_i32, %c0_i32_0 : i32, i32, i32
  }
  func.func @transform_3(%arg0: i32) -> (i32, i32) {
    %c0_i32 = arith.constant 0 : i32
    %c0_i32_0 = arith.constant 0 : i32
    %c0_i32_1 = arith.constant 0 : i32
    return %c0_i32, %c0_i32_0 : i32, i32
  }
  func.func @transform_4(%arg0: i32) -> (i32, i32) {
    %c0_i32 = arith.constant 0 : i32
    %c0_i32_0 = arith.constant 0 : i32
    %c0_i32_1 = arith.constant 0 : i32
    return %c0_i32, %c0_i32_0 : i32, i32
  }
  func.func @transform_5(%arg0: i32) -> (i32, i32) {
    %c0_i32 = arith.constant 0 : i32
    %c0_i32_0 = arith.constant 0 : i32
    %c0_i32_1 = arith.constant 0 : i32
    return %c0_i32, %c0_i32_0 : i32, i32
  }
  func.func @transform_6(%arg0: i32) -> (i32, i32) {
    %c0_i32 = arith.constant 0 : i32
    %c0_i32_0 = arith.constant 0 : i32
    %c0_i32_1 = arith.constant 0 : i32
    return %c0_i32, %c0_i32_0 : i32, i32
  }
  func.func @transform_7(%arg0: i32) -> (i32, i32) {
    %c0_i32 = arith.constant 0 : i32
    %c0_i32_0 = arith.constant 0 : i32
    %c0_i32_1 = arith.constant 0 : i32
    return %c0_i32, %c0_i32_0 : i32, i32
  }
  func.func @transform_8(%arg0: i32) -> (i32, i32) {
    %c0_i32 = arith.constant 0 : i32
    %c0_i32_0 = arith.constant 0 : i32
    %c0_i32_1 = arith.constant 0 : i32
    return %c0_i32, %c0_i32_0 : i32, i32
  }
  func.func @transform_9(%arg0: i32) -> (i32, i32) {
    %c0_i32 = arith.constant 0 : i32
    %c0_i32_0 = arith.constant 0 : i32
    %c0_i32_1 = arith.constant 0 : i32
    return %c0_i32, %c0_i32_0 : i32, i32
  }
  func.func @transform_10(%arg0: i32) -> (i32, i32) {
    %c0_i32 = arith.constant 0 : i32
    %c0_i32_0 = arith.constant 0 : i32
    %c0_i32_1 = arith.constant 0 : i32
    return %c0_i32, %c0_i32_0 : i32, i32
  }
  func.func @transform_11(%arg0: i32) -> (i32, i32) {
    %c0_i32 = arith.constant 0 : i32
    %c0_i32_0 = arith.constant 0 : i32
    %c0_i32_1 = arith.constant 0 : i32
    return %c0_i32, %c0_i32_0 : i32, i32
  }
  func.func @transform_12(%arg0: i32) -> (i32, i32) {
    %c0_i32 = arith.constant 0 : i32
    %c0_i32_0 = arith.constant 0 : i32
    %c0_i32_1 = arith.constant 0 : i32
    return %c0_i32, %c0_i32_0 : i32, i32
  }
  func.func @transform_13(%arg0: i32) -> (i32, i32) {
    %c0_i32 = arith.constant 0 : i32
    %c0_i32_0 = arith.constant 0 : i32
    %c0_i32_1 = arith.constant 0 : i32
    return %c0_i32, %c0_i32_0 : i32, i32
  }
  func.func @transform_14(%arg0: i32) -> (i32, i32) {
    %c0_i32 = arith.constant 0 : i32
    %c0_i32_0 = arith.constant 0 : i32
    %c0_i32_1 = arith.constant 0 : i32
    return %c0_i32, %c0_i32_0 : i32, i32
  }
  func.func @transform_15(%arg0: i32) -> (i32, i32) {
    %c0_i32 = arith.constant 0 : i32
    %c0_i32_0 = arith.constant 0 : i32
    %c0_i32_1 = arith.constant 0 : i32
    return %c0_i32, %c0_i32_0 : i32, i32
  }
  func.func @transform_16(%arg0: i32) -> (i32, i32) {
    %c0_i32 = arith.constant 0 : i32
    %c0_i32_0 = arith.constant 0 : i32
    %c0_i32_1 = arith.constant 0 : i32
    return %c0_i32, %c0_i32_0 : i32, i32
  }
  func.func @transform_17(%arg0: i32) -> (i32, i32, i32) {
    %c0_i32 = arith.constant 0 : i32
    %c0_i32_0 = arith.constant 0 : i32
    %c0_i32_1 = arith.constant 0 : i32
    return %arg0, %c0_i32, %c0_i32_0 : i32, i32, i32
  }
}

</mosaic_0001>

<llo_original>
// kernel: mtr_encoder_forward.4
$region0: #{mtr_encoder_forward.4}
  #allocation0 [shape = 'u32[]', space=smem, size = 0x4, offset = 0x4, fixed_abs, tag = 'smem constant byte address 0x4 - core index']
  #allocation1 [shape = 'u32[144,128]{1,0:T(1,128)}', space=vmem, size = 0x12000, scoped, tag = 'internal scratch']
  %s0 = inlined_call_operand.vmem [shape: f32[8,8,10], index: 0, kind: input, shape index: {}]
  %s1 = inlined_call_operand.vmem [shape: f32[8,8,1], index: 1, kind: input, shape index: {}]
  %s2 = inlined_call_operand.vmem [shape: f32[10,32], index: 2, kind: input, shape index: {}]
  %s3 = inlined_call_operand.vmem [shape: f32[1,32], index: 3, kind: input, shape index: {}]
  %s4 = inlined_call_operand.vmem [shape: f32[32,32], index: 4, kind: input, shape index: {}]
  %s5 = inlined_call_operand.vmem [shape: f32[32,32], index: 5, kind: input, shape index: {}]
  %s6 = inlined_call_operand.vmem [shape: f32[1,32], index: 6, kind: input, shape index: {}]
  %s7 = inlined_call_operand.vmem [shape: f32[32,32], index: 7, kind: input, shape index: {}]
  %s8 = inlined_call_operand.vmem [shape: f32[1,32], index: 8, kind: input, shape index: {}]
  %s9 = inlined_call_operand.vmem [shape: f32[32,32], index: 9, kind: input, shape index: {}]
  %s10 = inlined_call_operand.vmem [shape: f32[1,32], index: 10, kind: input, shape index: {}]
  %s11 = inlined_call_operand.vmem [shape: f32[32,32], index: 11, kind: input, shape index: {}]
  %s12 = inlined_call_operand.vmem [shape: f32[1,32], index: 12, kind: input, shape index: {}]
  %s13 = inlined_call_operand.vmem [shape: f32[8,32], index: 13, kind: output, shape index: {}]
  %s14 = sld [smem:[#allocation0]]
  $region62: #{mtr_encoder_forward.4} parent=0
    _
  %s16 = ssub.s32 1, %s14
  %s17 = scalar_select 0, %s16, %s14
  // Predicated region
  $region2: #{mtr_encoder_forward.4} parent=0 // pred_check
    _
  $region3: #{mtr_encoder_forward.4} parent=0 // pred_check_branch
    %19 = sbr.rel (0) target = $region5
  $region4: #{mtr_encoder_forward.4} parent=0 // pred_region
    _
  $region5: #{mtr_encoder_forward.4} parent=0 // pred_fallthru
    _
  // Predicated region
  $region6: #{mtr_encoder_forward.4} parent=0 // pred_check
    _
  $region7: #{mtr_encoder_forward.4} parent=0 // pred_check_branch
    %21 = sbr.rel (0) target = $region9
  $region8: #{mtr_encoder_forward.4} parent=0 // pred_region
    _
  $region9: #{mtr_encoder_forward.4} parent=0 // pred_fallthru
    _
  // Predicated region
  $region10: #{mtr_encoder_forward.4} parent=0 // pred_check
    _
  $region11: #{mtr_encoder_forward.4} parent=0 // pred_check_branch
    %23 = sbr.rel (0) target = $region13
  $region12: #{mtr_encoder_forward.4} parent=0 // pred_region
    _
  $region13: #{mtr_encoder_forward.4} parent=0 // pred_fallthru
    _
  // Predicated region
  $region14: #{mtr_encoder_forward.4} parent=0 // pred_check
    _
  $region15: #{mtr_encoder_forward.4} parent=0 // pred_check_branch
    %25 = sbr.rel (0) target = $region17
  $region16: #{mtr_encoder_forward.4} parent=0 // pred_region
    _
  $region17: #{mtr_encoder_forward.4} parent=0 // pred_fallthru
    _
  // Predicated region
  $region18: #{mtr_encoder_forward.4} parent=0 // pred_check
    _
  $region19: #{mtr_encoder_forward.4} parent=0 // pred_check_branch
    %27 = sbr.rel (0) target = $region21
  $region20: #{mtr_encoder_forward.4} parent=0 // pred_region
    _
  $region21: #{mtr_encoder_forward.4} parent=0 // pred_fallthru
    _
  // Predicated region
  $region22: #{mtr_encoder_forward.4} parent=0 // pred_check
    _
  $region23: #{mtr_encoder_forward.4} parent=0 // pred_check_branch
    %29 = sbr.rel (0) target = $region25
  $region24: #{mtr_encoder_forward.4} parent=0 // pred_region
    _
  $region25: #{mtr_encoder_forward.4} parent=0 // pred_fallthru
    _
  // Predicated region
  $region26: #{mtr_encoder_forward.4} parent=0 // pred_check
    _
  $region27: #{mtr_encoder_forward.4} parent=0 // pred_check_branch
    %31 = sbr.rel (0) target = $region29
  $region28: #{mtr_encoder_forward.4} parent=0 // pred_region
    _
  $region29: #{mtr_encoder_forward.4} parent=0 // pred_fallthru
    _
  // Predicated region
  $region30: #{mtr_encoder_forward.4} parent=0 // pred_check
    _
  $region31: #{mtr_encoder_forward.4} parent=0 // pred_check_branch
    %33 = sbr.rel (0) target = $region33
  $region32: #{mtr_encoder_forward.4} parent=0 // pred_region
    _
  $region33: #{mtr_encoder_forward.4} parent=0 // pred_fallthru
    _
  // Predicated region
  $region34: #{mtr_encoder_forward.4} parent=0 // pred_check
    _
  $region35: #{mtr_encoder_forward.4} parent=0 // pred_check_branch
    %35 = sbr.rel (0) target = $region37
  $region36: #{mtr_encoder_forward.4} parent=0 // pred_region
    _
  $region37: #{mtr_encoder_forward.4} parent=0 // pred_fallthru
    _
  // Predicated region
  $region38: #{mtr_encoder_forward.4} parent=0 // pred_check
    _
  $region39: #{mtr_encoder_forward.4} parent=0 // pred_check_branch
    %37 = sbr.rel (0) target = $region41
  $region40: #{mtr_encoder_forward.4} parent=0 // pred_region
    _
  $region41: #{mtr_encoder_forward.4} parent=0 // pred_fallthru
    _
  // Predicated region
  $region42: #{mtr_encoder_forward.4} parent=0 // pred_check
    _
  $region43: #{mtr_encoder_forward.4} parent=0 // pred_check_branch
    %39 = sbr.rel (0) target = $region45
  $region44: #{mtr_encoder_forward.4} parent=0 // pred_region
    _
  $region45: #{mtr_encoder_forward.4} parent=0 // pred_fallthru
    _
  // Predicated region
  $region46: #{mtr_encoder_forward.4} parent=0 // pred_check
    _
  $region47: #{mtr_encoder_forward.4} parent=0 // pred_check_branch
    %41 = sbr.rel (0) target = $region49
  $region48: #{mtr_encoder_forward.4} parent=0 // pred_region
    _
  $region49: #{mtr_encoder_forward.4} parent=0 // pred_fallthru
    _
  // Predicated region
  $region50: #{mtr_encoder_forward.4} parent=0 // pred_check
    _
  $region51: #{mtr_encoder_forward.4} parent=0 // pred_check_branch
    %43 = sbr.rel (0) target = $region53
  $region52: #{mtr_encoder_forward.4} parent=0 // pred_region
    _
  $region53: #{mtr_encoder_forward.4} parent=0 // pred_fallthru
    _
  %v45 = vld [vmem:[%s1] sm:$0xff]
  %v46 = vld [vmem:[%s1 + $0x8] sm:$0xff]
  %v47 = vld [vmem:[%s1 + $0x10] sm:$0xff]
  %v48 = vld [vmem:[%s1 + $0x18] sm:$0xff]
  %v49 = vld [vmem:[%s1 + $0x20] sm:$0xff]
  %v50 = vld [vmem:[%s1 + $0x28] sm:$0xff]
  %v51 = vld [vmem:[%s1 + $0x30] sm:$0xff]
  %v52 = vld [vmem:[%s1 + $0x38] sm:$0xff]
  %v53 = vld [vmem:[%s0] sm:$0xff]
  %v54 = vld [vmem:[%s0 + $0x8] sm:$0xff]
  %v55 = vld [vmem:[%s0 + $0x10] sm:$0xff]
  %v56 = vld [vmem:[%s0 + $0x18] sm:$0xff]
  %v57 = vld [vmem:[%s0 + $0x20] sm:$0xff]
  %v58 = vld [vmem:[%s0 + $0x28] sm:$0xff]
  %v59 = vld [vmem:[%s0 + $0x30] sm:$0xff]
  %v60 = vld [vmem:[%s0 + $0x38] sm:$0xff]
  %v61 = vld [vmem:[%s2] sm:$0xff]
  %v62 = vld [vmem:[%s2 + $0x8] sm:$0x3]
  %v63 = vld [vmem:[%s3] sm:$0x1]
  %v64 = vpack.c.bf16 %v54, %v53
  %v65 = vpack.c.bf16 %v56, %v55
  %v66 = vpack.c.bf16 %v58, %v57
  %v67 = vpack.c.bf16 %v60, %v59
  %v68 = vpack.c.bf16 %v62, %v61
  %v70 = vlaneseq
  %v71 = vshrl.u32 %v70, 7
  %v72 = vsub.s32 0, %v71
  %v73 = vrot.slane %v63, %v72
  %vm75 = vcmask 80896
  %v77 = vsel %vm75, %v64, 0
  %v80 = vsel %vm75, %v65, 0
  %v83 = vsel %vm75, %v66, 0
  %v86 = vsel %vm75, %v67, 0
  %vm88 = vcmask 1044480
  %v90 = vsel %vm88, %v68, 0
  %92 = vmatprep.subr.bf16.mxu0 0
  %93 = vmatpush1.bf16.msra.mxu0 0
  %94 = vmatprep.subr.bf16.mxu0 0
  %95 = vmatpush1.bf16.msra.mxu0 0
  %96 = vmatprep.subr.bf16.mxu0 0
  %97 = vmatpush1.bf16.msra.mxu0 0
  %98 = vmatprep.subr.bf16.mxu0 0
  %99 = vmatpush1.bf16.msra.mxu0 0
  %100 = vmatprep.subr.bf16.mxu0 0
  %101 = vmatpush1.bf16.msra.mxu0 0
  %102 = vmatprep.subr.bf16.mxu0 0
  %103 = vmatpush1.bf16.msra.mxu0 0
  %104 = vmatprep.subr.bf16.mxu0 0
  %105 = vmatpush1.bf16.msra.mxu0 0
  %106 = vmatprep.subr.bf16.mxu0 0
  %107 = vmatpush1.bf16.msra.mxu0 %v90
  %108 = vmatprep.subr.bf16.mxu0 0
  %109 = vmatpush2.bf16.msra.mxu0 0
  %110 = vmatprep.subr.bf16.mxu0 0
  %111 = vmatpush2.bf16.msra.mxu0 0
  %112 = vmatprep.subr.bf16.mxu0 0
  %113 = vmatpush2.bf16.msra.mxu0 0
  %114 = vmatprep.subr.bf16.mxu0 0
  %115 = vmatpush2.bf16.msra.mxu0 0
  %116 = vmatprep.subr.bf16.mxu0 0
  %117 = vmatpush2.bf16.msra.mxu0 0
  %118 = vmatprep.subr.bf16.mxu0 0
  %119 = vmatpush2.bf16.msra.mxu0 0
  %120 = vmatprep.subr.bf16.mxu0 0
  %121 = vmatpush2.bf16.msra.mxu0 0
  %122 = vmatprep.subr.bf16.mxu0 0
  %123 = vmatpush2.bf16.msra.mxu0 0
  %124 = vmatprep.mubr.bf16.mxu0 0
  %125 = vmatmul.mubr.bf16.gmra.mxu0 %v77
  %v126 = vpop.f32.mrf.mxu0
  %v127 = vadd.f32 %v73, %v126
  %v128 = vpop.f32.mrf.mxu0
  %v129 = vpop.f32.mrf.mxu0
  %v130 = vadd.f32 %v73, %v129
  %v131 = vpop.f32.mrf.mxu0
  %132 = vmatprep.mubr.bf16.mxu0 0
  %133 = vmatmul.mubr.bf16.gmra.mxu0 %v80
  %v134 = vpop.f32.mrf.mxu0
  %v135 = vadd.f32 %v73, %v134
  %v136 = vpop.f32.mrf.mxu0
  %v137 = vpop.f32.mrf.mxu0
  %v138 = vadd.f32 %v73, %v137
  %v139 = vpop.f32.mrf.mxu0
  %140 = vmatprep.mubr.bf16.mxu0 0
  %141 = vmatmul.mubr.bf16.gmra.mxu0 %v83
  %v142 = vpop.f32.mrf.mxu0
  %v143 = vadd.f32 %v73, %v142
  %v144 = vpop.f32.mrf.mxu0
  %v145 = vpop.f32.mrf.mxu0
  %v146 = vadd.f32 %v73, %v145
  %v147 = vpop.f32.mrf.mxu0
  %148 = vmatprep.mubr.bf16.mxu0 0
  %149 = vmatmul.mubr.bf16.gmra.mxu0 %v86
  %v150 = vpop.f32.mrf.mxu0
  %v151 = vadd.f32 %v73, %v150
  %v152 = vpop.f32.mrf.mxu0
  %v153 = vpop.f32.mrf.mxu0
  %v154 = vadd.f32 %v73, %v153
  %v155 = vpop.f32.mrf.mxu0
  %156 = vdwg.mxu0
  %v157 = vmax.f32 %v127, 0.0
  %v158 = vmax.f32 %v130, 0.0
  %v159 = vmax.f32 %v135, 0.0
  %v160 = vmax.f32 %v138, 0.0
  %v161 = vmax.f32 %v143, 0.0
  %v162 = vmax.f32 %v146, 0.0
  %v163 = vmax.f32 %v151, 0.0
  %v164 = vmax.f32 %v154, 0.0
  %166 = vset.pattern.permute.xlu0 0
  %167 = vperm.xlu0 %166, %v45
  %v168 = vpop.permute.xlu0 %167
  %171 = vset.pattern.permute.xlu0 0
  %172 = vperm.xlu0 %171, %v46
  %v173 = vpop.permute.xlu0 %172
  %176 = vset.pattern.permute.xlu0 0
  %177 = vperm.xlu0 %176, %v47
  %v178 = vpop.permute.xlu0 %177
  %181 = vset.pattern.permute.xlu0 0
  %182 = vperm.xlu0 %181, %v48
  %v183 = vpop.permute.xlu0 %182
  %186 = vset.pattern.permute.xlu0 0
  %187 = vperm.xlu0 %186, %v49
  %v188 = vpop.permute.xlu0 %187
  %191 = vset.pattern.permute.xlu0 0
  %192 = vperm.xlu0 %191, %v50
  %v193 = vpop.permute.xlu0 %192
  %196 = vset.pattern.permute.xlu0 0
  %197 = vperm.xlu0 %196, %v51
  %v198 = vpop.permute.xlu0 %197
  %201 = vset.pattern.permute.xlu0 0
  %202 = vperm.xlu0 %201, %v52
  %v203 = vpop.permute.xlu0 %202
  %v205 = vmul.f32 %v157, %v168
  %v206 = vmul.f32 %v158, %v173
  %v207 = vmul.f32 %v159, %v178
  %v208 = vmul.f32 %v160, %v183
  %v209 = vmul.f32 %v161, %v188
  %v210 = vmul.f32 %v162, %v193
  %v211 = vmul.f32 %v163, %v198
  %v212 = vmul.f32 %v164, %v203
  %vm213 = vcmask 261120
  %v214 = vsel %vm213, %v205, -inf
  %v215 = vrot.slane %v214, 4
  %v216 = vmax.f32 %v214, %v215
  %v217 = vrot.slane %v216, 2
  %v218 = vmax.f32 %v216, %v217
  %v219 = vrot.slane %v218, 1
  %v220 = vmax.f32 %v218, %v219
  %v221 = vsel %vm213, %v206, -inf
  %v222 = vrot.slane %v221, 4
  %v223 = vmax.f32 %v221, %v222
  %v224 = vrot.slane %v223, 2
  %v225 = vmax.f32 %v223, %v224
  %v226 = vrot.slane %v225, 1
  %v227 = vmax.f32 %v225, %v226
  %v228 = vsel %vm213, %v207, -inf
  %v229 = vrot.slane %v228, 4
  %v230 = vmax.f32 %v228, %v229
  %v231 = vrot.slane %v230, 2
  %v232 = vmax.f32 %v230, %v231
  %v233 = vrot.slane %v232, 1
  %v234 = vmax.f32 %v232, %v233
  %v235 = vsel %vm213, %v208, -inf
  %v236 = vrot.slane %v235, 4
  %v237 = vmax.f32 %v235, %v236
  %v238 = vrot.slane %v237, 2
  %v239 = vmax.f32 %v237, %v238
  %v240 = vrot.slane %v239, 1
  %v241 = vmax.f32 %v239, %v240
  %v242 = vsel %vm213, %v209, -inf
  %v243 = vrot.slane %v242, 4
  %v244 = vmax.f32 %v242, %v243
  %v245 = vrot.slane %v244, 2
  %v246 = vmax.f32 %v244, %v245
  %v247 = vrot.slane %v246, 1
  %v248 = vmax.f32 %v246, %v247
  %v249 = vsel %vm213, %v210, -inf
  %v250 = vrot.slane %v249, 4
  %v251 = vmax.f32 %v249, %v250
  %v252 = vrot.slane %v251, 2
  %v253 = vmax.f32 %v251, %v252
  %v254 = vrot.slane %v253, 1
  %v255 = vmax.f32 %v253, %v254
  %v256 = vsel %vm213, %v211, -inf
  %v257 = vrot.slane %v256, 4
  %v258 = vmax.f32 %v256, %v257
  %v259 = vrot.slane %v258, 2
  %v260 = vmax.f32 %v258, %v259
  %v261 = vrot.slane %v260, 1
  %v262 = vmax.f32 %v260, %v261
  %v263 = vsel %vm213, %v212, -inf
  %v264 = vrot.slane %v263, 4
  %v265 = vmax.f32 %v263, %v264
  %v266 = vrot.slane %v265, 2
  %v267 = vmax.f32 %v265, %v266
  %v268 = vrot.slane %v267, 1
  %v269 = vmax.f32 %v267, %v268
  %v270 = vld [vmem:[%s4] sm:$0xff]
  %v271 = vld [vmem:[%s4 + $0x8] sm:$0xff]
  %v272 = vld [vmem:[%s4 + $0x10] sm:$0xff]
  %v273 = vld [vmem:[%s4 + $0x18] sm:$0xff]
  %v274 = vld [vmem:[%s5] sm:$0xff]
  %v275 = vld [vmem:[%s5 + $0x8] sm:$0xff]
  %v276 = vld [vmem:[%s5 + $0x10] sm:$0xff]
  %v277 = vld [vmem:[%s5 + $0x18] sm:$0xff]
  %v278 = vld [vmem:[%s6] sm:$0x1]
  %v279 = vpack.c.bf16 %v206, %v205
  %v280 = vpack.c.bf16 %v208, %v207
  %v281 = vpack.c.bf16 %v210, %v209
  %v282 = vpack.c.bf16 %v212, %v211
  %v283 = vpack.c.bf16 %v271, %v270
  %v284 = vpack.c.bf16 %v273, %v272
  %v286 = vsel %vm213, %v279, 0
  %v289 = vsel %vm213, %v280, 0
  %v292 = vsel %vm213, %v281, 0
  %v295 = vsel %vm213, %v282, 0
  %297 = vmatprep.subr.bf16.mxu0 0
  %298 = vmatpush1.bf16.msra.mxu0 0
  %299 = vmatprep.subr.bf16.mxu0 0
  %300 = vmatpush1.bf16.msra.mxu0 0
  %301 = vmatprep.subr.bf16.mxu0 0
  %302 = vmatpush1.bf16.msra.mxu0 0
  %303 = vmatprep.subr.bf16.mxu0 0
  %304 = vmatpush1.bf16.msra.mxu0 0
  %305 = vmatprep.subr.bf16.mxu0 0
  %306 = vmatpush1.bf16.msra.mxu0 0
  %307 = vmatprep.subr.bf16.mxu0 0
  %308 = vmatpush1.bf16.msra.mxu0 0
  %309 = vmatprep.subr.bf16.mxu0 0
  %310 = vmatpush1.bf16.msra.mxu0 %v284
  %311 = vmatprep.subr.bf16.mxu0 0
  %312 = vmatpush1.bf16.msra.mxu0 %v283
  %313 = vmatprep.subr.bf16.mxu0 0
  %314 = vmatpush2.bf16.msra.mxu0 0
  %315 = vmatprep.subr.bf16.mxu0 0
  %316 = vmatpush2.bf16.msra.mxu0 0
  %317 = vmatprep.subr.bf16.mxu0 0
  %318 = vmatpush2.bf16.msra.mxu0 0
  %319 = vmatprep.subr.bf16.mxu0 0
  %320 = vmatpush2.bf16.msra.mxu0 0
  %321 = vmatprep.subr.bf16.mxu0 0
  %322 = vmatpush2.bf16.msra.mxu0 0
  %323 = vmatprep.subr.bf16.mxu0 0
  %324 = vmatpush2.bf16.msra.mxu0 0
  %325 = vmatprep.subr.bf16.mxu0 0
  %326 = vmatpush2.bf16.msra.mxu0 0
  %327 = vmatprep.subr.bf16.mxu0 0
  %328 = vmatpush2.bf16.msra.mxu0 0
  %329 = vmatprep.mubr.bf16.mxu0 0
  %330 = vmatmul.mubr.bf16.gmra.mxu0 %v286
  %v331 = vpop.f32.mrf.mxu0
  %v332 = vadd.f32 0.0, %v331
  %v333 = vpop.f32.mrf.mxu0
  %v334 = vpop.f32.mrf.mxu0
  %v335 = vadd.f32 0.0, %v334
  %v336 = vpop.f32.mrf.mxu0
  %337 = vmatprep.mubr.bf16.mxu0 0
  %338 = vmatmul.mubr.bf16.gmra.mxu0 %v289
  %v339 = vpop.f32.mrf.mxu0
  %v340 = vadd.f32 0.0, %v339
  %v341 = vpop.f32.mrf.mxu0
  %v342 = vpop.f32.mrf.mxu0
  %v343 = vadd.f32 0.0, %v342
  %v344 = vpop.f32.mrf.mxu0
  %345 = vmatprep.mubr.bf16.mxu0 0
  %346 = vmatmul.mubr.bf16.gmra.mxu0 %v292
  %v347 = vpop.f32.mrf.mxu0
  %v348 = vadd.f32 0.0, %v347
  %v349 = vpop.f32.mrf.mxu0
  %v350 = vpop.f32.mrf.mxu0
  %v351 = vadd.f32 0.0, %v350
  %v352 = vpop.f32.mrf.mxu0
  %353 = vmatprep.mubr.bf16.mxu0 0
  %354 = vmatmul.mubr.bf16.gmra.mxu0 %v295
  %v355 = vpop.f32.mrf.mxu0
  %v356 = vadd.f32 0.0, %v355
  %v357 = vpop.f32.mrf.mxu0
  %v358 = vpop.f32.mrf.mxu0
  %v359 = vadd.f32 0.0, %v358
  %v360 = vpop.f32.mrf.mxu0
  %361 = vdwg.mxu0
  %v362 = vpack.c.bf16 %v220, %v220
  %v363 = vpack.c.bf16 %v227, %v227
  %v364 = vpack.c.bf16 %v234, %v234
  %v365 = vpack.c.bf16 %v241, %v241
  %v366 = vpack.c.bf16 %v248, %v248
  %v367 = vpack.c.bf16 %v255, %v255
  %v368 = vpack.c.bf16 %v262, %v262
  %v369 = vpack.c.bf16 %v269, %v269
  %v370 = vpack.c.bf16 %v275, %v274
  %v371 = vpack.c.bf16 %v277, %v276
  %v380 = vunpack.c.l.b16 %v362
  %v381 = vunpack.c.l.b16 %v363
  %v382 = vunpack.c.l.b16 %v364
  %v383 = vunpack.c.l.b16 %v365
  %v384 = vunpack.c.l.b16 %v366
  %v385 = vunpack.c.l.b16 %v367
  %v386 = vunpack.c.l.b16 %v368
  %v387 = vunpack.c.l.b16 %v369
  %vm388 = vcmask 1041409
  %v389 = vsel %vm388, %v381, %v380
  %vm390 = vcmask 1042434
  %v391 = vsel %vm390, %v382, %v389
  %vm392 = vcmask 1043459
  %v393 = vsel %vm392, %v383, %v391
  %vm394 = vcmask 1044484
  %v395 = vsel %vm394, %v384, %v393
  %vm396 = vcmask 1045509
  %v397 = vsel %vm396, %v385, %v395
  %vm398 = vcmask 1046534
  %v399 = vsel %vm398, %v386, %v397
  %vm400 = vcmask 1047559
  %v401 = vsel %vm400, %v387, %v399
  %v402 = vpack.c.b16 %v401, %v401
  %v404 = vsel %vm213, %v402, 0
  %406 = vmatprep.subr.bf16.mxu0 0
  %407 = vmatpush1.bf16.msra.mxu0 0
  %408 = vmatprep.subr.bf16.mxu0 0
  %409 = vmatpush1.bf16.msra.mxu0 0
  %410 = vmatprep.subr.bf16.mxu0 0
  %411 = vmatpush1.bf16.msra.mxu0 0
  %412 = vmatprep.subr.bf16.mxu0 0
  %413 = vmatpush1.bf16.msra.mxu0 0
  %414 = vmatprep.subr.bf16.mxu0 0
  %415 = vmatpush1.bf16.msra.mxu0 0
  %416 = vmatprep.subr.bf16.mxu0 0
  %417 = vmatpush1.bf16.msra.mxu0 0
  %418 = vmatprep.subr.bf16.mxu0 0
  %419 = vmatpush1.bf16.msra.mxu0 %v371
  %420 = vmatprep.subr.bf16.mxu0 0
  %421 = vmatpush1.bf16.msra.mxu0 %v370
  %422 = vmatprep.subr.bf16.mxu0 0
  %423 = vmatpush2.bf16.msra.mxu0 0
  %424 = vmatprep.subr.bf16.mxu0 0
  %425 = vmatpush2.bf16.msra.mxu0 0
  %426 = vmatprep.subr.bf16.mxu0 0
  %427 = vmatpush2.bf16.msra.mxu0 0
  %428 = vmatprep.subr.bf16.mxu0 0
  %429 = vmatpush2.bf16.msra.mxu0 0
  %430 = vmatprep.subr.bf16.mxu0 0
  %431 = vmatpush2.bf16.msra.mxu0 0
  %432 = vmatprep.subr.bf16.mxu0 0
  %433 = vmatpush2.bf16.msra.mxu0 0
  %434 = vmatprep.subr.bf16.mxu0 0
  %435 = vmatpush2.bf16.msra.mxu0 0
  %436 = vmatprep.subr.bf16.mxu0 0
  %437 = vmatpush2.bf16.msra.mxu0 0
  %438 = vmatprep.mubr.bf16.mxu0 0
  %439 = vmatmul.mubr.bf16.gmra.mxu0 %v404
  %v440 = vpop.f32.mrf.mxu0
  %v441 = vadd.f32 0.0, %v440
  %v442 = vpop.f32.mrf.mxu0
  %v443 = vpop.f32.mrf.mxu0
  %v444 = vpop.f32.mrf.mxu0
  %445 = vdwg.mxu0
  %v447 = vcombine.high %v441, %v441
  %v449 = vunpack.c.l.s4 1966171168
  %v450 = vunpack.c.0.s8 %v449
  %v451 = vlaneseq
  %v452 = vshrl.u32 %v451, 7
  %v453 = vsub.s32 %v450, %v452
  %v454 = vrot.slane %v441, %v453
  %v456 = vunpack.c.l.s4 1966171168
  %v457 = vunpack.c.0.s8 %v456
  %v458 = vlaneseq
  %v459 = vshrl.u32 %v458, 7
  %v460 = vsub.s32 %v457, %v459
  %v461 = vrot.slane %v447, %v460
  %v462 = vcombine.high %v454, %v454
  %v463 = vcombine.high %v461, %v461
  %v465 = vunpack.c.l.s4 1966171168
  %v466 = vunpack.c.0.s8 %v465
  %v467 = vlaneseq
  %v468 = vshrl.u32 %v467, 7
  %v469 = vsub.s32 %v466, %v468
  %v470 = vrot.slane %v454, %v469
  %v472 = vunpack.c.l.s4 1966171168
  %v473 = vunpack.c.0.s8 %v472
  %v474 = vlaneseq
  %v475 = vshrl.u32 %v474, 7
  %v476 = vsub.s32 %v473, %v475
  %v477 = vrot.slane %v461, %v476
  %v479 = vunpack.c.l.s4 1966171168
  %v480 = vunpack.c.0.s8 %v479
  %v481 = vlaneseq
  %v482 = vshrl.u32 %v481, 7
  %v483 = vsub.s32 %v480, %v482
  %v484 = vrot.slane %v462, %v483
  %v486 = vunpack.c.l.s4 1966171168
  %v487 = vunpack.c.0.s8 %v486
  %v488 = vlaneseq
  %v489 = vshrl.u32 %v488, 7
  %v490 = vsub.s32 %v487, %v489
  %v491 = vrot.slane %v463, %v490
  %v492 = vcombine.high %v470, %v470
  %v493 = vcombine.high %v477, %v477
  %v494 = vcombine.high %v484, %v484
  %v495 = vcombine.high %v491, %v491
  %v496 = vlaneseq
  %v497 = vshrl.u32 %v496, 7
  %v498 = vsub.s32 0, %v497
  %v499 = vrot.slane %v470, %v498
  %v500 = vlaneseq
  %v501 = vshrl.u32 %v500, 7
  %v502 = vsub.s32 0, %v501
  %v503 = vrot.slane %v484, %v502
  %v504 = vlaneseq
  %v505 = vshrl.u32 %v504, 7
  %v506 = vsub.s32 0, %v505
  %v507 = vrot.slane %v492, %v506
  %v508 = vlaneseq
  %v509 = vshrl.u32 %v508, 7
  %v510 = vsub.s32 0, %v509
  %v511 = vrot.slane %v494, %v510
  %v512 = vlaneseq
  %v513 = vshrl.u32 %v512, 7
  %v514 = vsub.s32 0, %v513
  %v515 = vrot.slane %v477, %v514
  %v516 = vlaneseq
  %v517 = vshrl.u32 %v516, 7
  %v518 = vsub.s32 0, %v517
  %v519 = vrot.slane %v491, %v518
  %v520 = vlaneseq
  %v521 = vshrl.u32 %v520, 7
  %v522 = vsub.s32 0, %v521
  %v523 = vrot.slane %v493, %v522
  %v524 = vlaneseq
  %v525 = vshrl.u32 %v524, 7
  %v526 = vsub.s32 0, %v525
  %v527 = vrot.slane %v495, %v526
  %v536 = vadd.f32 %v332, %v499
  %v537 = vadd.f32 %v335, %v503
  %v538 = vadd.f32 %v340, %v507
  %v539 = vadd.f32 %v343, %v511
  %v540 = vadd.f32 %v348, %v515
  %v541 = vadd.f32 %v351, %v519
  %v542 = vadd.f32 %v356, %v523
  %v543 = vadd.f32 %v359, %v527
  %v545 = vlaneseq
  %v546 = vshrl.u32 %v545, 7
  %v547 = vsub.s32 0, %v546
  %v548 = vrot.slane %v278, %v547
  %v550 = vadd.f32 %v536, %v548
  %v551 = vadd.f32 %v537, %v548
  %v552 = vadd.f32 %v538, %v548
  %v553 = vadd.f32 %v539, %v548
  %v554 = vadd.f32 %v540, %v548
  %v555 = vadd.f32 %v541, %v548
  %v556 = vadd.f32 %v542, %v548
  %v557 = vadd.f32 %v543, %v548
  %v558 = vmax.f32 %v550, 0.0
  %v559 = vmax.f32 %v551, 0.0
  %v560 = vmax.f32 %v552, 0.0
  %v561 = vmax.f32 %v553, 0.0
  %v562 = vmax.f32 %v554, 0.0
  %v563 = vmax.f32 %v555, 0.0
  %v564 = vmax.f32 %v556, 0.0
  %v565 = vmax.f32 %v557, 0.0
  %v566 = vld [vmem:[%s7] sm:$0xff]
  %v567 = vld [vmem:[%s7 + $0x8] sm:$0xff]
  %v568 = vld [vmem:[%s7 + $0x10] sm:$0xff]
  %v569 = vld [vmem:[%s7 + $0x18] sm:$0xff]
  %v570 = vld [vmem:[%s8] sm:$0x1]
  %v571 = vpack.c.bf16 %v559, %v558
  %v572 = vpack.c.bf16 %v561, %v560
  %v573 = vpack.c.bf16 %v563, %v562
  %v574 = vpack.c.bf16 %v565, %v564
  %v575 = vpack.c.bf16 %v567, %v566
  %v576 = vpack.c.bf16 %v569, %v568
  %v578 = vlaneseq
  %v579 = vshrl.u32 %v578, 7
  %v580 = vsub.s32 0, %v579
  %v581 = vrot.slane %v570, %v580
  %v584 = vsel %vm213, %v571, 0
  %v587 = vsel %vm213, %v572, 0
  %v590 = vsel %vm213, %v573, 0
  %v593 = vsel %vm213, %v574, 0
  %595 = vmatprep.subr.bf16.mxu0 0
  %596 = vmatpush1.bf16.msra.mxu0 0
  %597 = vmatprep.subr.bf16.mxu0 0
  %598 = vmatpush1.bf16.msra.mxu0 0
  %599 = vmatprep.subr.bf16.mxu0 0
  %600 = vmatpush1.bf16.msra.mxu0 0
  %601 = vmatprep.subr.bf16.mxu0 0
  %602 = vmatpush1.bf16.msra.mxu0 0
  %603 = vmatprep.subr.bf16.mxu0 0
  %604 = vmatpush1.bf16.msra.mxu0 0
  %605 = vmatprep.subr.bf16.mxu0 0
  %606 = vmatpush1.bf16.msra.mxu0 0
  %607 = vmatprep.subr.bf16.mxu0 0
  %608 = vmatpush1.bf16.msra.mxu0 %v576
  %609 = vmatprep.subr.bf16.mxu0 0
  %610 = vmatpush1.bf16.msra.mxu0 %v575
  %611 = vmatprep.subr.bf16.mxu0 0
  %612 = vmatpush2.bf16.msra.mxu0 0
  %613 = vmatprep.subr.bf16.mxu0 0
  %614 = vmatpush2.bf16.msra.mxu0 0
  %615 = vmatprep.subr.bf16.mxu0 0
  %616 = vmatpush2.bf16.msra.mxu0 0
  %617 = vmatprep.subr.bf16.mxu0 0
  %618 = vmatpush2.bf16.msra.mxu0 0
  %619 = vmatprep.subr.bf16.mxu0 0
  %620 = vmatpush2.bf16.msra.mxu0 0
  %621 = vmatprep.subr.bf16.mxu0 0
  %622 = vmatpush2.bf16.msra.mxu0 0
  %623 = vmatprep.subr.bf16.mxu0 0
  %624 = vmatpush2.bf16.msra.mxu0 0
  %625 = vmatprep.subr.bf16.mxu0 0
  %626 = vmatpush2.bf16.msra.mxu0 0
  %627 = vmatprep.mubr.bf16.mxu0 0
  %628 = vmatmul.mubr.bf16.gmra.mxu0 %v584
  %v629 = vpop.f32.mrf.mxu0
  %v630 = vadd.f32 %v581, %v629
  %v631 = vpop.f32.mrf.mxu0
  %v632 = vpop.f32.mrf.mxu0
  %v633 = vadd.f32 %v581, %v632
  %v634 = vpop.f32.mrf.mxu0
  %635 = vmatprep.mubr.bf16.mxu0 0
  %636 = vmatmul.mubr.bf16.gmra.mxu0 %v587
  %v637 = vpop.f32.mrf.mxu0
  %v638 = vadd.f32 %v581, %v637
  %v639 = vpop.f32.mrf.mxu0
  %v640 = vpop.f32.mrf.mxu0
  %v641 = vadd.f32 %v581, %v640
  %v642 = vpop.f32.mrf.mxu0
  %643 = vmatprep.mubr.bf16.mxu0 0
  %644 = vmatmul.mubr.bf16.gmra.mxu0 %v590
  %v645 = vpop.f32.mrf.mxu0
  %v646 = vadd.f32 %v581, %v645
  %v647 = vpop.f32.mrf.mxu0
  %v648 = vpop.f32.mrf.mxu0
  %v649 = vadd.f32 %v581, %v648
  %v650 = vpop.f32.mrf.mxu0
  %651 = vmatprep.mubr.bf16.mxu0 0
  %652 = vmatmul.mubr.bf16.gmra.mxu0 %v593
  %v653 = vpop.f32.mrf.mxu0
  %v654 = vadd.f32 %v581, %v653
  %v655 = vpop.f32.mrf.mxu0
  %v656 = vpop.f32.mrf.mxu0
  %v657 = vadd.f32 %v581, %v656
  %v658 = vpop.f32.mrf.mxu0
  %659 = vdwg.mxu0
  %v660 = vmax.f32 %v630, 0.0
  %v661 = vmax.f32 %v633, 0.0
  %v662 = vmax.f32 %v638, 0.0
  %v663 = vmax.f32 %v641, 0.0
  %v664 = vmax.f32 %v646, 0.0
  %v665 = vmax.f32 %v649, 0.0
  %v666 = vmax.f32 %v654, 0.0
  %v667 = vmax.f32 %v657, 0.0
  %v668 = vmul.f32 %v660, %v168
  %v669 = vmul.f32 %v661, %v173
  %v670 = vmul.f32 %v662, %v178
  %v671 = vmul.f32 %v663, %v183
  %v672 = vmul.f32 %v664, %v188
  %v673 = vmul.f32 %v665, %v193
  %v674 = vmul.f32 %v666, %v198
  %v675 = vmul.f32 %v667, %v203
  %v676 = vsel %vm213, %v668, -inf
  %v677 = vrot.slane %v676, 4
  %v678 = vmax.f32 %v676, %v677
  %v679 = vrot.slane %v678, 2
  %v680 = vmax.f32 %v678, %v679
  %v681 = vrot.slane %v680, 1
  %v682 = vmax.f32 %v680, %v681
  %v683 = vsel %vm213, %v669, -inf
  %v684 = vrot.slane %v683, 4
  %v685 = vmax.f32 %v683, %v684
  %v686 = vrot.slane %v685, 2
  %v687 = vmax.f32 %v685, %v686
  %v688 = vrot.slane %v687, 1
  %v689 = vmax.f32 %v687, %v688
  %v690 = vsel %vm213, %v670, -inf
  %v691 = vrot.slane %v690, 4
  %v692 = vmax.f32 %v690, %v691
  %v693 = vrot.slane %v692, 2
  %v694 = vmax.f32 %v692, %v693
  %v695 = vrot.slane %v694, 1
  %v696 = vmax.f32 %v694, %v695
  %v697 = vsel %vm213, %v671, -inf
  %v698 = vrot.slane %v697, 4
  %v699 = vmax.f32 %v697, %v698
  %v700 = vrot.slane %v699, 2
  %v701 = vmax.f32 %v699, %v700
  %v702 = vrot.slane %v701, 1
  %v703 = vmax.f32 %v701, %v702
  %v704 = vsel %vm213, %v672, -inf
  %v705 = vrot.slane %v704, 4
  %v706 = vmax.f32 %v704, %v705
  %v707 = vrot.slane %v706, 2
  %v708 = vmax.f32 %v706, %v707
  %v709 = vrot.slane %v708, 1
  %v710 = vmax.f32 %v708, %v709
  %v711 = vsel %vm213, %v673, -inf
  %v712 = vrot.slane %v711, 4
  %v713 = vmax.f32 %v711, %v712
  %v714 = vrot.slane %v713, 2
  %v715 = vmax.f32 %v713, %v714
  %v716 = vrot.slane %v715, 1
  %v717 = vmax.f32 %v715, %v716
  %v718 = vsel %vm213, %v674, -inf
  %v719 = vrot.slane %v718, 4
  %v720 = vmax.f32 %v718, %v719
  %v721 = vrot.slane %v720, 2
  %v722 = vmax.f32 %v720, %v721
  %v723 = vrot.slane %v722, 1
  %v724 = vmax.f32 %v722, %v723
  %v725 = vsel %vm213, %v675, -inf
  %v726 = vrot.slane %v725, 4
  %v727 = vmax.f32 %v725, %v726
  %v728 = vrot.slane %v727, 2
  %v729 = vmax.f32 %v727, %v728
  %v730 = vrot.slane %v729, 1
  %v731 = vmax.f32 %v729, %v730
  %v732 = vld [vmem:[%s9] sm:$0xff]
  %v733 = vld [vmem:[%s9 + $0x8] sm:$0xff]
  %v734 = vld [vmem:[%s9 + $0x10] sm:$0xff]
  %v735 = vld [vmem:[%s9 + $0x18] sm:$0xff]
  %v736 = vld [vmem:[%s10] sm:$0x1]
  %v737 = vpack.c.bf16 %v682, %v682
  %v738 = vpack.c.bf16 %v689, %v689
  %v739 = vpack.c.bf16 %v696, %v696
  %v740 = vpack.c.bf16 %v703, %v703
  %v741 = vpack.c.bf16 %v710, %v710
  %v742 = vpack.c.bf16 %v717, %v717
  %v743 = vpack.c.bf16 %v724, %v724
  %v744 = vpack.c.bf16 %v731, %v731
  %v745 = vpack.c.bf16 %v733, %v732
  %v746 = vpack.c.bf16 %v735, %v734
  %v748 = vlaneseq
  %v749 = vshrl.u32 %v748, 7
  %v750 = vsub.s32 0, %v749
  %v751 = vrot.slane %v736, %v750
  %v761 = vunpack.c.l.b16 %v737
  %v762 = vunpack.c.l.b16 %v738
  %v763 = vunpack.c.l.b16 %v739
  %v764 = vunpack.c.l.b16 %v740
  %v765 = vunpack.c.l.b16 %v741
  %v766 = vunpack.c.l.b16 %v742
  %v767 = vunpack.c.l.b16 %v743
  %v768 = vunpack.c.l.b16 %v744
  %v769 = vsel %vm388, %v762, %v761
  %v770 = vsel %vm390, %v763, %v769
  %v771 = vsel %vm392, %v764, %v770
  %v772 = vsel %vm394, %v765, %v771
  %v773 = vsel %vm396, %v766, %v772
  %v774 = vsel %vm398, %v767, %v773
  %v775 = vsel %vm400, %v768, %v774
  %v776 = vpack.c.b16 %v775, %v775
  %v778 = vsel %vm213, %v776, 0
  %780 = vmatprep.subr.bf16.mxu0 0
  %781 = vmatpush1.bf16.msra.mxu0 0
  %782 = vmatprep.subr.bf16.mxu0 0
  %783 = vmatpush1.bf16.msra.mxu0 0
  %784 = vmatprep.subr.bf16.mxu0 0
  %785 = vmatpush1.bf16.msra.mxu0 0
  %786 = vmatprep.subr.bf16.mxu0 0
  %787 = vmatpush1.bf16.msra.mxu0 0
  %788 = vmatprep.subr.bf16.mxu0 0
  %789 = vmatpush1.bf16.msra.mxu0 0
  %790 = vmatprep.subr.bf16.mxu0 0
  %791 = vmatpush1.bf16.msra.mxu0 0
  %792 = vmatprep.subr.bf16.mxu0 0
  %793 = vmatpush1.bf16.msra.mxu0 %v746
  %794 = vmatprep.subr.bf16.mxu0 0
  %795 = vmatpush1.bf16.msra.mxu0 %v745
  %796 = vmatprep.subr.bf16.mxu0 0
  %797 = vmatpush2.bf16.msra.mxu0 0
  %798 = vmatprep.subr.bf16.mxu0 0
  %799 = vmatpush2.bf16.msra.mxu0 0
  %800 = vmatprep.subr.bf16.mxu0 0
  %801 = vmatpush2.bf16.msra.mxu0 0
  %802 = vmatprep.subr.bf16.mxu0 0
  %803 = vmatpush2.bf16.msra.mxu0 0
  %804 = vmatprep.subr.bf16.mxu0 0
  %805 = vmatpush2.bf16.msra.mxu0 0
  %806 = vmatprep.subr.bf16.mxu0 0
  %807 = vmatpush2.bf16.msra.mxu0 0
  %808 = vmatprep.subr.bf16.mxu0 0
  %809 = vmatpush2.bf16.msra.mxu0 0
  %810 = vmatprep.subr.bf16.mxu0 0
  %811 = vmatpush2.bf16.msra.mxu0 0
  %812 = vmatprep.mubr.bf16.mxu0 0
  %813 = vmatmul.mubr.bf16.gmra.mxu0 %v778
  %v814 = vpop.f32.mrf.mxu0
  %v815 = vadd.f32 %v751, %v814
  %v816 = vpop.f32.mrf.mxu0
  %v817 = vpop.f32.mrf.mxu0
  %v818 = vpop.f32.mrf.mxu0
  %819 = vdwg.mxu0
  %v820 = vmax.f32 %v815, 0.0
  %v821 = vld [vmem:[%s11] sm:$0xff]
  %v822 = vld [vmem:[%s11 + $0x8] sm:$0xff]
  %v823 = vld [vmem:[%s11 + $0x10] sm:$0xff]
  %v824 = vld [vmem:[%s11 + $0x18] sm:$0xff]
  %v825 = vld [vmem:[%s12] sm:$0x1]
  %v826 = vpack.c.bf16 %v820, %v820
  %v827 = vpack.c.bf16 %v822, %v821
  %v828 = vpack.c.bf16 %v824, %v823
  %v830 = vlaneseq
  %v831 = vshrl.u32 %v830, 7
  %v832 = vsub.s32 0, %v831
  %v833 = vrot.slane %v825, %v832
  %v836 = vsel %vm213, %v826, 0
  %838 = vmatprep.subr.bf16.mxu0 0
  %839 = vmatpush1.bf16.msra.mxu0 0
  %840 = vmatprep.subr.bf16.mxu0 0
  %841 = vmatpush1.bf16.msra.mxu0 0
  %842 = vmatprep.subr.bf16.mxu0 0
  %843 = vmatpush1.bf16.msra.mxu0 0
  %844 = vmatprep.subr.bf16.mxu0 0
  %845 = vmatpush1.bf16.msra.mxu0 0
  %846 = vmatprep.subr.bf16.mxu0 0
  %847 = vmatpush1.bf16.msra.mxu0 0
  %848 = vmatprep.subr.bf16.mxu0 0
  %849 = vmatpush1.bf16.msra.mxu0 0
  %850 = vmatprep.subr.bf16.mxu0 0
  %851 = vmatpush1.bf16.msra.mxu0 %v828
  %852 = vmatprep.subr.bf16.mxu0 0
  %853 = vmatpush1.bf16.msra.mxu0 %v827
  %854 = vmatprep.subr.bf16.mxu0 0
  %855 = vmatpush2.bf16.msra.mxu0 0
  %856 = vmatprep.subr.bf16.mxu0 0
  %857 = vmatpush2.bf16.msra.mxu0 0
  %858 = vmatprep.subr.bf16.mxu0 0
  %859 = vmatpush2.bf16.msra.mxu0 0
  %860 = vmatprep.subr.bf16.mxu0 0
  %861 = vmatpush2.bf16.msra.mxu0 0
  %862 = vmatprep.subr.bf16.mxu0 0
  %863 = vmatpush2.bf16.msra.mxu0 0
  %864 = vmatprep.subr.bf16.mxu0 0
  %865 = vmatpush2.bf16.msra.mxu0 0
  %866 = vmatprep.subr.bf16.mxu0 0
  %867 = vmatpush2.bf16.msra.mxu0 0
  %868 = vmatprep.subr.bf16.mxu0 0
  %869 = vmatpush2.bf16.msra.mxu0 0
  %870 = vmatprep.mubr.bf16.mxu0 0
  %871 = vmatmul.mubr.bf16.gmra.mxu0 %v836
  %v872 = vpop.f32.mrf.mxu0
  %v873 = vadd.f32 %v833, %v872
  %v874 = vpop.f32.mrf.mxu0
  %v875 = vpop.f32.mrf.mxu0
  %v876 = vpop.f32.mrf.mxu0
  %877 = vdwg.mxu0
  %vm878 = vcmask 7168
  %v879 = vsel %vm878, %v45, -inf
  %v880 = vrot.slane %v879, 4
  %v881 = vmax.f32 %v879, %v880
  %v882 = vrot.slane %v881, 2
  %v883 = vmax.f32 %v881, %v882
  %v884 = vrot.slane %v883, 1
  %v885 = vmax.f32 %v883, %v884
  %v886 = vsel %vm878, %v46, -inf
  %v887 = vrot.slane %v886, 4
  %v888 = vmax.f32 %v886, %v887
  %v889 = vrot.slane %v888, 2
  %v890 = vmax.f32 %v888, %v889
  %v891 = vrot.slane %v890, 1
  %v892 = vmax.f32 %v890, %v891
  %v893 = vsel %vm878, %v47, -inf
  %v894 = vrot.slane %v893, 4
  %v895 = vmax.f32 %v893, %v894
  %v896 = vrot.slane %v895, 2
  %v897 = vmax.f32 %v895, %v896
  %v898 = vrot.slane %v897, 1
  %v899 = vmax.f32 %v897, %v898
  %v900 = vsel %vm878, %v48, -inf
  %v901 = vrot.slane %v900, 4
  %v902 = vmax.f32 %v900, %v901
  %v903 = vrot.slane %v902, 2
  %v904 = vmax.f32 %v902, %v903
  %v905 = vrot.slane %v904, 1
  %v906 = vmax.f32 %v904, %v905
  %v907 = vsel %vm878, %v49, -inf
  %v908 = vrot.slane %v907, 4
  %v909 = vmax.f32 %v907, %v908
  %v910 = vrot.slane %v909, 2
  %v911 = vmax.f32 %v909, %v910
  %v912 = vrot.slane %v911, 1
  %v913 = vmax.f32 %v911, %v912
  %v914 = vsel %vm878, %v50, -inf
  %v915 = vrot.slane %v914, 4
  %v916 = vmax.f32 %v914, %v915
  %v917 = vrot.slane %v916, 2
  %v918 = vmax.f32 %v916, %v917
  %v919 = vrot.slane %v918, 1
  %v920 = vmax.f32 %v918, %v919
  %v921 = vsel %vm878, %v51, -inf
  %v922 = vrot.slane %v921, 4
  %v923 = vmax.f32 %v921, %v922
  %v924 = vrot.slane %v923, 2
  %v925 = vmax.f32 %v923, %v924
  %v926 = vrot.slane %v925, 1
  %v927 = vmax.f32 %v925, %v926
  %v928 = vsel %vm878, %v52, -inf
  %v929 = vrot.slane %v928, 4
  %v930 = vmax.f32 %v928, %v929
  %v931 = vrot.slane %v930, 2
  %v932 = vmax.f32 %v930, %v931
  %v933 = vrot.slane %v932, 1
  %v934 = vmax.f32 %v932, %v933
  %936 = vset.pattern.permute.xlu0 0
  %937 = vperm.xlu0 %936, %v885
  %v938 = vpop.permute.xlu0 %937
  %940 = vset.pattern.permute.xlu0 0
  %941 = vperm.xlu0 %940, %v892
  %v942 = vpop.permute.xlu0 %941
  %944 = vset.pattern.permute.xlu0 0
  %945 = vperm.xlu0 %944, %v899
  %v946 = vpop.permute.xlu0 %945
  %948 = vset.pattern.permute.xlu0 0
  %949 = vperm.xlu0 %948, %v906
  %v950 = vpop.permute.xlu0 %949
  %952 = vset.pattern.permute.xlu0 0
  %953 = vperm.xlu0 %952, %v913
  %v954 = vpop.permute.xlu0 %953
  %956 = vset.pattern.permute.xlu0 0
  %957 = vperm.xlu0 %956, %v920
  %v958 = vpop.permute.xlu0 %957
  %960 = vset.pattern.permute.xlu0 0
  %961 = vperm.xlu0 %960, %v927
  %v962 = vpop.permute.xlu0 %961
  %964 = vset.pattern.permute.xlu0 0
  %965 = vperm.xlu0 %964, %v934
  %v966 = vpop.permute.xlu0 %965
  %v967 = vsel %vm388, %v942, %v938
  %v968 = vsel %vm390, %v946, %v967
  %v969 = vsel %vm392, %v950, %v968
  %v970 = vsel %vm394, %v954, %v969
  %v971 = vsel %vm396, %v958, %v970
  %v972 = vsel %vm398, %v962, %v971
  %v973 = vsel %vm400, %v966, %v972
  %v975 = vmul.f32 %v873, %v973
  %976 = vst.msk [vmem:[%s13] sm:$0xff] %vm213, %v975
  // Predicated region
  $region54: #{mtr_encoder_forward.4} parent=0 // pred_check
    _
  $region55: #{mtr_encoder_forward.4} parent=0 // pred_check_branch
    %978 = sbr.rel (0) target = $region57
  $region56: #{mtr_encoder_forward.4} parent=0 // pred_region
    _
  $region57: #{mtr_encoder_forward.4} parent=0 // pred_fallthru
    _
  // Predicated region
  $region58: #{mtr_encoder_forward.4} parent=0 // pred_check
    _
  $region59: #{mtr_encoder_forward.4} parent=0 // pred_check_branch
    %980 = sbr.rel (0) target = $region61
  $region60: #{mtr_encoder_forward.4} parent=0 // pred_region
    _
  $region61: #{mtr_encoder_forward.4} parent=0 // pred_fallthru
    _

// kernel: mtr_encoder_forward.5
$region0: #{mtr_encoder_forward.5}
  #allocation0 [shape = 'u32[]', space=smem, size = 0x4, offset = 0x4, fixed_abs, tag = 'smem constant byte address 0x4 - core index']
  #allocation1 [shape = 'u32[144,128]{1,0:T(1,128)}', space=vmem, size = 0x12000, scoped, tag = 'internal scratch']
  %s0 = inlined_call_operand.vmem [shape: f32[8,8,9], index: 0, kind: input, shape index: {}]
  %s1 = inlined_call_operand.vmem [shape: f32[8,8,1], index: 1, kind: input, shape index: {}]
  %s2 = inlined_call_operand.vmem [shape: f32[9,32], index: 2, kind: input, shape index: {}]
  %s3 = inlined_call_operand.vmem [shape: f32[1,32], index: 3, kind: input, shape index: {}]
  %s4 = inlined_call_operand.vmem [shape: f32[32,32], index: 4, kind: input, shape index: {}]
  %s5 = inlined_call_operand.vmem [shape: f32[32,32], index: 5, kind: input, shape index: {}]
  %s6 = inlined_call_operand.vmem [shape: f32[1,32], index: 6, kind: input, shape index: {}]
  %s7 = inlined_call_operand.vmem [shape: f32[32,32], index: 7, kind: input, shape index: {}]
  %s8 = inlined_call_operand.vmem [shape: f32[1,32], index: 8, kind: input, shape index: {}]
  %s9 = inlined_call_operand.vmem [shape: f32[32,32], index: 9, kind: input, shape index: {}]
  %s10 = inlined_call_operand.vmem [shape: f32[1,32], index: 10, kind: input, shape index: {}]
  %s11 = inlined_call_operand.vmem [shape: f32[32,32], index: 11, kind: input, shape index: {}]
  %s12 = inlined_call_operand.vmem [shape: f32[1,32], index: 12, kind: input, shape index: {}]
  %s13 = inlined_call_operand.vmem [shape: f32[8,32], index: 13, kind: output, shape index: {}]
  %s14 = sld [smem:[#allocation0]]
  $region62: #{mtr_encoder_forward.5} parent=0
    _
  %s16 = ssub.s32 1, %s14
  %s17 = scalar_select 0, %s16, %s14
  // Predicated region
  $region2: #{mtr_encoder_forward.5} parent=0 // pred_check
    _
  $region3: #{mtr_encoder_forward.5} parent=0 // pred_check_branch
    %19 = sbr.rel (0) target = $region5
  $region4: #{mtr_encoder_forward.5} parent=0 // pred_region
    _
  $region5: #{mtr_encoder_forward.5} parent=0 // pred_fallthru
    _
  // Predicated region
  $region6: #{mtr_encoder_forward.5} parent=0 // pred_check
    _
  $region7: #{mtr_encoder_forward.5} parent=0 // pred_check_branch
    %21 = sbr.rel (0) target = $region9
  $region8: #{mtr_encoder_forward.5} parent=0 // pred_region
    _
  $region9: #{mtr_encoder_forward.5} parent=0 // pred_fallthru
    _
  // Predicated region
  $region10: #{mtr_encoder_forward.5} parent=0 // pred_check
    _
  $region11: #{mtr_encoder_forward.5} parent=0 // pred_check_branch
    %23 = sbr.rel (0) target = $region13
  $region12: #{mtr_encoder_forward.5} parent=0 // pred_region
    _
  $region13: #{mtr_encoder_forward.5} parent=0 // pred_fallthru
    _
  // Predicated region
  $region14: #{mtr_encoder_forward.5} parent=0 // pred_check
    _
  $region15: #{mtr_encoder_forward.5} parent=0 // pred_check_branch
    %25 = sbr.rel (0) target = $region17
  $region16: #{mtr_encoder_forward.5} parent=0 // pred_region
    _
  $region17: #{mtr_encoder_forward.5} parent=0 // pred_fallthru
    _
  // Predicated region
  $region18: #{mtr_encoder_forward.5} parent=0 // pred_check
    _
  $region19: #{mtr_encoder_forward.5} parent=0 // pred_check_branch
    %27 = sbr.rel (0) target = $region21
  $region20: #{mtr_encoder_forward.5} parent=0 // pred_region
    _
  $region21: #{mtr_encoder_forward.5} parent=0 // pred_fallthru
    _
  // Predicated region
  $region22: #{mtr_encoder_forward.5} parent=0 // pred_check
    _
  $region23: #{mtr_encoder_forward.5} parent=0 // pred_check_branch
    %29 = sbr.rel (0) target = $region25
  $region24: #{mtr_encoder_forward.5} parent=0 // pred_region
    _
  $region25: #{mtr_encoder_forward.5} parent=0 // pred_fallthru
    _
  // Predicated region
  $region26: #{mtr_encoder_forward.5} parent=0 // pred_check
    _
  $region27: #{mtr_encoder_forward.5} parent=0 // pred_check_branch
    %31 = sbr.rel (0) target = $region29
  $region28: #{mtr_encoder_forward.5} parent=0 // pred_region
    _
  $region29: #{mtr_encoder_forward.5} parent=0 // pred_fallthru
    _
  // Predicated region
  $region30: #{mtr_encoder_forward.5} parent=0 // pred_check
    _
  $region31: #{mtr_encoder_forward.5} parent=0 // pred_check_branch
    %33 = sbr.rel (0) target = $region33
  $region32: #{mtr_encoder_forward.5} parent=0 // pred_region
    _
  $region33: #{mtr_encoder_forward.5} parent=0 // pred_fallthru
    _
  // Predicated region
  $region34: #{mtr_encoder_forward.5} parent=0 // pred_check
    _
  $region35: #{mtr_encoder_forward.5} parent=0 // pred_check_branch
    %35 = sbr.rel (0) target = $region37
  $region36: #{mtr_encoder_forward.5} parent=0 // pred_region
    _
  $region37: #{mtr_encoder_forward.5} parent=0 // pred_fallthru
    _
  // Predicated region
  $region38: #{mtr_encoder_forward.5} parent=0 // pred_check
    _
  $region39: #{mtr_encoder_forward.5} parent=0 // pred_check_branch
    %37 = sbr.rel (0) target = $region41
  $region40: #{mtr_encoder_forward.5} parent=0 // pred_region
    _
  $region41: #{mtr_encoder_forward.5} parent=0 // pred_fallthru
    _
  // Predicated region
  $region42: #{mtr_encoder_forward.5} parent=0 // pred_check
    _
  $region43: #{mtr_encoder_forward.5} parent=0 // pred_check_branch
    %39 = sbr.rel (0) target = $region45
  $region44: #{mtr_encoder_forward.5} parent=0 // pred_region
    _
  $region45: #{mtr_encoder_forward.5} parent=0 // pred_fallthru
    _
  // Predicated region
  $region46: #{mtr_encoder_forward.5} parent=0 // pred_check
    _
  $region47: #{mtr_encoder_forward.5} parent=0 // pred_check_branch
    %41 = sbr.rel (0) target = $region49
  $region48: #{mtr_encoder_forward.5} parent=0 // pred_region
    _
  $region49: #{mtr_encoder_forward.5} parent=0 // pred_fallthru
    _
  // Predicated region
  $region50: #{mtr_encoder_forward.5} parent=0 // pred_check
    _
  $region51: #{mtr_encoder_forward.5} parent=0 // pred_check_branch
    %43 = sbr.rel (0) target = $region53
  $region52: #{mtr_encoder_forward.5} parent=0 // pred_region
    _
  $region53: #{mtr_encoder_forward.5} parent=0 // pred_fallthru
    _
  %v45 = vld [vmem:[%s1] sm:$0xff]
  %v46 = vld [vmem:[%s1 + $0x8] sm:$0xff]
  %v47 = vld [vmem:[%s1 + $0x10] sm:$0xff]
  %v48 = vld [vmem:[%s1 + $0x18] sm:$0xff]
  %v49 = vld [vmem:[%s1 + $0x20] sm:$0xff]
  %v50 = vld [vmem:[%s1 + $0x28] sm:$0xff]
  %v51 = vld [vmem:[%s1 + $0x30] sm:$0xff]
  %v52 = vld [vmem:[%s1 + $0x38] sm:$0xff]
  %v53 = vld [vmem:[%s0] sm:$0xff]
  %v54 = vld [vmem:[%s0 + $0x8] sm:$0xff]
  %v55 = vld [vmem:[%s0 + $0x10] sm:$0xff]
  %v56 = vld [vmem:[%s0 + $0x18] sm:$0xff]
  %v57 = vld [vmem:[%s0 + $0x20] sm:$0xff]
  %v58 = vld [vmem:[%s0 + $0x28] sm:$0xff]
  %v59 = vld [vmem:[%s0 + $0x30] sm:$0xff]
  %v60 = vld [vmem:[%s0 + $0x38] sm:$0xff]
  %v61 = vld [vmem:[%s2] sm:$0xff]
  %v62 = vld [vmem:[%s2 + $0x8] sm:$0x1]
  %v63 = vld [vmem:[%s3] sm:$0x1]
  %v64 = vpack.c.bf16 %v54, %v53
  %v65 = vpack.c.bf16 %v56, %v55
  %v66 = vpack.c.bf16 %v58, %v57
  %v67 = vpack.c.bf16 %v60, %v59
  %v68 = vpack.c.bf16 %v62, %v61
  %v70 = vlaneseq
  %v71 = vshrl.u32 %v70, 7
  %v72 = vsub.s32 0, %v71
  %v73 = vrot.slane %v63, %v72
  %vm75 = vcmask 72704
  %v77 = vsel %vm75, %v64, 0
  %v80 = vsel %vm75, %v65, 0
  %v83 = vsel %vm75, %v66, 0
  %v86 = vsel %vm75, %v67, 0
  %vm88 = vcmask 1043456
  %vm89 = vcmask 1044480
  %v90 = vsel %vm88, 4294967295, 65535
  %v91 = vsel %vm89, %v90, 0
  %v93 = vand.u32 %v68, %v91
  %95 = vmatprep.subr.bf16.mxu0 0
  %96 = vmatpush1.bf16.msra.mxu0 0
  %97 = vmatprep.subr.bf16.mxu0 0
  %98 = vmatpush1.bf16.msra.mxu0 0
  %99 = vmatprep.subr.bf16.mxu0 0
  %100 = vmatpush1.bf16.msra.mxu0 0
  %101 = vmatprep.subr.bf16.mxu0 0
  %102 = vmatpush1.bf16.msra.mxu0 0
  %103 = vmatprep.subr.bf16.mxu0 0
  %104 = vmatpush1.bf16.msra.mxu0 0
  %105 = vmatprep.subr.bf16.mxu0 0
  %106 = vmatpush1.bf16.msra.mxu0 0
  %107 = vmatprep.subr.bf16.mxu0 0
  %108 = vmatpush1.bf16.msra.mxu0 0
  %109 = vmatprep.subr.bf16.mxu0 0
  %110 = vmatpush1.bf16.msra.mxu0 %v93
  %111 = vmatprep.subr.bf16.mxu0 0
  %112 = vmatpush2.bf16.msra.mxu0 0
  %113 = vmatprep.subr.bf16.mxu0 0
  %114 = vmatpush2.bf16.msra.mxu0 0
  %115 = vmatprep.subr.bf16.mxu0 0
  %116 = vmatpush2.bf16.msra.mxu0 0
  %117 = vmatprep.subr.bf16.mxu0 0
  %118 = vmatpush2.bf16.msra.mxu0 0
  %119 = vmatprep.subr.bf16.mxu0 0
  %120 = vmatpush2.bf16.msra.mxu0 0
  %121 = vmatprep.subr.bf16.mxu0 0
  %122 = vmatpush2.bf16.msra.mxu0 0
  %123 = vmatprep.subr.bf16.mxu0 0
  %124 = vmatpush2.bf16.msra.mxu0 0
  %125 = vmatprep.subr.bf16.mxu0 0
  %126 = vmatpush2.bf16.msra.mxu0 0
  %127 = vmatprep.mubr.bf16.mxu0 0
  %128 = vmatmul.mubr.bf16.gmra.mxu0 %v77
  %v129 = vpop.f32.mrf.mxu0
  %v130 = vadd.f32 %v73, %v129
  %v131 = vpop.f32.mrf.mxu0
  %v132 = vpop.f32.mrf.mxu0
  %v133 = vadd.f32 %v73, %v132
  %v134 = vpop.f32.mrf.mxu0
  %135 = vmatprep.mubr.bf16.mxu0 0
  %136 = vmatmul.mubr.bf16.gmra.mxu0 %v80
  %v137 = vpop.f32.mrf.mxu0
  %v138 = vadd.f32 %v73, %v137
  %v139 = vpop.f32.mrf.mxu0
  %v140 = vpop.f32.mrf.mxu0
  %v141 = vadd.f32 %v73, %v140
  %v142 = vpop.f32.mrf.mxu0
  %143 = vmatprep.mubr.bf16.mxu0 0
  %144 = vmatmul.mubr.bf16.gmra.mxu0 %v83
  %v145 = vpop.f32.mrf.mxu0
  %v146 = vadd.f32 %v73, %v145
  %v147 = vpop.f32.mrf.mxu0
  %v148 = vpop.f32.mrf.mxu0
  %v149 = vadd.f32 %v73, %v148
  %v150 = vpop.f32.mrf.mxu0
  %151 = vmatprep.mubr.bf16.mxu0 0
  %152 = vmatmul.mubr.bf16.gmra.mxu0 %v86
  %v153 = vpop.f32.mrf.mxu0
  %v154 = vadd.f32 %v73, %v153
  %v155 = vpop.f32.mrf.mxu0
  %v156 = vpop.f32.mrf.mxu0
  %v157 = vadd.f32 %v73, %v156
  %v158 = vpop.f32.mrf.mxu0
  %159 = vdwg.mxu0
  %v160 = vmax.f32 %v130, 0.0
  %v161 = vmax.f32 %v133, 0.0
  %v162 = vmax.f32 %v138, 0.0
  %v163 = vmax.f32 %v141, 0.0
  %v164 = vmax.f32 %v146, 0.0
  %v165 = vmax.f32 %v149, 0.0
  %v166 = vmax.f32 %v154, 0.0
  %v167 = vmax.f32 %v157, 0.0
  %169 = vset.pattern.permute.xlu0 0
  %170 = vperm.xlu0 %169, %v45
  %v171 = vpop.permute.xlu0 %170
  %174 = vset.pattern.permute.xlu0 0
  %175 = vperm.xlu0 %174, %v46
  %v176 = vpop.permute.xlu0 %175
  %179 = vset.pattern.permute.xlu0 0
  %180 = vperm.xlu0 %179, %v47
  %v181 = vpop.permute.xlu0 %180
  %184 = vset.pattern.permute.xlu0 0
  %185 = vperm.xlu0 %184, %v48
  %v186 = vpop.permute.xlu0 %185
  %189 = vset.pattern.permute.xlu0 0
  %190 = vperm.xlu0 %189, %v49
  %v191 = vpop.permute.xlu0 %190
  %194 = vset.pattern.permute.xlu0 0
  %195 = vperm.xlu0 %194, %v50
  %v196 = vpop.permute.xlu0 %195
  %199 = vset.pattern.permute.xlu0 0
  %200 = vperm.xlu0 %199, %v51
  %v201 = vpop.permute.xlu0 %200
  %204 = vset.pattern.permute.xlu0 0
  %205 = vperm.xlu0 %204, %v52
  %v206 = vpop.permute.xlu0 %205
  %v208 = vmul.f32 %v160, %v171
  %v209 = vmul.f32 %v161, %v176
  %v210 = vmul.f32 %v162, %v181
  %v211 = vmul.f32 %v163, %v186
  %v212 = vmul.f32 %v164, %v191
  %v213 = vmul.f32 %v165, %v196
  %v214 = vmul.f32 %v166, %v201
  %v215 = vmul.f32 %v167, %v206
  %vm216 = vcmask 261120
  %v217 = vsel %vm216, %v208, -inf
  %v218 = vrot.slane %v217, 4
  %v219 = vmax.f32 %v217, %v218
  %v220 = vrot.slane %v219, 2
  %v221 = vmax.f32 %v219, %v220
  %v222 = vrot.slane %v221, 1
  %v223 = vmax.f32 %v221, %v222
  %v224 = vsel %vm216, %v209, -inf
  %v225 = vrot.slane %v224, 4
  %v226 = vmax.f32 %v224, %v225
  %v227 = vrot.slane %v226, 2
  %v228 = vmax.f32 %v226, %v227
  %v229 = vrot.slane %v228, 1
  %v230 = vmax.f32 %v228, %v229
  %v231 = vsel %vm216, %v210, -inf
  %v232 = vrot.slane %v231, 4
  %v233 = vmax.f32 %v231, %v232
  %v234 = vrot.slane %v233, 2
  %v235 = vmax.f32 %v233, %v234
  %v236 = vrot.slane %v235, 1
  %v237 = vmax.f32 %v235, %v236
  %v238 = vsel %vm216, %v211, -inf
  %v239 = vrot.slane %v238, 4
  %v240 = vmax.f32 %v238, %v239
  %v241 = vrot.slane %v240, 2
  %v242 = vmax.f32 %v240, %v241
  %v243 = vrot.slane %v242, 1
  %v244 = vmax.f32 %v242, %v243
  %v245 = vsel %vm216, %v212, -inf
  %v246 = vrot.slane %v245, 4
  %v247 = vmax.f32 %v245, %v246
  %v248 = vrot.slane %v247, 2
  %v249 = vmax.f32 %v247, %v248
  %v250 = vrot.slane %v249, 1
  %v251 = vmax.f32 %v249, %v250
  %v252 = vsel %vm216, %v213, -inf
  %v253 = vrot.slane %v252, 4
  %v254 = vmax.f32 %v252, %v253
  %v255 = vrot.slane %v254, 2
  %v256 = vmax.f32 %v254, %v255
  %v257 = vrot.slane %v256, 1
  %v258 = vmax.f32 %v256, %v257
  %v259 = vsel %vm216, %v214, -inf
  %v260 = vrot.slane %v259, 4
  %v261 = vmax.f32 %v259, %v260
  %v262 = vrot.slane %v261, 2
  %v263 = vmax.f32 %v261, %v262
  %v264 = vrot.slane %v263, 1
  %v265 = vmax.f32 %v263, %v264
  %v266 = vsel %vm216, %v215, -inf
  %v267 = vrot.slane %v266, 4
  %v268 = vmax.f32 %v266, %v267
  %v269 = vrot.slane %v268, 2
  %v270 = vmax.f32 %v268, %v269
  %v271 = vrot.slane %v270, 1
  %v272 = vmax.f32 %v270, %v271
  %v273 = vld [vmem:[%s4] sm:$0xff]
  %v274 = vld [vmem:[%s4 + $0x8] sm:$0xff]
  %v275 = vld [vmem:[%s4 + $0x10] sm:$0xff]
  %v276 = vld [vmem:[%s4 + $0x18] sm:$0xff]
  %v277 = vld [vmem:[%s5] sm:$0xff]
  %v278 = vld [vmem:[%s5 + $0x8] sm:$0xff]
  %v279 = vld [vmem:[%s5 + $0x10] sm:$0xff]
  %v280 = vld [vmem:[%s5 + $0x18] sm:$0xff]
  %v281 = vld [vmem:[%s6] sm:$0x1]
  %v282 = vpack.c.bf16 %v209, %v208
  %v283 = vpack.c.bf16 %v211, %v210
  %v284 = vpack.c.bf16 %v213, %v212
  %v285 = vpack.c.bf16 %v215, %v214
  %v286 = vpack.c.bf16 %v274, %v273
  %v287 = vpack.c.bf16 %v276, %v275
  %v289 = vsel %vm216, %v282, 0
  %v292 = vsel %vm216, %v283, 0
  %v295 = vsel %vm216, %v284, 0
  %v298 = vsel %vm216, %v285, 0
  %300 = vmatprep.subr.bf16.mxu0 0
  %301 = vmatpush1.bf16.msra.mxu0 0
  %302 = vmatprep.subr.bf16.mxu0 0
  %303 = vmatpush1.bf16.msra.mxu0 0
  %304 = vmatprep.subr.bf16.mxu0 0
  %305 = vmatpush1.bf16.msra.mxu0 0
  %306 = vmatprep.subr.bf16.mxu0 0
  %307 = vmatpush1.bf16.msra.mxu0 0
  %308 = vmatprep.subr.bf16.mxu0 0
  %309 = vmatpush1.bf16.msra.mxu0 0
  %310 = vmatprep.subr.bf16.mxu0 0
  %311 = vmatpush1.bf16.msra.mxu0 0
  %312 = vmatprep.subr.bf16.mxu0 0
  %313 = vmatpush1.bf16.msra.mxu0 %v287
  %314 = vmatprep.subr.bf16.mxu0 0
  %315 = vmatpush1.bf16.msra.mxu0 %v286
  %316 = vmatprep.subr.bf16.mxu0 0
  %317 = vmatpush2.bf16.msra.mxu0 0
  %318 = vmatprep.subr.bf16.mxu0 0
  %319 = vmatpush2.bf16.msra.mxu0 0
  %320 = vmatprep.subr.bf16.mxu0 0
  %321 = vmatpush2.bf16.msra.mxu0 0
  %322 = vmatprep.subr.bf16.mxu0 0
  %323 = vmatpush2.bf16.msra.mxu0 0
  %324 = vmatprep.subr.bf16.mxu0 0
  %325 = vmatpush2.bf16.msra.mxu0 0
  %326 = vmatprep.subr.bf16.mxu0 0
  %327 = vmatpush2.bf16.msra.mxu0 0
  %328 = vmatprep.subr.bf16.mxu0 0
  %329 = vmatpush2.bf16.msra.mxu0 0
  %330 = vmatprep.subr.bf16.mxu0 0
  %331 = vmatpush2.bf16.msra.mxu0 0
  %332 = vmatprep.mubr.bf16.mxu0 0
  %333 = vmatmul.mubr.bf16.gmra.mxu0 %v289
  %v334 = vpop.f32.mrf.mxu0
  %v335 = vadd.f32 0.0, %v334
  %v336 = vpop.f32.mrf.mxu0
  %v337 = vpop.f32.mrf.mxu0
  %v338 = vadd.f32 0.0, %v337
  %v339 = vpop.f32.mrf.mxu0
  %340 = vmatprep.mubr.bf16.mxu0 0
  %341 = vmatmul.mubr.bf16.gmra.mxu0 %v292
  %v342 = vpop.f32.mrf.mxu0
  %v343 = vadd.f32 0.0, %v342
  %v344 = vpop.f32.mrf.mxu0
  %v345 = vpop.f32.mrf.mxu0
  %v346 = vadd.f32 0.0, %v345
  %v347 = vpop.f32.mrf.mxu0
  %348 = vmatprep.mubr.bf16.mxu0 0
  %349 = vmatmul.mubr.bf16.gmra.mxu0 %v295
  %v350 = vpop.f32.mrf.mxu0
  %v351 = vadd.f32 0.0, %v350
  %v352 = vpop.f32.mrf.mxu0
  %v353 = vpop.f32.mrf.mxu0
  %v354 = vadd.f32 0.0, %v353
  %v355 = vpop.f32.mrf.mxu0
  %356 = vmatprep.mubr.bf16.mxu0 0
  %357 = vmatmul.mubr.bf16.gmra.mxu0 %v298
  %v358 = vpop.f32.mrf.mxu0
  %v359 = vadd.f32 0.0, %v358
  %v360 = vpop.f32.mrf.mxu0
  %v361 = vpop.f32.mrf.mxu0
  %v362 = vadd.f32 0.0, %v361
  %v363 = vpop.f32.mrf.mxu0
  %364 = vdwg.mxu0
  %v365 = vpack.c.bf16 %v223, %v223
  %v366 = vpack.c.bf16 %v230, %v230
  %v367 = vpack.c.bf16 %v237, %v237
  %v368 = vpack.c.bf16 %v244, %v244
  %v369 = vpack.c.bf16 %v251, %v251
  %v370 = vpack.c.bf16 %v258, %v258
  %v371 = vpack.c.bf16 %v265, %v265
  %v372 = vpack.c.bf16 %v272, %v272
  %v373 = vpack.c.bf16 %v278, %v277
  %v374 = vpack.c.bf16 %v280, %v279
  %v383 = vunpack.c.l.b16 %v365
  %v384 = vunpack.c.l.b16 %v366
  %v385 = vunpack.c.l.b16 %v367
  %v386 = vunpack.c.l.b16 %v368
  %v387 = vunpack.c.l.b16 %v369
  %v388 = vunpack.c.l.b16 %v370
  %v389 = vunpack.c.l.b16 %v371
  %v390 = vunpack.c.l.b16 %v372
  %vm391 = vcmask 1041409
  %v392 = vsel %vm391, %v384, %v383
  %vm393 = vcmask 1042434
  %v394 = vsel %vm393, %v385, %v392
  %vm395 = vcmask 1043459
  %v396 = vsel %vm395, %v386, %v394
  %vm397 = vcmask 1044484
  %v398 = vsel %vm397, %v387, %v396
  %vm399 = vcmask 1045509
  %v400 = vsel %vm399, %v388, %v398
  %vm401 = vcmask 1046534
  %v402 = vsel %vm401, %v389, %v400
  %vm403 = vcmask 1047559
  %v404 = vsel %vm403, %v390, %v402
  %v405 = vpack.c.b16 %v404, %v404
  %v407 = vsel %vm216, %v405, 0
  %409 = vmatprep.subr.bf16.mxu0 0
  %410 = vmatpush1.bf16.msra.mxu0 0
  %411 = vmatprep.subr.bf16.mxu0 0
  %412 = vmatpush1.bf16.msra.mxu0 0
  %413 = vmatprep.subr.bf16.mxu0 0
  %414 = vmatpush1.bf16.msra.mxu0 0
  %415 = vmatprep.subr.bf16.mxu0 0
  %416 = vmatpush1.bf16.msra.mxu0 0
  %417 = vmatprep.subr.bf16.mxu0 0
  %418 = vmatpush1.bf16.msra.mxu0 0
  %419 = vmatprep.subr.bf16.mxu0 0
  %420 = vmatpush1.bf16.msra.mxu0 0
  %421 = vmatprep.subr.bf16.mxu0 0
  %422 = vmatpush1.bf16.msra.mxu0 %v374
  %423 = vmatprep.subr.bf16.mxu0 0
  %424 = vmatpush1.bf16.msra.mxu0 %v373
  %425 = vmatprep.subr.bf16.mxu0 0
  %426 = vmatpush2.bf16.msra.mxu0 0
  %427 = vmatprep.subr.bf16.mxu0 0
  %428 = vmatpush2.bf16.msra.mxu0 0
  %429 = vmatprep.subr.bf16.mxu0 0
  %430 = vmatpush2.bf16.msra.mxu0 0
  %431 = vmatprep.subr.bf16.mxu0 0
  %432 = vmatpush2.bf16.msra.mxu0 0
  %433 = vmatprep.subr.bf16.mxu0 0
  %434 = vmatpush2.bf16.msra.mxu0 0
  %435 = vmatprep.subr.bf16.mxu0 0
  %436 = vmatpush2.bf16.msra.mxu0 0
  %437 = vmatprep.subr.bf16.mxu0 0
  %438 = vmatpush2.bf16.msra.mxu0 0
  %439 = vmatprep.subr.bf16.mxu0 0
  %440 = vmatpush2.bf16.msra.mxu0 0
  %441 = vmatprep.mubr.bf16.mxu0 0
  %442 = vmatmul.mubr.bf16.gmra.mxu0 %v407
  %v443 = vpop.f32.mrf.mxu0
  %v444 = vadd.f32 0.0, %v443
  %v445 = vpop.f32.mrf.mxu0
  %v446 = vpop.f32.mrf.mxu0
  %v447 = vpop.f32.mrf.mxu0
  %448 = vdwg.mxu0
  %v450 = vcombine.high %v444, %v444
  %v452 = vunpack.c.l.s4 1966171168
  %v453 = vunpack.c.0.s8 %v452
  %v454 = vlaneseq
  %v455 = vshrl.u32 %v454, 7
  %v456 = vsub.s32 %v453, %v455
  %v457 = vrot.slane %v444, %v456
  %v459 = vunpack.c.l.s4 1966171168
  %v460 = vunpack.c.0.s8 %v459
  %v461 = vlaneseq
  %v462 = vshrl.u32 %v461, 7
  %v463 = vsub.s32 %v460, %v462
  %v464 = vrot.slane %v450, %v463
  %v465 = vcombine.high %v457, %v457
  %v466 = vcombine.high %v464, %v464
  %v468 = vunpack.c.l.s4 1966171168
  %v469 = vunpack.c.0.s8 %v468
  %v470 = vlaneseq
  %v471 = vshrl.u32 %v470, 7
  %v472 = vsub.s32 %v469, %v471
  %v473 = vrot.slane %v457, %v472
  %v475 = vunpack.c.l.s4 1966171168
  %v476 = vunpack.c.0.s8 %v475
  %v477 = vlaneseq
  %v478 = vshrl.u32 %v477, 7
  %v479 = vsub.s32 %v476, %v478
  %v480 = vrot.slane %v464, %v479
  %v482 = vunpack.c.l.s4 1966171168
  %v483 = vunpack.c.0.s8 %v482
  %v484 = vlaneseq
  %v485 = vshrl.u32 %v484, 7
  %v486 = vsub.s32 %v483, %v485
  %v487 = vrot.slane %v465, %v486
  %v489 = vunpack.c.l.s4 1966171168
  %v490 = vunpack.c.0.s8 %v489
  %v491 = vlaneseq
  %v492 = vshrl.u32 %v491, 7
  %v493 = vsub.s32 %v490, %v492
  %v494 = vrot.slane %v466, %v493
  %v495 = vcombine.high %v473, %v473
  %v496 = vcombine.high %v480, %v480
  %v497 = vcombine.high %v487, %v487
  %v498 = vcombine.high %v494, %v494
  %v499 = vlaneseq
  %v500 = vshrl.u32 %v499, 7
  %v501 = vsub.s32 0, %v500
  %v502 = vrot.slane %v473, %v501
  %v503 = vlaneseq
  %v504 = vshrl.u32 %v503, 7
  %v505 = vsub.s32 0, %v504
  %v506 = vrot.slane %v487, %v505
  %v507 = vlaneseq
  %v508 = vshrl.u32 %v507, 7
  %v509 = vsub.s32 0, %v508
  %v510 = vrot.slane %v495, %v509
  %v511 = vlaneseq
  %v512 = vshrl.u32 %v511, 7
  %v513 = vsub.s32 0, %v512
  %v514 = vrot.slane %v497, %v513
  %v515 = vlaneseq
  %v516 = vshrl.u32 %v515, 7
  %v517 = vsub.s32 0, %v516
  %v518 = vrot.slane %v480, %v517
  %v519 = vlaneseq
  %v520 = vshrl.u32 %v519, 7
  %v521 = vsub.s32 0, %v520
  %v522 = vrot.slane %v494, %v521
  %v523 = vlaneseq
  %v524 = vshrl.u32 %v523, 7
  %v525 = vsub.s32 0, %v524
  %v526 = vrot.slane %v496, %v525
  %v527 = vlaneseq
  %v528 = vshrl.u32 %v527, 7
  %v529 = vsub.s32 0, %v528
  %v530 = vrot.slane %v498, %v529
  %v539 = vadd.f32 %v335, %v502
  %v540 = vadd.f32 %v338, %v506
  %v541 = vadd.f32 %v343, %v510
  %v542 = vadd.f32 %v346, %v514
  %v543 = vadd.f32 %v351, %v518
  %v544 = vadd.f32 %v354, %v522
  %v545 = vadd.f32 %v359, %v526
  %v546 = vadd.f32 %v362, %v530
  %v548 = vlaneseq
  %v549 = vshrl.u32 %v548, 7
  %v550 = vsub.s32 0, %v549
  %v551 = vrot.slane %v281, %v550
  %v553 = vadd.f32 %v539, %v551
  %v554 = vadd.f32 %v540, %v551
  %v555 = vadd.f32 %v541, %v551
  %v556 = vadd.f32 %v542, %v551
  %v557 = vadd.f32 %v543, %v551
  %v558 = vadd.f32 %v544, %v551
  %v559 = vadd.f32 %v545, %v551
  %v560 = vadd.f32 %v546, %v551
  %v561 = vmax.f32 %v553, 0.0
  %v562 = vmax.f32 %v554, 0.0
  %v563 = vmax.f32 %v555, 0.0
  %v564 = vmax.f32 %v556, 0.0
  %v565 = vmax.f32 %v557, 0.0
  %v566 = vmax.f32 %v558, 0.0
  %v567 = vmax.f32 %v559, 0.0
  %v568 = vmax.f32 %v560, 0.0
  %v569 = vld [vmem:[%s7] sm:$0xff]
  %v570 = vld [vmem:[%s7 + $0x8] sm:$0xff]
  %v571 = vld [vmem:[%s7 + $0x10] sm:$0xff]
  %v572 = vld [vmem:[%s7 + $0x18] sm:$0xff]
  %v573 = vld [vmem:[%s8] sm:$0x1]
  %v574 = vpack.c.bf16 %v562, %v561
  %v575 = vpack.c.bf16 %v564, %v563
  %v576 = vpack.c.bf16 %v566, %v565
  %v577 = vpack.c.bf16 %v568, %v567
  %v578 = vpack.c.bf16 %v570, %v569
  %v579 = vpack.c.bf16 %v572, %v571
  %v581 = vlaneseq
  %v582 = vshrl.u32 %v581, 7
  %v583 = vsub.s32 0, %v582
  %v584 = vrot.slane %v573, %v583
  %v587 = vsel %vm216, %v574, 0
  %v590 = vsel %vm216, %v575, 0
  %v593 = vsel %vm216, %v576, 0
  %v596 = vsel %vm216, %v577, 0
  %598 = vmatprep.subr.bf16.mxu0 0
  %599 = vmatpush1.bf16.msra.mxu0 0
  %600 = vmatprep.subr.bf16.mxu0 0
  %601 = vmatpush1.bf16.msra.mxu0 0
  %602 = vmatprep.subr.bf16.mxu0 0
  %603 = vmatpush1.bf16.msra.mxu0 0
  %604 = vmatprep.subr.bf16.mxu0 0
  %605 = vmatpush1.bf16.msra.mxu0 0
  %606 = vmatprep.subr.bf16.mxu0 0
  %607 = vmatpush1.bf16.msra.mxu0 0
  %608 = vmatprep.subr.bf16.mxu0 0
  %609 = vmatpush1.bf16.msra.mxu0 0
  %610 = vmatprep.subr.bf16.mxu0 0
  %611 = vmatpush1.bf16.msra.mxu0 %v579
  %612 = vmatprep.subr.bf16.mxu0 0
  %613 = vmatpush1.bf16.msra.mxu0 %v578
  %614 = vmatprep.subr.bf16.mxu0 0
  %615 = vmatpush2.bf16.msra.mxu0 0
  %616 = vmatprep.subr.bf16.mxu0 0
  %617 = vmatpush2.bf16.msra.mxu0 0
  %618 = vmatprep.subr.bf16.mxu0 0
  %619 = vmatpush2.bf16.msra.mxu0 0
  %620 = vmatprep.subr.bf16.mxu0 0
  %621 = vmatpush2.bf16.msra.mxu0 0
  %622 = vmatprep.subr.bf16.mxu0 0
  %623 = vmatpush2.bf16.msra.mxu0 0
  %624 = vmatprep.subr.bf16.mxu0 0
  %625 = vmatpush2.bf16.msra.mxu0 0
  %626 = vmatprep.subr.bf16.mxu0 0
  %627 = vmatpush2.bf16.msra.mxu0 0
  %628 = vmatprep.subr.bf16.mxu0 0
  %629 = vmatpush2.bf16.msra.mxu0 0
  %630 = vmatprep.mubr.bf16.mxu0 0
  %631 = vmatmul.mubr.bf16.gmra.mxu0 %v587
  %v632 = vpop.f32.mrf.mxu0
  %v633 = vadd.f32 %v584, %v632
  %v634 = vpop.f32.mrf.mxu0
  %v635 = vpop.f32.mrf.mxu0
  %v636 = vadd.f32 %v584, %v635
  %v637 = vpop.f32.mrf.mxu0
  %638 = vmatprep.mubr.bf16.mxu0 0
  %639 = vmatmul.mubr.bf16.gmra.mxu0 %v590
  %v640 = vpop.f32.mrf.mxu0
  %v641 = vadd.f32 %v584, %v640
  %v642 = vpop.f32.mrf.mxu0
  %v643 = vpop.f32.mrf.mxu0
  %v644 = vadd.f32 %v584, %v643
  %v645 = vpop.f32.mrf.mxu0
  %646 = vmatprep.mubr.bf16.mxu0 0
  %647 = vmatmul.mubr.bf16.gmra.mxu0 %v593
  %v648 = vpop.f32.mrf.mxu0
  %v649 = vadd.f32 %v584, %v648
  %v650 = vpop.f32.mrf.mxu0
  %v651 = vpop.f32.mrf.mxu0
  %v652 = vadd.f32 %v584, %v651
  %v653 = vpop.f32.mrf.mxu0
  %654 = vmatprep.mubr.bf16.mxu0 0
  %655 = vmatmul.mubr.bf16.gmra.mxu0 %v596
  %v656 = vpop.f32.mrf.mxu0
  %v657 = vadd.f32 %v584, %v656
  %v658 = vpop.f32.mrf.mxu0
  %v659 = vpop.f32.mrf.mxu0
  %v660 = vadd.f32 %v584, %v659
  %v661 = vpop.f32.mrf.mxu0
  %662 = vdwg.mxu0
  %v663 = vmax.f32 %v633, 0.0
  %v664 = vmax.f32 %v636, 0.0
  %v665 = vmax.f32 %v641, 0.0
  %v666 = vmax.f32 %v644, 0.0
  %v667 = vmax.f32 %v649, 0.0
  %v668 = vmax.f32 %v652, 0.0
  %v669 = vmax.f32 %v657, 0.0
  %v670 = vmax.f32 %v660, 0.0
  %v671 = vmul.f32 %v663, %v171
  %v672 = vmul.f32 %v664, %v176
  %v673 = vmul.f32 %v665, %v181
  %v674 = vmul.f32 %v666, %v186
  %v675 = vmul.f32 %v667, %v191
  %v676 = vmul.f32 %v668, %v196
  %v677 = vmul.f32 %v669, %v201
  %v678 = vmul.f32 %v670, %v206
  %v679 = vsel %vm216, %v671, -inf
  %v680 = vrot.slane %v679, 4
  %v681 = vmax.f32 %v679, %v680
  %v682 = vrot.slane %v681, 2
  %v683 = vmax.f32 %v681, %v682
  %v684 = vrot.slane %v683, 1
  %v685 = vmax.f32 %v683, %v684
  %v686 = vsel %vm216, %v672, -inf
  %v687 = vrot.slane %v686, 4
  %v688 = vmax.f32 %v686, %v687
  %v689 = vrot.slane %v688, 2
  %v690 = vmax.f32 %v688, %v689
  %v691 = vrot.slane %v690, 1
  %v692 = vmax.f32 %v690, %v691
  %v693 = vsel %vm216, %v673, -inf
  %v694 = vrot.slane %v693, 4
  %v695 = vmax.f32 %v693, %v694
  %v696 = vrot.slane %v695, 2
  %v697 = vmax.f32 %v695, %v696
  %v698 = vrot.slane %v697, 1
  %v699 = vmax.f32 %v697, %v698
  %v700 = vsel %vm216, %v674, -inf
  %v701 = vrot.slane %v700, 4
  %v702 = vmax.f32 %v700, %v701
  %v703 = vrot.slane %v702, 2
  %v704 = vmax.f32 %v702, %v703
  %v705 = vrot.slane %v704, 1
  %v706 = vmax.f32 %v704, %v705
  %v707 = vsel %vm216, %v675, -inf
  %v708 = vrot.slane %v707, 4
  %v709 = vmax.f32 %v707, %v708
  %v710 = vrot.slane %v709, 2
  %v711 = vmax.f32 %v709, %v710
  %v712 = vrot.slane %v711, 1
  %v713 = vmax.f32 %v711, %v712
  %v714 = vsel %vm216, %v676, -inf
  %v715 = vrot.slane %v714, 4
  %v716 = vmax.f32 %v714, %v715
  %v717 = vrot.slane %v716, 2
  %v718 = vmax.f32 %v716, %v717
  %v719 = vrot.slane %v718, 1
  %v720 = vmax.f32 %v718, %v719
  %v721 = vsel %vm216, %v677, -inf
  %v722 = vrot.slane %v721, 4
  %v723 = vmax.f32 %v721, %v722
  %v724 = vrot.slane %v723, 2
  %v725 = vmax.f32 %v723, %v724
  %v726 = vrot.slane %v725, 1
  %v727 = vmax.f32 %v725, %v726
  %v728 = vsel %vm216, %v678, -inf
  %v729 = vrot.slane %v728, 4
  %v730 = vmax.f32 %v728, %v729
  %v731 = vrot.slane %v730, 2
  %v732 = vmax.f32 %v730, %v731
  %v733 = vrot.slane %v732, 1
  %v734 = vmax.f32 %v732, %v733
  %v735 = vld [vmem:[%s9] sm:$0xff]
  %v736 = vld [vmem:[%s9 + $0x8] sm:$0xff]
  %v737 = vld [vmem:[%s9 + $0x10] sm:$0xff]
  %v738 = vld [vmem:[%s9 + $0x18] sm:$0xff]
  %v739 = vld [vmem:[%s10] sm:$0x1]
  %v740 = vpack.c.bf16 %v685, %v685
  %v741 = vpack.c.bf16 %v692, %v692
  %v742 = vpack.c.bf16 %v699, %v699
  %v743 = vpack.c.bf16 %v706, %v706
  %v744 = vpack.c.bf16 %v713, %v713
  %v745 = vpack.c.bf16 %v720, %v720
  %v746 = vpack.c.bf16 %v727, %v727
  %v747 = vpack.c.bf16 %v734, %v734
  %v748 = vpack.c.bf16 %v736, %v735
  %v749 = vpack.c.bf16 %v738, %v737
  %v751 = vlaneseq
  %v752 = vshrl.u32 %v751, 7
  %v753 = vsub.s32 0, %v752
  %v754 = vrot.slane %v739, %v753
  %v764 = vunpack.c.l.b16 %v740
  %v765 = vunpack.c.l.b16 %v741
  %v766 = vunpack.c.l.b16 %v742
  %v767 = vunpack.c.l.b16 %v743
  %v768 = vunpack.c.l.b16 %v744
  %v769 = vunpack.c.l.b16 %v745
  %v770 = vunpack.c.l.b16 %v746
  %v771 = vunpack.c.l.b16 %v747
  %v772 = vsel %vm391, %v765, %v764
  %v773 = vsel %vm393, %v766, %v772
  %v774 = vsel %vm395, %v767, %v773
  %v775 = vsel %vm397, %v768, %v774
  %v776 = vsel %vm399, %v769, %v775
  %v777 = vsel %vm401, %v770, %v776
  %v778 = vsel %vm403, %v771, %v777
  %v779 = vpack.c.b16 %v778, %v778
  %v781 = vsel %vm216, %v779, 0
  %783 = vmatprep.subr.bf16.mxu0 0
  %784 = vmatpush1.bf16.msra.mxu0 0
  %785 = vmatprep.subr.bf16.mxu0 0
  %786 = vmatpush1.bf16.msra.mxu0 0
  %787 = vmatprep.subr.bf16.mxu0 0
  %788 = vmatpush1.bf16.msra.mxu0 0
  %789 = vmatprep.subr.bf16.mxu0 0
  %790 = vmatpush1.bf16.msra.mxu0 0
  %791 = vmatprep.subr.bf16.mxu0 0
  %792 = vmatpush1.bf16.msra.mxu0 0
  %793 = vmatprep.subr.bf16.mxu0 0
  %794 = vmatpush1.bf16.msra.mxu0 0
  %795 = vmatprep.subr.bf16.mxu0 0
  %796 = vmatpush1.bf16.msra.mxu0 %v749
  %797 = vmatprep.subr.bf16.mxu0 0
  %798 = vmatpush1.bf16.msra.mxu0 %v748
  %799 = vmatprep.subr.bf16.mxu0 0
  %800 = vmatpush2.bf16.msra.mxu0 0
  %801 = vmatprep.subr.bf16.mxu0 0
  %802 = vmatpush2.bf16.msra.mxu0 0
  %803 = vmatprep.subr.bf16.mxu0 0
  %804 = vmatpush2.bf16.msra.mxu0 0
  %805 = vmatprep.subr.bf16.mxu0 0
  %806 = vmatpush2.bf16.msra.mxu0 0
  %807 = vmatprep.subr.bf16.mxu0 0
  %808 = vmatpush2.bf16.msra.mxu0 0
  %809 = vmatprep.subr.bf16.mxu0 0
  %810 = vmatpush2.bf16.msra.mxu0 0
  %811 = vmatprep.subr.bf16.mxu0 0
  %812 = vmatpush2.bf16.msra.mxu0 0
  %813 = vmatprep.subr.bf16.mxu0 0
  %814 = vmatpush2.bf16.msra.mxu0 0
  %815 = vmatprep.mubr.bf16.mxu0 0
  %816 = vmatmul.mubr.bf16.gmra.mxu0 %v781
  %v817 = vpop.f32.mrf.mxu0
  %v818 = vadd.f32 %v754, %v817
  %v819 = vpop.f32.mrf.mxu0
  %v820 = vpop.f32.mrf.mxu0
  %v821 = vpop.f32.mrf.mxu0
  %822 = vdwg.mxu0
  %v823 = vmax.f32 %v818, 0.0
  %v824 = vld [vmem:[%s11] sm:$0xff]
  %v825 = vld [vmem:[%s11 + $0x8] sm:$0xff]
  %v826 = vld [vmem:[%s11 + $0x10] sm:$0xff]
  %v827 = vld [vmem:[%s11 + $0x18] sm:$0xff]
  %v828 = vld [vmem:[%s12] sm:$0x1]
  %v829 = vpack.c.bf16 %v823, %v823
  %v830 = vpack.c.bf16 %v825, %v824
  %v831 = vpack.c.bf16 %v827, %v826
  %v833 = vlaneseq
  %v834 = vshrl.u32 %v833, 7
  %v835 = vsub.s32 0, %v834
  %v836 = vrot.slane %v828, %v835
  %v839 = vsel %vm216, %v829, 0
  %841 = vmatprep.subr.bf16.mxu0 0
  %842 = vmatpush1.bf16.msra.mxu0 0
  %843 = vmatprep.subr.bf16.mxu0 0
  %844 = vmatpush1.bf16.msra.mxu0 0
  %845 = vmatprep.subr.bf16.mxu0 0
  %846 = vmatpush1.bf16.msra.mxu0 0
  %847 = vmatprep.subr.bf16.mxu0 0
  %848 = vmatpush1.bf16.msra.mxu0 0
  %849 = vmatprep.subr.bf16.mxu0 0
  %850 = vmatpush1.bf16.msra.mxu0 0
  %851 = vmatprep.subr.bf16.mxu0 0
  %852 = vmatpush1.bf16.msra.mxu0 0
  %853 = vmatprep.subr.bf16.mxu0 0
  %854 = vmatpush1.bf16.msra.mxu0 %v831
  %855 = vmatprep.subr.bf16.mxu0 0
  %856 = vmatpush1.bf16.msra.mxu0 %v830
  %857 = vmatprep.subr.bf16.mxu0 0
  %858 = vmatpush2.bf16.msra.mxu0 0
  %859 = vmatprep.subr.bf16.mxu0 0
  %860 = vmatpush2.bf16.msra.mxu0 0
  %861 = vmatprep.subr.bf16.mxu0 0
  %862 = vmatpush2.bf16.msra.mxu0 0
  %863 = vmatprep.subr.bf16.mxu0 0
  %864 = vmatpush2.bf16.msra.mxu0 0
  %865 = vmatprep.subr.bf16.mxu0 0
  %866 = vmatpush2.bf16.msra.mxu0 0
  %867 = vmatprep.subr.bf16.mxu0 0
  %868 = vmatpush2.bf16.msra.mxu0 0
  %869 = vmatprep.subr.bf16.mxu0 0
  %870 = vmatpush2.bf16.msra.mxu0 0
  %871 = vmatprep.subr.bf16.mxu0 0
  %872 = vmatpush2.bf16.msra.mxu0 0
  %873 = vmatprep.mubr.bf16.mxu0 0
  %874 = vmatmul.mubr.bf16.gmra.mxu0 %v839
  %v875 = vpop.f32.mrf.mxu0
  %v876 = vadd.f32 %v836, %v875
  %v877 = vpop.f32.mrf.mxu0
  %v878 = vpop.f32.mrf.mxu0
  %v879 = vpop.f32.mrf.mxu0
  %880 = vdwg.mxu0
  %vm881 = vcmask 7168
  %v882 = vsel %vm881, %v45, -inf
  %v883 = vrot.slane %v882, 4
  %v884 = vmax.f32 %v882, %v883
  %v885 = vrot.slane %v884, 2
  %v886 = vmax.f32 %v884, %v885
  %v887 = vrot.slane %v886, 1
  %v888 = vmax.f32 %v886, %v887
  %v889 = vsel %vm881, %v46, -inf
  %v890 = vrot.slane %v889, 4
  %v891 = vmax.f32 %v889, %v890
  %v892 = vrot.slane %v891, 2
  %v893 = vmax.f32 %v891, %v892
  %v894 = vrot.slane %v893, 1
  %v895 = vmax.f32 %v893, %v894
  %v896 = vsel %vm881, %v47, -inf
  %v897 = vrot.slane %v896, 4
  %v898 = vmax.f32 %v896, %v897
  %v899 = vrot.slane %v898, 2
  %v900 = vmax.f32 %v898, %v899
  %v901 = vrot.slane %v900, 1
  %v902 = vmax.f32 %v900, %v901
  %v903 = vsel %vm881, %v48, -inf
  %v904 = vrot.slane %v903, 4
  %v905 = vmax.f32 %v903, %v904
  %v906 = vrot.slane %v905, 2
  %v907 = vmax.f32 %v905, %v906
  %v908 = vrot.slane %v907, 1
  %v909 = vmax.f32 %v907, %v908
  %v910 = vsel %vm881, %v49, -inf
  %v911 = vrot.slane %v910, 4
  %v912 = vmax.f32 %v910, %v911
  %v913 = vrot.slane %v912, 2
  %v914 = vmax.f32 %v912, %v913
  %v915 = vrot.slane %v914, 1
  %v916 = vmax.f32 %v914, %v915
  %v917 = vsel %vm881, %v50, -inf
  %v918 = vrot.slane %v917, 4
  %v919 = vmax.f32 %v917, %v918
  %v920 = vrot.slane %v919, 2
  %v921 = vmax.f32 %v919, %v920
  %v922 = vrot.slane %v921, 1
  %v923 = vmax.f32 %v921, %v922
  %v924 = vsel %vm881, %v51, -inf
  %v925 = vrot.slane %v924, 4
  %v926 = vmax.f32 %v924, %v925
  %v927 = vrot.slane %v926, 2
  %v928 = vmax.f32 %v926, %v927
  %v929 = vrot.slane %v928, 1
  %v930 = vmax.f32 %v928, %v929
  %v931 = vsel %vm881, %v52, -inf
  %v932 = vrot.slane %v931, 4
  %v933 = vmax.f32 %v931, %v932
  %v934 = vrot.slane %v933, 2
  %v935 = vmax.f32 %v933, %v934
  %v936 = vrot.slane %v935, 1
  %v937 = vmax.f32 %v935, %v936
  %939 = vset.pattern.permute.xlu0 0
  %940 = vperm.xlu0 %939, %v888
  %v941 = vpop.permute.xlu0 %940
  %943 = vset.pattern.permute.xlu0 0
  %944 = vperm.xlu0 %943, %v895
  %v945 = vpop.permute.xlu0 %944
  %947 = vset.pattern.permute.xlu0 0
  %948 = vperm.xlu0 %947, %v902
  %v949 = vpop.permute.xlu0 %948
  %951 = vset.pattern.permute.xlu0 0
  %952 = vperm.xlu0 %951, %v909
  %v953 = vpop.permute.xlu0 %952
  %955 = vset.pattern.permute.xlu0 0
  %956 = vperm.xlu0 %955, %v916
  %v957 = vpop.permute.xlu0 %956
  %959 = vset.pattern.permute.xlu0 0
  %960 = vperm.xlu0 %959, %v923
  %v961 = vpop.permute.xlu0 %960
  %963 = vset.pattern.permute.xlu0 0
  %964 = vperm.xlu0 %963, %v930
  %v965 = vpop.permute.xlu0 %964
  %967 = vset.pattern.permute.xlu0 0
  %968 = vperm.xlu0 %967, %v937
  %v969 = vpop.permute.xlu0 %968
  %v970 = vsel %vm391, %v945, %v941
  %v971 = vsel %vm393, %v949, %v970
  %v972 = vsel %vm395, %v953, %v971
  %v973 = vsel %vm397, %v957, %v972
  %v974 = vsel %vm399, %v961, %v973
  %v975 = vsel %vm401, %v965, %v974
  %v976 = vsel %vm403, %v969, %v975
  %v978 = vmul.f32 %v876, %v976
  %979 = vst.msk [vmem:[%s13] sm:$0xff] %vm216, %v978
  // Predicated region
  $region54: #{mtr_encoder_forward.5} parent=0 // pred_check
    _
  $region55: #{mtr_encoder_forward.5} parent=0 // pred_check_branch
    %981 = sbr.rel (0) target = $region57
  $region56: #{mtr_encoder_forward.5} parent=0 // pred_region
    _
  $region57: #{mtr_encoder_forward.5} parent=0 // pred_fallthru
    _
  // Predicated region
  $region58: #{mtr_encoder_forward.5} parent=0 // pred_check
    _
  $region59: #{mtr_encoder_forward.5} parent=0 // pred_check_branch
    %983 = sbr.rel (0) target = $region61
  $region60: #{mtr_encoder_forward.5} parent=0 // pred_region
    _
  $region61: #{mtr_encoder_forward.5} parent=0 // pred_fallthru
    _

// kernel: mtr_encoder_forward.6
$region0: #{mtr_encoder_forward.6}
  #allocation0 [shape = 'u32[]', space=smem, size = 0x4, offset = 0x4, fixed_abs, tag = 'smem constant byte address 0x4 - core index']
  #allocation1 [shape = 'u32[144,128]{1,0:T(1,128)}', space=vmem, size = 0x12000, scoped, tag = 'internal scratch']
  %s0 = inlined_call_operand.vmem [shape: f32[2,8,32], index: 0, kind: input, shape index: {}]
  %s1 = inlined_call_operand.vmem [shape: f32[2,8,32], index: 1, kind: input, shape index: {}]
  %s2 = inlined_call_operand.vmem [shape: f32[2,1,8], index: 2, kind: input, shape index: {}]
  %s3 = inlined_call_operand.vmem [shape: f32[32,64], index: 3, kind: input, shape index: {}]
  %s4 = inlined_call_operand.vmem [shape: f32[1,64], index: 4, kind: input, shape index: {}]
  %s5 = inlined_call_operand.vmem [shape: f32[32,32], index: 5, kind: input, shape index: {}]
  %s6 = inlined_call_operand.vmem [shape: f32[1,32], index: 6, kind: input, shape index: {}]
  %s7 = inlined_call_operand.vmem [shape: f32[32,32], index: 7, kind: input, shape index: {}]
  %s8 = inlined_call_operand.vmem [shape: f32[1,32], index: 8, kind: input, shape index: {}]
  %s9 = inlined_call_operand.vmem [shape: f32[1,32], index: 9, kind: input, shape index: {}]
  %s10 = inlined_call_operand.vmem [shape: f32[1,32], index: 10, kind: input, shape index: {}]
  %s11 = inlined_call_operand.vmem [shape: f32[32,128], index: 11, kind: input, shape index: {}]
  %s12 = inlined_call_operand.vmem [shape: f32[1,128], index: 12, kind: input, shape index: {}]
  %s13 = inlined_call_operand.vmem [shape: f32[128,32], index: 13, kind: input, shape index: {}]
  %s14 = inlined_call_operand.vmem [shape: f32[1,32], index: 14, kind: input, shape index: {}]
  %s15 = inlined_call_operand.vmem [shape: f32[1,32], index: 15, kind: input, shape index: {}]
  %s16 = inlined_call_operand.vmem [shape: f32[1,32], index: 16, kind: input, shape index: {}]
  %s17 = inlined_call_operand.vmem [shape: f32[2,8,32], index: 17, kind: output, shape index: {}]
  %s18 = sld [smem:[#allocation0]]
  $region101: #{mtr_encoder_forward.6} parent=0
    _
  %s20 = ssub.s32 1, %s18
  %s21 = scalar_select 0, %s20, %s18
  loop: start=0, step=1, limit=4
  $region2: #{mtr_encoder_forward.6} parent=0 // loop_pre_header
    _
  $region3: #{mtr_encoder_forward.6} parent=0 // loop_header
    %s23 = sphi 0, %s27
    %p24 = scmp.ge.s32.totalorder %s23, 4
    %s33 = sphi 0, %s35
    %s36 = sphi 0, %s33
    %s37 = sphi 0, %s36
    %s53 = sphi 0, %s37
    %s59 = sphi 0, %s61
    %s62 = sphi 0, %s59
    %s63 = sphi 0, %s62
    %s79 = sphi 0, %s63
    %s85 = sphi 0, %s87
    %s88 = sphi 0, %s85
    %s89 = sphi 0, %s88
    %s105 = sphi 0, %s89
    %s109 = sphi 0, %s109
    %s111 = sphi 0, %s109
    %s112 = sphi 0, %s111
    %s126 = sphi 0, %s112
    %s130 = sphi 0, %s130
    %s132 = sphi 0, %s130
    %s133 = sphi 0, %s132
    %s147 = sphi 0, %s133
    %s151 = sphi 0, %s151
    %s153 = sphi 0, %s151
    %s154 = sphi 0, %s153
    %s168 = sphi 0, %s154
    %s172 = sphi 0, %s172
    %s174 = sphi 0, %s172
    %s175 = sphi 0, %s174
    %s189 = sphi 0, %s175
    %s193 = sphi 0, %s193
    %s195 = sphi 0, %s193
    %s196 = sphi 0, %s195
    %s210 = sphi 0, %s196
    %s214 = sphi 0, %s214
    %s216 = sphi 0, %s214
    %s217 = sphi 0, %s216
    %s231 = sphi 0, %s217
    %s235 = sphi 0, %s235
    %s237 = sphi 0, %s235
    %s238 = sphi 0, %s237
    %s252 = sphi 0, %s238
    %s256 = sphi 0, %s256
    %s258 = sphi 0, %s256
    %s259 = sphi 0, %s258
    %s273 = sphi 0, %s259
    %s277 = sphi 0, %s277
    %s279 = sphi 0, %s277
    %s280 = sphi 0, %s279
    %s294 = sphi 0, %s280
    %s298 = sphi 0, %s298
    %s300 = sphi 0, %s298
    %s301 = sphi 0, %s300
    %s315 = sphi 0, %s301
    %s319 = sphi 0, %s319
    %s321 = sphi 0, %s319
    %s322 = sphi 0, %s321
    %s336 = sphi 0, %s322
    %s340 = sphi 0, %s340
    %s342 = sphi 0, %s340
    %s343 = sphi 0, %s342
    %s357 = sphi 0, %s343
    %s361 = sphi 0, %s361
    %s363 = sphi 0, %s361
    %s364 = sphi 0, %s363
    %s378 = sphi 0, %s364
    %s382 = sphi 0, %s382
    %s384 = sphi 0, %s382
    %s385 = sphi 0, %s384
    %s399 = sphi 0, %s385
    %s405 = sphi 0, %s407
    %s408 = sphi 0, %s405
    %s409 = sphi 0, %s408
    %s425 = sphi 0, %s409
  $region4: #{mtr_encoder_forward.6} parent=0 // loop_header_branch
    %26 = sbr.rel (%p24) target = $region8
  $region5: #{mtr_encoder_forward.6} parent=0 // loop_body
    %s28 = ssub.s32 %s23, 1
    %s29 = ssub.s32 %s23, 2
    %s30 = sadd.s32 %s23, 1
    %s31 = ssub.s32 %s23, %s30
    %p32 = scmp.eq.s32.totalorder %s31, 0
    %s34 = sadd.s32 %s33, 1
    %s35 = scalar_select %p32, %s33, %s34
    %p38 = pneg %p32
    %p39 = scmp.eq.s32.totalorder %s23, 1
    %p40 = por %p38, %p39
    %p41 = scmp.ne.s32.totalorder %s33, %s36
    %p42 = scmp.eq.s32.totalorder %s23, 0
    %p43 = por %p41, %p42
    %p44 = scmp.ne.s32.totalorder %s33, %s36
    %p45 = scmp.eq.s32.totalorder %s28, 1
    %p46 = por %p44, %p45
    %p47 = scmp.ne.s32.totalorder %s36, %s37
    %p48 = scmp.eq.s32.totalorder %s28, 0
    %p49 = por %p47, %p48
    %p50 = scmp.ne.s32.totalorder %s36, %s37
    %p51 = scmp.eq.s32.totalorder %s29, 1
    %p52 = por %p50, %p51
    %p54 = scmp.ne.s32.totalorder %s37, %s53
    %p55 = scmp.eq.s32.totalorder %s29, 0
    %p56 = por %p54, %p55
    %s57 = ssub.s32 %s23, %s30
    %p58 = scmp.eq.s32.totalorder %s57, 0
    %s60 = sadd.s32 %s59, 1
    %s61 = scalar_select %p58, %s59, %s60
    %p64 = pneg %p58
    %p65 = scmp.eq.s32.totalorder %s23, 1
    %p66 = por %p64, %p65
    %p67 = scmp.ne.s32.totalorder %s59, %s62
    %p68 = scmp.eq.s32.totalorder %s23, 0
    %p69 = por %p67, %p68
    %p70 = scmp.ne.s32.totalorder %s59, %s62
    %p71 = scmp.eq.s32.totalorder %s28, 1
    %p72 = por %p70, %p71
    %p73 = scmp.ne.s32.totalorder %s62, %s63
    %p74 = scmp.eq.s32.totalorder %s28, 0
    %p75 = por %p73, %p74
    %p76 = scmp.ne.s32.totalorder %s62, %s63
    %p77 = scmp.eq.s32.totalorder %s29, 1
    %p78 = por %p76, %p77
    %p80 = scmp.ne.s32.totalorder %s63, %s79
    %p81 = scmp.eq.s32.totalorder %s29, 0
    %p82 = por %p80, %p81
    %s83 = ssub.s32 %s23, %s30
    %p84 = scmp.eq.s32.totalorder %s83, 0
    %s86 = sadd.s32 %s85, 1
    %s87 = scalar_select %p84, %s85, %s86
    %p90 = pneg %p84
    %p91 = scmp.eq.s32.totalorder %s23, 1
    %p92 = por %p90, %p91
    %p93 = scmp.ne.s32.totalorder %s85, %s88
    %p94 = scmp.eq.s32.totalorder %s23, 0
    %p95 = por %p93, %p94
    %p96 = scmp.ne.s32.totalorder %s85, %s88
    %p97 = scmp.eq.s32.totalorder %s28, 1
    %p98 = por %p96, %p97
    %p99 = scmp.ne.s32.totalorder %s88, %s89
    %p100 = scmp.eq.s32.totalorder %s28, 0
    %p101 = por %p99, %p100
    %p102 = scmp.ne.s32.totalorder %s88, %s89
    %p103 = scmp.eq.s32.totalorder %s29, 1
    %p104 = por %p102, %p103
    %p106 = scmp.ne.s32.totalorder %s89, %s105
    %p107 = scmp.eq.s32.totalorder %s29, 0
    %p108 = por %p106, %p107
    %s110 = sadd.s32 %s109, 1
    %p113 = scmp.eq.s32.totalorder %s23, 1
    %p114 = scmp.ne.s32.totalorder %s109, %s111
    %p115 = scmp.eq.s32.totalorder %s23, 0
    %p116 = por %p114, %p115
    %p117 = scmp.ne.s32.totalorder %s109, %s111
    %p118 = scmp.eq.s32.totalorder %s28, 1
    %p119 = por %p117, %p118
    %p120 = scmp.ne.s32.totalorder %s111, %s112
    %p121 = scmp.eq.s32.totalorder %s28, 0
    %p122 = por %p120, %p121
    %p123 = scmp.ne.s32.totalorder %s111, %s112
    %p124 = scmp.eq.s32.totalorder %s29, 1
    %p125 = por %p123, %p124
    %p127 = scmp.ne.s32.totalorder %s112, %s126
    %p128 = scmp.eq.s32.totalorder %s29, 0
    %p129 = por %p127, %p128
    %s131 = sadd.s32 %s130, 1
    %p134 = scmp.eq.s32.totalorder %s23, 1
    %p135 = scmp.ne.s32.totalorder %s130, %s132
    %p136 = scmp.eq.s32.totalorder %s23, 0
    %p137 = por %p135, %p136
    %p138 = scmp.ne.s32.totalorder %s130, %s132
    %p139 = scmp.eq.s32.totalorder %s28, 1
    %p140 = por %p138, %p139
    %p141 = scmp.ne.s32.totalorder %s132, %s133
    %p142 = scmp.eq.s32.totalorder %s28, 0
    %p143 = por %p141, %p142
    %p144 = scmp.ne.s32.totalorder %s132, %s133
    %p145 = scmp.eq.s32.totalorder %s29, 1
    %p146 = por %p144, %p145
    %p148 = scmp.ne.s32.totalorder %s133, %s147
    %p149 = scmp.eq.s32.totalorder %s29, 0
    %p150 = por %p148, %p149
    %s152 = sadd.s32 %s151, 1
    %p155 = scmp.eq.s32.totalorder %s23, 1
    %p156 = scmp.ne.s32.totalorder %s151, %s153
    %p157 = scmp.eq.s32.totalorder %s23, 0
    %p158 = por %p156, %p157
    %p159 = scmp.ne.s32.totalorder %s151, %s153
    %p160 = scmp.eq.s32.totalorder %s28, 1
    %p161 = por %p159, %p160
    %p162 = scmp.ne.s32.totalorder %s153, %s154
    %p163 = scmp.eq.s32.totalorder %s28, 0
    %p164 = por %p162, %p163
    %p165 = scmp.ne.s32.totalorder %s153, %s154
    %p166 = scmp.eq.s32.totalorder %s29, 1
    %p167 = por %p165, %p166
    %p169 = scmp.ne.s32.totalorder %s154, %s168
    %p170 = scmp.eq.s32.totalorder %s29, 0
    %p171 = por %p169, %p170
    %s173 = sadd.s32 %s172, 1
    %p176 = scmp.eq.s32.totalorder %s23, 1
    %p177 = scmp.ne.s32.totalorder %s172, %s174
    %p178 = scmp.eq.s32.totalorder %s23, 0
    %p179 = por %p177, %p178
    %p180 = scmp.ne.s32.totalorder %s172, %s174
    %p181 = scmp.eq.s32.totalorder %s28, 1
    %p182 = por %p180, %p181
    %p183 = scmp.ne.s32.totalorder %s174, %s175
    %p184 = scmp.eq.s32.totalorder %s28, 0
    %p185 = por %p183, %p184
    %p186 = scmp.ne.s32.totalorder %s174, %s175
    %p187 = scmp.eq.s32.totalorder %s29, 1
    %p188 = por %p186, %p187
    %p190 = scmp.ne.s32.totalorder %s175, %s189
    %p191 = scmp.eq.s32.totalorder %s29, 0
    %p192 = por %p190, %p191
    %s194 = sadd.s32 %s193, 1
    %p197 = scmp.eq.s32.totalorder %s23, 1
    %p198 = scmp.ne.s32.totalorder %s193, %s195
    %p199 = scmp.eq.s32.totalorder %s23, 0
    %p200 = por %p198, %p199
    %p201 = scmp.ne.s32.totalorder %s193, %s195
    %p202 = scmp.eq.s32.totalorder %s28, 1
    %p203 = por %p201, %p202
    %p204 = scmp.ne.s32.totalorder %s195, %s196
    %p205 = scmp.eq.s32.totalorder %s28, 0
    %p206 = por %p204, %p205
    %p207 = scmp.ne.s32.totalorder %s195, %s196
    %p208 = scmp.eq.s32.totalorder %s29, 1
    %p209 = por %p207, %p208
    %p211 = scmp.ne.s32.totalorder %s196, %s210
    %p212 = scmp.eq.s32.totalorder %s29, 0
    %p213 = por %p211, %p212
    %s215 = sadd.s32 %s214, 1
    %p218 = scmp.eq.s32.totalorder %s23, 1
    %p219 = scmp.ne.s32.totalorder %s214, %s216
    %p220 = scmp.eq.s32.totalorder %s23, 0
    %p221 = por %p219, %p220
    %p222 = scmp.ne.s32.totalorder %s214, %s216
    %p223 = scmp.eq.s32.totalorder %s28, 1
    %p224 = por %p222, %p223
    %p225 = scmp.ne.s32.totalorder %s216, %s217
    %p226 = scmp.eq.s32.totalorder %s28, 0
    %p227 = por %p225, %p226
    %p228 = scmp.ne.s32.totalorder %s216, %s217
    %p229 = scmp.eq.s32.totalorder %s29, 1
    %p230 = por %p228, %p229
    %p232 = scmp.ne.s32.totalorder %s217, %s231
    %p233 = scmp.eq.s32.totalorder %s29, 0
    %p234 = por %p232, %p233
    %s236 = sadd.s32 %s235, 1
    %p239 = scmp.eq.s32.totalorder %s23, 1
    %p240 = scmp.ne.s32.totalorder %s235, %s237
    %p241 = scmp.eq.s32.totalorder %s23, 0
    %p242 = por %p240, %p241
    %p243 = scmp.ne.s32.totalorder %s235, %s237
    %p244 = scmp.eq.s32.totalorder %s28, 1
    %p245 = por %p243, %p244
    %p246 = scmp.ne.s32.totalorder %s237, %s238
    %p247 = scmp.eq.s32.totalorder %s28, 0
    %p248 = por %p246, %p247
    %p249 = scmp.ne.s32.totalorder %s237, %s238
    %p250 = scmp.eq.s32.totalorder %s29, 1
    %p251 = por %p249, %p250
    %p253 = scmp.ne.s32.totalorder %s238, %s252
    %p254 = scmp.eq.s32.totalorder %s29, 0
    %p255 = por %p253, %p254
    %s257 = sadd.s32 %s256, 1
    %p260 = scmp.eq.s32.totalorder %s23, 1
    %p261 = scmp.ne.s32.totalorder %s256, %s258
    %p262 = scmp.eq.s32.totalorder %s23, 0
    %p263 = por %p261, %p262
    %p264 = scmp.ne.s32.totalorder %s256, %s258
    %p265 = scmp.eq.s32.totalorder %s28, 1
    %p266 = por %p264, %p265
    %p267 = scmp.ne.s32.totalorder %s258, %s259
    %p268 = scmp.eq.s32.totalorder %s28, 0
    %p269 = por %p267, %p268
    %p270 = scmp.ne.s32.totalorder %s258, %s259
    %p271 = scmp.eq.s32.totalorder %s29, 1
    %p272 = por %p270, %p271
    %p274 = scmp.ne.s32.totalorder %s259, %s273
    %p275 = scmp.eq.s32.totalorder %s29, 0
    %p276 = por %p274, %p275
    %s278 = sadd.s32 %s277, 1
    %p281 = scmp.eq.s32.totalorder %s23, 1
    %p282 = scmp.ne.s32.totalorder %s277, %s279
    %p283 = scmp.eq.s32.totalorder %s23, 0
    %p284 = por %p282, %p283
    %p285 = scmp.ne.s32.totalorder %s277, %s279
    %p286 = scmp.eq.s32.totalorder %s28, 1
    %p287 = por %p285, %p286
    %p288 = scmp.ne.s32.totalorder %s279, %s280
    %p289 = scmp.eq.s32.totalorder %s28, 0
    %p290 = por %p288, %p289
    %p291 = scmp.ne.s32.totalorder %s279, %s280
    %p292 = scmp.eq.s32.totalorder %s29, 1
    %p293 = por %p291, %p292
    %p295 = scmp.ne.s32.totalorder %s280, %s294
    %p296 = scmp.eq.s32.totalorder %s29, 0
    %p297 = por %p295, %p296
    %s299 = sadd.s32 %s298, 1
    %p302 = scmp.eq.s32.totalorder %s23, 1
    %p303 = scmp.ne.s32.totalorder %s298, %s300
    %p304 = scmp.eq.s32.totalorder %s23, 0
    %p305 = por %p303, %p304
    %p306 = scmp.ne.s32.totalorder %s298, %s300
    %p307 = scmp.eq.s32.totalorder %s28, 1
    %p308 = por %p306, %p307
    %p309 = scmp.ne.s32.totalorder %s300, %s301
    %p310 = scmp.eq.s32.totalorder %s28, 0
    %p311 = por %p309, %p310
    %p312 = scmp.ne.s32.totalorder %s300, %s301
    %p313 = scmp.eq.s32.totalorder %s29, 1
    %p314 = por %p312, %p313
    %p316 = scmp.ne.s32.totalorder %s301, %s315
    %p317 = scmp.eq.s32.totalorder %s29, 0
    %p318 = por %p316, %p317
    %s320 = sadd.s32 %s319, 1
    %p323 = scmp.eq.s32.totalorder %s23, 1
    %p324 = scmp.ne.s32.totalorder %s319, %s321
    %p325 = scmp.eq.s32.totalorder %s23, 0
    %p326 = por %p324, %p325
    %p327 = scmp.ne.s32.totalorder %s319, %s321
    %p328 = scmp.eq.s32.totalorder %s28, 1
    %p329 = por %p327, %p328
    %p330 = scmp.ne.s32.totalorder %s321, %s322
    %p331 = scmp.eq.s32.totalorder %s28, 0
    %p332 = por %p330, %p331
    %p333 = scmp.ne.s32.totalorder %s321, %s322
    %p334 = scmp.eq.s32.totalorder %s29, 1
    %p335 = por %p333, %p334
    %p337 = scmp.ne.s32.totalorder %s322, %s336
    %p338 = scmp.eq.s32.totalorder %s29, 0
    %p339 = por %p337, %p338
    %s341 = sadd.s32 %s340, 1
    %p344 = scmp.eq.s32.totalorder %s23, 1
    %p345 = scmp.ne.s32.totalorder %s340, %s342
    %p346 = scmp.eq.s32.totalorder %s23, 0
    %p347 = por %p345, %p346
    %p348 = scmp.ne.s32.totalorder %s340, %s342
    %p349 = scmp.eq.s32.totalorder %s28, 1
    %p350 = por %p348, %p349
    %p351 = scmp.ne.s32.totalorder %s342, %s343
    %p352 = scmp.eq.s32.totalorder %s28, 0
    %p353 = por %p351, %p352
    %p354 = scmp.ne.s32.totalorder %s342, %s343
    %p355 = scmp.eq.s32.totalorder %s29, 1
    %p356 = por %p354, %p355
    %p358 = scmp.ne.s32.totalorder %s343, %s357
    %p359 = scmp.eq.s32.totalorder %s29, 0
    %p360 = por %p358, %p359
    %s362 = sadd.s32 %s361, 1
    %p365 = scmp.eq.s32.totalorder %s23, 1
    %p366 = scmp.ne.s32.totalorder %s361, %s363
    %p367 = scmp.eq.s32.totalorder %s23, 0
    %p368 = por %p366, %p367
    %p369 = scmp.ne.s32.totalorder %s361, %s363
    %p370 = scmp.eq.s32.totalorder %s28, 1
    %p371 = por %p369, %p370
    %p372 = scmp.ne.s32.totalorder %s363, %s364
    %p373 = scmp.eq.s32.totalorder %s28, 0
    %p374 = por %p372, %p373
    %p375 = scmp.ne.s32.totalorder %s363, %s364
    %p376 = scmp.eq.s32.totalorder %s29, 1
    %p377 = por %p375, %p376
    %p379 = scmp.ne.s32.totalorder %s364, %s378
    %p380 = scmp.eq.s32.totalorder %s29, 0
    %p381 = por %p379, %p380
    %s383 = sadd.s32 %s382, 1
    %p386 = scmp.eq.s32.totalorder %s23, 1
    %p387 = scmp.ne.s32.totalorder %s382, %s384
    %p388 = scmp.eq.s32.totalorder %s23, 0
    %p389 = por %p387, %p388
    %p390 = scmp.ne.s32.totalorder %s382, %s384
    %p391 = scmp.eq.s32.totalorder %s28, 1
    %p392 = por %p390, %p391
    %p393 = scmp.ne.s32.totalorder %s384, %s385
    %p394 = scmp.eq.s32.totalorder %s28, 0
    %p395 = por %p393, %p394
    %p396 = scmp.ne.s32.totalorder %s384, %s385
    %p397 = scmp.eq.s32.totalorder %s29, 1
    %p398 = por %p396, %p397
    %p400 = scmp.ne.s32.totalorder %s385, %s399
    %p401 = scmp.eq.s32.totalorder %s29, 0
    %p402 = por %p400, %p401
    %s403 = ssub.s32 %s23, %s30
    %p404 = scmp.eq.s32.totalorder %s403, 0
    %s406 = sadd.s32 %s405, 1
    %s407 = scalar_select %p404, %s405, %s406
    %p410 = pneg %p404
    %p411 = scmp.eq.s32.totalorder %s23, 1
    %p412 = por %p410, %p411
    %p413 = scmp.ne.s32.totalorder %s405, %s408
    %p414 = scmp.eq.s32.totalorder %s23, 0
    %p415 = por %p413, %p414
    %p416 = scmp.ne.s32.totalorder %s405, %s408
    %p417 = scmp.eq.s32.totalorder %s28, 1
    %p418 = por %p416, %p417
    %p419 = scmp.ne.s32.totalorder %s408, %s409
    %p420 = scmp.eq.s32.totalorder %s28, 0
    %p421 = por %p419, %p420
    %p422 = scmp.ne.s32.totalorder %s408, %s409
    %p423 = scmp.eq.s32.totalorder %s29, 1
    %p424 = por %p422, %p423
    %p426 = scmp.ne.s32.totalorder %s409, %s425
    %p427 = scmp.eq.s32.totalorder %s29, 0
    %p428 = por %p426, %p427
    %p429 = scmp.le.s32.totalorder 1, %s23
    %p430 = scmp.lt.s32.totalorder %s23, 3
    %p431 = pnand %p429, %p430
    %p432 = pneg %p431
    // Predicated region
    $region9: #{mtr_encoder_forward.6} parent=5 // pred_check
      _
    $region10: #{mtr_encoder_forward.6} parent=5 // pred_check_branch
      %434 = sbr.rel (%p431) target = $region12
    $region11: #{mtr_encoder_forward.6} parent=5 // pred_region
      %s435 = ssub.s32 %s23, 1
      // Predicated region
      $region13: #{mtr_encoder_forward.6} parent=11 // pred_check
        %p436 = pneg %p122
      $region14: #{mtr_encoder_forward.6} parent=11 // pred_check_branch
        %438 = sbr.rel (%p436) target = $region16
      $region15: #{mtr_encoder_forward.6} parent=11 // pred_region
        _
      $region16: #{mtr_encoder_forward.6} parent=11 // pred_fallthru
        _
      // Predicated region
      $region17: #{mtr_encoder_forward.6} parent=11 // pred_check
        %p439 = pneg %p143
      $region18: #{mtr_encoder_forward.6} parent=11 // pred_check_branch
        %441 = sbr.rel (%p439) target = $region20
      $region19: #{mtr_encoder_forward.6} parent=11 // pred_region
        _
      $region20: #{mtr_encoder_forward.6} parent=11 // pred_fallthru
        _
      // Predicated region
      $region21: #{mtr_encoder_forward.6} parent=11 // pred_check
        %p442 = pneg %p164
      $region22: #{mtr_encoder_forward.6} parent=11 // pred_check_branch
        %444 = sbr.rel (%p442) target = $region24
      $region23: #{mtr_encoder_forward.6} parent=11 // pred_region
        _
      $region24: #{mtr_encoder_forward.6} parent=11 // pred_fallthru
        _
      // Predicated region
      $region25: #{mtr_encoder_forward.6} parent=11 // pred_check
        %p445 = pneg %p185
      $region26: #{mtr_encoder_forward.6} parent=11 // pred_check_branch
        %447 = sbr.rel (%p445) target = $region28
      $region27: #{mtr_encoder_forward.6} parent=11 // pred_region
        _
      $region28: #{mtr_encoder_forward.6} parent=11 // pred_fallthru
        _
      // Predicated region
      $region29: #{mtr_encoder_forward.6} parent=11 // pred_check
        %p448 = pneg %p206
      $region30: #{mtr_encoder_forward.6} parent=11 // pred_check_branch
        %450 = sbr.rel (%p448) target = $region32
      $region31: #{mtr_encoder_forward.6} parent=11 // pred_region
        _
      $region32: #{mtr_encoder_forward.6} parent=11 // pred_fallthru
        _
      // Predicated region
      $region33: #{mtr_encoder_forward.6} parent=11 // pred_check
        %p451 = pneg %p227
      $region34: #{mtr_encoder_forward.6} parent=11 // pred_check_branch
        %453 = sbr.rel (%p451) target = $region36
      $region35: #{mtr_encoder_forward.6} parent=11 // pred_region
        _
      $region36: #{mtr_encoder_forward.6} parent=11 // pred_fallthru
        _
      // Predicated region
      $region37: #{mtr_encoder_forward.6} parent=11 // pred_check
        %p454 = pneg %p248
      $region38: #{mtr_encoder_forward.6} parent=11 // pred_check_branch
        %456 = sbr.rel (%p454) target = $region40
      $region39: #{mtr_encoder_forward.6} parent=11 // pred_region
        _
      $region40: #{mtr_encoder_forward.6} parent=11 // pred_fallthru
        _
      // Predicated region
      $region41: #{mtr_encoder_forward.6} parent=11 // pred_check
        %p457 = pneg %p269
      $region42: #{mtr_encoder_forward.6} parent=11 // pred_check_branch
        %459 = sbr.rel (%p457) target = $region44
      $region43: #{mtr_encoder_forward.6} parent=11 // pred_region
        _
      $region44: #{mtr_encoder_forward.6} parent=11 // pred_fallthru
        _
      // Predicated region
      $region45: #{mtr_encoder_forward.6} parent=11 // pred_check
        %p460 = pneg %p290
      $region46: #{mtr_encoder_forward.6} parent=11 // pred_check_branch
        %462 = sbr.rel (%p460) target = $region48
      $region47: #{mtr_encoder_forward.6} parent=11 // pred_region
        _
      $region48: #{mtr_encoder_forward.6} parent=11 // pred_fallthru
        _
      // Predicated region
      $region49: #{mtr_encoder_forward.6} parent=11 // pred_check
        %p463 = pneg %p311
      $region50: #{mtr_encoder_forward.6} parent=11 // pred_check_branch
        %465 = sbr.rel (%p463) target = $region52
      $region51: #{mtr_encoder_forward.6} parent=11 // pred_region
        _
      $region52: #{mtr_encoder_forward.6} parent=11 // pred_fallthru
        _
      // Predicated region
      $region53: #{mtr_encoder_forward.6} parent=11 // pred_check
        %p466 = pneg %p332
      $region54: #{mtr_encoder_forward.6} parent=11 // pred_check_branch
        %468 = sbr.rel (%p466) target = $region56
      $region55: #{mtr_encoder_forward.6} parent=11 // pred_region
        _
      $region56: #{mtr_encoder_forward.6} parent=11 // pred_fallthru
        _
      // Predicated region
      $region57: #{mtr_encoder_forward.6} parent=11 // pred_check
        %p469 = pneg %p353
      $region58: #{mtr_encoder_forward.6} parent=11 // pred_check_branch
        %471 = sbr.rel (%p469) target = $region60
      $region59: #{mtr_encoder_forward.6} parent=11 // pred_region
        _
      $region60: #{mtr_encoder_forward.6} parent=11 // pred_fallthru
        _
      // Predicated region
      $region61: #{mtr_encoder_forward.6} parent=11 // pred_check
        %p472 = pneg %p374
      $region62: #{mtr_encoder_forward.6} parent=11 // pred_check_branch
        %474 = sbr.rel (%p472) target = $region64
      $region63: #{mtr_encoder_forward.6} parent=11 // pred_region
        _
      $region64: #{mtr_encoder_forward.6} parent=11 // pred_fallthru
        _
      // Predicated region
      $region65: #{mtr_encoder_forward.6} parent=11 // pred_check
        %p475 = pneg %p395
      $region66: #{mtr_encoder_forward.6} parent=11 // pred_check_branch
        %477 = sbr.rel (%p475) target = $region68
      $region67: #{mtr_encoder_forward.6} parent=11 // pred_region
        _
      $region68: #{mtr_encoder_forward.6} parent=11 // pred_fallthru
        _
    $region12: #{mtr_encoder_forward.6} parent=5 // pred_fallthru
      _
    %p478 = scmp.lt.s32.totalorder %s23, 2
    // Predicated region
    $region69: #{mtr_encoder_forward.6} parent=5 // pred_check
      %p479 = pneg %p478
    $region70: #{mtr_encoder_forward.6} parent=5 // pred_check_branch
      %481 = sbr.rel (%p479) target = $region72
    $region71: #{mtr_encoder_forward.6} parent=5 // pred_region
      // Predicated region
      $region73: #{mtr_encoder_forward.6} parent=71 // pred_check
        %p482 = pneg %p43
      $region74: #{mtr_encoder_forward.6} parent=71 // pred_check_branch
        %484 = sbr.rel (%p482) target = $region76
      $region75: #{mtr_encoder_forward.6} parent=71 // pred_region
        %p485 = scmp.lt.s32.totalorder %s23, 1
        %s486 = scalar_select %p485, %s23, 1
        %s487 = smul.addr %s486, 8
        %s488 = scalar_lea.vmem %s0, %s487
      $region76: #{mtr_encoder_forward.6} parent=71 // pred_fallthru
        _
      // Predicated region
      $region77: #{mtr_encoder_forward.6} parent=71 // pred_check
        %p489 = pneg %p69
      $region78: #{mtr_encoder_forward.6} parent=71 // pred_check_branch
        %491 = sbr.rel (%p489) target = $region80
      $region79: #{mtr_encoder_forward.6} parent=71 // pred_region
        %p492 = scmp.lt.s32.totalorder %s23, 1
        %s493 = scalar_select %p492, %s23, 1
        %s494 = smul.addr %s493, 8
        %s495 = scalar_lea.vmem %s1, %s494
      $region80: #{mtr_encoder_forward.6} parent=71 // pred_fallthru
        _
      // Predicated region
      $region81: #{mtr_encoder_forward.6} parent=71 // pred_check
        %p496 = pneg %p95
      $region82: #{mtr_encoder_forward.6} parent=71 // pred_check_branch
        %498 = sbr.rel (%p496) target = $region84
      $region83: #{mtr_encoder_forward.6} parent=71 // pred_region
        %p499 = scmp.lt.s32.totalorder %s23, 1
        %s500 = scalar_select %p499, %s23, 1
        %s501 = scalar_lea.vmem %s2, %s500
      $region84: #{mtr_encoder_forward.6} parent=71 // pred_fallthru
        _
    $region72: #{mtr_encoder_forward.6} parent=5 // pred_fallthru
      _
    %p502 = scmp.le.s32.totalorder 1, %s23
    %p503 = scmp.lt.s32.totalorder %s23, 3
    %p504 = pnand %p502, %p503
    %p505 = pneg %p504
    // Predicated region
    $region85: #{mtr_encoder_forward.6} parent=5 // pred_check
      _
    $region86: #{mtr_encoder_forward.6} parent=5 // pred_check_branch
      %507 = sbr.rel (%p504) target = $region88
    $region87: #{mtr_encoder_forward.6} parent=5 // pred_region
      %s508 = ssub.s32 %s23, 1
      %p509 = scmp.lt.s32.totalorder %s28, 1
      %s510 = scalar_select %p509, %s28, 1
      %s511 = smul.addr %s510, 8
      %s512 = scalar_lea.vmem %s0, %s511
      %p513 = pneg %p49
      %p514 = pneg %p46
      %p515 = scmp.lt.s32.totalorder %s28, 1
      %s516 = scalar_select %p515, %s28, 1
      %s517 = smul.addr %s516, 8
      %s518 = scalar_lea.vmem %s1, %s517
      %p519 = pneg %p75
      %p520 = pneg %p72
      %p521 = scmp.lt.s32.totalorder %s28, 1
      %s522 = scalar_select %p521, %s28, 1
      %s523 = scalar_lea.vmem %s2, %s522
      %p524 = pneg %p101
      %p525 = pneg %p98
      %p526 = pneg %p122
      %p527 = pneg %p119
      %p528 = pneg %p143
      %p529 = pneg %p140
      %p530 = pneg %p164
      %p531 = pneg %p161
      %p532 = pneg %p185
      %p533 = pneg %p182
      %p534 = pneg %p206
      %p535 = pneg %p203
      %p536 = pneg %p227
      %p537 = pneg %p224
      %p538 = pneg %p248
      %p539 = pneg %p245
      %p540 = pneg %p269
      %p541 = pneg %p266
      %p542 = pneg %p290
      %p543 = pneg %p287
      %p544 = pneg %p311
      %p545 = pneg %p308
      %p546 = pneg %p332
      %p547 = pneg %p329
      %p548 = pneg %p353
      %p549 = pneg %p350
      %p550 = pneg %p374
      %p551 = pneg %p371
      %p552 = pneg %p395
      %p553 = pneg %p392
      %p554 = pneg %p421
      %p555 = pneg %p418
      %p556 = scmp.lt.s32.totalorder %s28, 1
      %s557 = scalar_select %p556, %s28, 1
      %s558 = smul.addr %s557, 8
      %s559 = scalar_lea.vmem %s17, %s558
      %p560 = scmp.lt.s32.totalorder %s28, 1
      %s561 = scalar_select %p560, %s28, 1
      %s562 = smul.addr %s561, 8
      %s563 = scalar_lea.vmem %s0, %s562
      %p564 = scmp.lt.s32.totalorder %s28, 1
      %s565 = scalar_select %p564, %s28, 1
      %s566 = smul.addr %s565, 8
      %s567 = scalar_lea.vmem %s1, %s566
      %p568 = scmp.lt.s32.totalorder %s28, 1
      %s569 = scalar_select %p568, %s28, 1
      %s570 = scalar_lea.vmem %s2, %s569
      %p571 = scmp.lt.s32.totalorder %s28, 1
      %s572 = scalar_select %p571, %s28, 1
      %s573 = smul.addr %s572, 8
      %s574 = scalar_lea.vmem %s17, %s573
      %v576 = vld [vmem:[%s563] sm:$0xff]
      %v577 = vld [vmem:[%s567] sm:$0xff]
      %v578 = vadd.f32 %v576, %v577
      %v579 = vpack.c.bf16 %v578, %v578
      %v580 = vld [vmem:[%s3] sm:$0xff]
      %v581 = vld [vmem:[%s3 + $0x8] sm:$0xff]
      %v582 = vld [vmem:[%s3 + $0x10] sm:$0xff]
      %v583 = vld [vmem:[%s3 + $0x18] sm:$0xff]
      %v584 = vpack.c.bf16 %v581, %v580
      %v585 = vpack.c.bf16 %v583, %v582
      %v586 = vld [vmem:[%s4] sm:$0x1]
      %v588 = vlaneseq
      %v589 = vshrl.u32 %v588, 7
      %v590 = vsub.s32 0, %v589
      %v591 = vrot.slane %v586, %v590
      %vm593 = vcmask 261120
      %v595 = vsel %vm593, %v579, 0
      %597 = vmatprep.subr.bf16.mxu0 0
      %598 = vmatpush1.bf16.msra.mxu0 0
      %599 = vmatprep.subr.bf16.mxu0 0
      %600 = vmatpush1.bf16.msra.mxu0 0
      %601 = vmatprep.subr.bf16.mxu0 0
      %602 = vmatpush1.bf16.msra.mxu0 0
      %603 = vmatprep.subr.bf16.mxu0 0
      %604 = vmatpush1.bf16.msra.mxu0 0
      %605 = vmatprep.subr.bf16.mxu0 0
      %606 = vmatpush1.bf16.msra.mxu0 0
      %607 = vmatprep.subr.bf16.mxu0 0
      %608 = vmatpush1.bf16.msra.mxu0 0
      %609 = vmatprep.subr.bf16.mxu0 0
      %610 = vmatpush1.bf16.msra.mxu0 %v585
      %611 = vmatprep.subr.bf16.mxu0 0
      %612 = vmatpush1.bf16.msra.mxu0 %v584
      %613 = vmatprep.subr.bf16.mxu0 0
      %614 = vmatpush2.bf16.msra.mxu0 0
      %615 = vmatprep.subr.bf16.mxu0 0
      %616 = vmatpush2.bf16.msra.mxu0 0
      %617 = vmatprep.subr.bf16.mxu0 0
      %618 = vmatpush2.bf16.msra.mxu0 0
      %619 = vmatprep.subr.bf16.mxu0 0
      %620 = vmatpush2.bf16.msra.mxu0 0
      %621 = vmatprep.subr.bf16.mxu0 0
      %622 = vmatpush2.bf16.msra.mxu0 0
      %623 = vmatprep.subr.bf16.mxu0 0
      %624 = vmatpush2.bf16.msra.mxu0 0
      %625 = vmatprep.subr.bf16.mxu0 0
      %626 = vmatpush2.bf16.msra.mxu0 0
      %627 = vmatprep.subr.bf16.mxu0 0
      %628 = vmatpush2.bf16.msra.mxu0 0
      %629 = vmatprep.mubr.bf16.mxu0 0
      %630 = vmatmul.mubr.bf16.gmra.mxu0 %v595
      %v631 = vpop.f32.mrf.mxu0
      %v632 = vadd.f32 %v591, %v631
      %v633 = vpop.f32.mrf.mxu0
      %v634 = vpop.f32.mrf.mxu0
      %v635 = vpop.f32.mrf.mxu0
      %636 = vdwg.mxu0
      %v637 = vpack.c.bf16 %v576, %v576
      %v638 = vld [vmem:[%s5] sm:$0xff]
      %v639 = vld [vmem:[%s5 + $0x8] sm:$0xff]
      %v640 = vld [vmem:[%s5 + $0x10] sm:$0xff]
      %v641 = vld [vmem:[%s5 + $0x18] sm:$0xff]
      %v642 = vpack.c.bf16 %v639, %v638
      %v643 = vpack.c.bf16 %v641, %v640
      %v644 = vld [vmem:[%s6] sm:$0x1]
      %v646 = vlaneseq
      %v647 = vshrl.u32 %v646, 7
      %v648 = vsub.s32 0, %v647
      %v649 = vrot.slane %v644, %v648
      %v652 = vsel %vm593, %v637, 0
      %654 = vmatprep.subr.bf16.mxu0 0
      %655 = vmatpush1.bf16.msra.mxu0 0
      %656 = vmatprep.subr.bf16.mxu0 0
      %657 = vmatpush1.bf16.msra.mxu0 0
      %658 = vmatprep.subr.bf16.mxu0 0
      %659 = vmatpush1.bf16.msra.mxu0 0
      %660 = vmatprep.subr.bf16.mxu0 0
      %661 = vmatpush1.bf16.msra.mxu0 0
      %662 = vmatprep.subr.bf16.mxu0 0
      %663 = vmatpush1.bf16.msra.mxu0 0
      %664 = vmatprep.subr.bf16.mxu0 0
      %665 = vmatpush1.bf16.msra.mxu0 0
      %666 = vmatprep.subr.bf16.mxu0 0
      %667 = vmatpush1.bf16.msra.mxu0 %v643
      %668 = vmatprep.subr.bf16.mxu0 0
      %669 = vmatpush1.bf16.msra.mxu0 %v642
      %670 = vmatprep.subr.bf16.mxu0 0
      %671 = vmatpush2.bf16.msra.mxu0 0
      %672 = vmatprep.subr.bf16.mxu0 0
      %673 = vmatpush2.bf16.msra.mxu0 0
      %674 = vmatprep.subr.bf16.mxu0 0
      %675 = vmatpush2.bf16.msra.mxu0 0
      %676 = vmatprep.subr.bf16.mxu0 0
      %677 = vmatpush2.bf16.msra.mxu0 0
      %678 = vmatprep.subr.bf16.mxu0 0
      %679 = vmatpush2.bf16.msra.mxu0 0
      %680 = vmatprep.subr.bf16.mxu0 0
      %681 = vmatpush2.bf16.msra.mxu0 0
      %682 = vmatprep.subr.bf16.mxu0 0
      %683 = vmatpush2.bf16.msra.mxu0 0
      %684 = vmatprep.subr.bf16.mxu0 0
      %685 = vmatpush2.bf16.msra.mxu0 0
      %686 = vmatprep.mubr.bf16.mxu0 0
      %687 = vmatmul.mubr.bf16.gmra.mxu0 %v652
      %v688 = vpop.f32.mrf.mxu0
      %v689 = vadd.f32 %v649, %v688
      %v690 = vpop.f32.mrf.mxu0
      %v691 = vpop.f32.mrf.mxu0
      %v692 = vpop.f32.mrf.mxu0
      %693 = vdwg.mxu0
      %v694 = vld [vmem:[%s570] sm:$0x1]
      %v695 = vld [vmem:[%s7] sm:$0xff]
      %v696 = vld [vmem:[%s7 + $0x8] sm:$0xff]
      %v697 = vld [vmem:[%s7 + $0x10] sm:$0xff]
      %v698 = vld [vmem:[%s7 + $0x18] sm:$0xff]
      %v699 = vpack.c.bf16 %v632, %v632
      %v701 = vlaneseq
      %v702 = vshrl.u32 %v701, 7
      %v703 = vsub.s32 0, %v702
      %v704 = vrot.slane %v694, %v703
      %707 = vrot.lane.b32.xlu0 %v699, 96
      %v708 = vpop.permute.xlu0 %707
      %vm709 = vcmask 130048
      %v711 = vsel %vm709, %v699, 0
      %v714 = vsel %vm709, %v708, 0
      %716 = vmatprep.subr.bf16.mxu0 0
      %717 = vmatpush1.bf16.xpose.msra.mxu0 0
      %718 = vmatprep.subr.bf16.mxu0 0
      %719 = vmatpush1.bf16.xpose.msra.mxu0 0
      %720 = vmatprep.subr.bf16.mxu0 0
      %721 = vmatpush1.bf16.xpose.msra.mxu0 0
      %722 = vmatprep.subr.bf16.mxu0 0
      %723 = vmatpush1.bf16.xpose.msra.mxu0 0
      %724 = vmatprep.subr.bf16.mxu0 0
      %725 = vmatpush1.bf16.xpose.msra.mxu0 0
      %726 = vmatprep.subr.bf16.mxu0 0
      %727 = vmatpush1.bf16.xpose.msra.mxu0 0
      %728 = vmatprep.subr.bf16.mxu0 0
      %729 = vmatpush1.bf16.xpose.msra.mxu0 0
      %730 = vmatprep.subr.bf16.mxu0 0
      %731 = vmatpush1.bf16.xpose.msra.mxu0 %v714
      %732 = vmatprep.subr.bf16.mxu0 0
      %733 = vmatpush2.bf16.xpose.msra.mxu0 0
      %734 = vmatprep.subr.bf16.mxu0 0
      %735 = vmatpush2.bf16.xpose.msra.mxu0 0
      %736 = vmatprep.subr.bf16.mxu0 0
      %737 = vmatpush2.bf16.xpose.msra.mxu0 0
      %738 = vmatprep.subr.bf16.mxu0 0
      %739 = vmatpush2.bf16.xpose.msra.mxu0 0
      %740 = vmatprep.subr.bf16.mxu0 0
      %741 = vmatpush2.bf16.xpose.msra.mxu0 0
      %742 = vmatprep.subr.bf16.mxu0 0
      %743 = vmatpush2.bf16.xpose.msra.mxu0 0
      %744 = vmatprep.subr.bf16.mxu0 0
      %745 = vmatpush2.bf16.xpose.msra.mxu0 0
      %746 = vmatprep.subr.bf16.mxu0 0
      %747 = vmatpush2.bf16.xpose.msra.mxu0 0
      %748 = vmatprep.mubr.bf16.mxu0 0
      %749 = vmatmul.mubr.bf16.gmra.mxu0 %v711
      %v750 = vpop.f32.mrf.mxu0
      %v751 = vadd.f32 %v704, %v750
      %v752 = vpop.f32.mrf.mxu0
      %v753 = vpop.f32.mrf.mxu0
      %v754 = vpop.f32.mrf.mxu0
      %755 = vdwg.mxu0
      %vm756 = vcmask 64512
      %v757 = vsel %vm756, %v751, -inf
      %758 = vmax.xlane.f32.xlu0 %v757
      %v759 = vpop.xlane.xlu0 %758
      %v760 = vsub.f32 %v751, %v759
      %v761 = vmul.f32 %v760, 1.442695
      %v762 = vpow.pop %v761
      %v763 = vsel %vm756, %v762, 0.0
      %764 = vadd.xlane.f32.xlu0 %v763
      %v765 = vpop.xlane.xlu0 %764
      %v766 = vrcp.pop %v765
      %v767 = vmul.f32 %v762, %v766
      %v768 = vpack.c.bf16 %v767, %v767
      %v769 = vpack.c.bf16 %v689, %v689
      %v771 = vsel %vm756, %v768, 0
      %vm773 = vcmask 1043456
      %v775 = vsel %vm773, %v769, 0
      %777 = vmatprep.subr.bf16.mxu0 0
      %778 = vmatpush1.bf16.msra.mxu0 0
      %779 = vmatprep.subr.bf16.mxu0 0
      %780 = vmatpush1.bf16.msra.mxu0 0
      %781 = vmatprep.subr.bf16.mxu0 0
      %782 = vmatpush1.bf16.msra.mxu0 0
      %783 = vmatprep.subr.bf16.mxu0 0
      %784 = vmatpush1.bf16.msra.mxu0 0
      %785 = vmatprep.subr.bf16.mxu0 0
      %786 = vmatpush1.bf16.msra.mxu0 0
      %787 = vmatprep.subr.bf16.mxu0 0
      %788 = vmatpush1.bf16.msra.mxu0 0
      %789 = vmatprep.subr.bf16.mxu0 0
      %790 = vmatpush1.bf16.msra.mxu0 0
      %791 = vmatprep.subr.bf16.mxu0 0
      %792 = vmatpush1.bf16.msra.mxu0 %v775
      %793 = vmatprep.subr.bf16.mxu0 0
      %794 = vmatpush2.bf16.msra.mxu0 0
      %795 = vmatprep.subr.bf16.mxu0 0
      %796 = vmatpush2.bf16.msra.mxu0 0
      %797 = vmatprep.subr.bf16.mxu0 0
      %798 = vmatpush2.bf16.msra.mxu0 0
      %799 = vmatprep.subr.bf16.mxu0 0
      %800 = vmatpush2.bf16.msra.mxu0 0
      %801 = vmatprep.subr.bf16.mxu0 0
      %802 = vmatpush2.bf16.msra.mxu0 0
      %803 = vmatprep.subr.bf16.mxu0 0
      %804 = vmatpush2.bf16.msra.mxu0 0
      %805 = vmatprep.subr.bf16.mxu0 0
      %806 = vmatpush2.bf16.msra.mxu0 0
      %807 = vmatprep.subr.bf16.mxu0 0
      %808 = vmatpush2.bf16.msra.mxu0 0
      %809 = vmatprep.mubr.bf16.mxu0 0
      %810 = vmatmul.mubr.bf16.gmra.mxu0 %v771
      %v811 = vpop.f32.mrf.mxu0
      %v812 = vadd.f32 0.0, %v811
      %v813 = vpop.f32.mrf.mxu0
      %v814 = vpop.f32.mrf.mxu0
      %v815 = vpop.f32.mrf.mxu0
      %816 = vdwg.mxu0
      %v817 = vpack.c.bf16 %v812, %v812
      %v818 = vpack.c.bf16 %v696, %v695
      %819 = vrot.lane.b32.xlu0 %v699, 112
      %v820 = vpop.permute.xlu0 %819
      %821 = vrot.lane.b32.xlu0 %v699, 80
      %v822 = vpop.permute.xlu0 %821
      %v824 = vsel %vm709, %v820, 0
      %v827 = vsel %vm709, %v822, 0
      %829 = vmatprep.subr.bf16.mxu0 0
      %830 = vmatpush1.bf16.xpose.msra.mxu0 0
      %831 = vmatprep.subr.bf16.mxu0 0
      %832 = vmatpush1.bf16.xpose.msra.mxu0 0
      %833 = vmatprep.subr.bf16.mxu0 0
      %834 = vmatpush1.bf16.xpose.msra.mxu0 0
      %835 = vmatprep.subr.bf16.mxu0 0
      %836 = vmatpush1.bf16.xpose.msra.mxu0 0
      %837 = vmatprep.subr.bf16.mxu0 0
      %838 = vmatpush1.bf16.xpose.msra.mxu0 0
      %839 = vmatprep.subr.bf16.mxu0 0
      %840 = vmatpush1.bf16.xpose.msra.mxu0 0
      %841 = vmatprep.subr.bf16.mxu0 0
      %842 = vmatpush1.bf16.xpose.msra.mxu0 0
      %843 = vmatprep.subr.bf16.mxu0 0
      %844 = vmatpush1.bf16.xpose.msra.mxu0 %v827
      %845 = vmatprep.subr.bf16.mxu0 0
      %846 = vmatpush2.bf16.xpose.msra.mxu0 0
      %847 = vmatprep.subr.bf16.mxu0 0
      %848 = vmatpush2.bf16.xpose.msra.mxu0 0
      %849 = vmatprep.subr.bf16.mxu0 0
      %850 = vmatpush2.bf16.xpose.msra.mxu0 0
      %851 = vmatprep.subr.bf16.mxu0 0
      %852 = vmatpush2.bf16.xpose.msra.mxu0 0
      %853 = vmatprep.subr.bf16.mxu0 0
      %854 = vmatpush2.bf16.xpose.msra.mxu0 0
      %855 = vmatprep.subr.bf16.mxu0 0
      %856 = vmatpush2.bf16.xpose.msra.mxu0 0
      %857 = vmatprep.subr.bf16.mxu0 0
      %858 = vmatpush2.bf16.xpose.msra.mxu0 0
      %859 = vmatprep.subr.bf16.mxu0 0
      %860 = vmatpush2.bf16.xpose.msra.mxu0 0
      %861 = vmatprep.mubr.bf16.mxu0 0
      %862 = vmatmul.mubr.bf16.gmra.mxu0 %v824
      %v863 = vpop.f32.mrf.mxu0
      %v864 = vadd.f32 %v704, %v863
      %v865 = vpop.f32.mrf.mxu0
      %v866 = vpop.f32.mrf.mxu0
      %v867 = vpop.f32.mrf.mxu0
      %868 = vdwg.mxu0
      %v869 = vsel %vm756, %v864, -inf
      %870 = vmax.xlane.f32.xlu0 %v869
      %v871 = vpop.xlane.xlu0 %870
      %v872 = vsub.f32 %v864, %v871
      %v873 = vmul.f32 %v872, 1.442695
      %v874 = vpow.pop %v873
      %v875 = vsel %vm756, %v874, 0.0
      %876 = vadd.xlane.f32.xlu0 %v875
      %v877 = vpop.xlane.xlu0 %876
      %v878 = vrcp.pop %v877
      %v879 = vmul.f32 %v874, %v878
      %v880 = vpack.c.bf16 %v879, %v879
      %882 = vrot.lane.b32.xlu0 %v769, 112
      %v883 = vpop.permute.xlu0 %882
      %v885 = vsel %vm756, %v880, 0
      %v888 = vsel %vm773, %v883, 0
      %890 = vmatprep.subr.bf16.mxu0 0
      %891 = vmatpush1.bf16.msra.mxu0 0
      %892 = vmatprep.subr.bf16.mxu0 0
      %893 = vmatpush1.bf16.msra.mxu0 0
      %894 = vmatprep.subr.bf16.mxu0 0
      %895 = vmatpush1.bf16.msra.mxu0 0
      %896 = vmatprep.subr.bf16.mxu0 0
      %897 = vmatpush1.bf16.msra.mxu0 0
      %898 = vmatprep.subr.bf16.mxu0 0
      %899 = vmatpush1.bf16.msra.mxu0 0
      %900 = vmatprep.subr.bf16.mxu0 0
      %901 = vmatpush1.bf16.msra.mxu0 0
      %902 = vmatprep.subr.bf16.mxu0 0
      %903 = vmatpush1.bf16.msra.mxu0 0
      %904 = vmatprep.subr.bf16.mxu0 0
      %905 = vmatpush1.bf16.msra.mxu0 %v888
      %906 = vmatprep.subr.bf16.mxu0 0
      %907 = vmatpush2.bf16.msra.mxu0 0
      %908 = vmatprep.subr.bf16.mxu0 0
      %909 = vmatpush2.bf16.msra.mxu0 0
      %910 = vmatprep.subr.bf16.mxu0 0
      %911 = vmatpush2.bf16.msra.mxu0 0
      %912 = vmatprep.subr.bf16.mxu0 0
      %913 = vmatpush2.bf16.msra.mxu0 0
      %914 = vmatprep.subr.bf16.mxu0 0
      %915 = vmatpush2.bf16.msra.mxu0 0
      %916 = vmatprep.subr.bf16.mxu0 0
      %917 = vmatpush2.bf16.msra.mxu0 0
      %918 = vmatprep.subr.bf16.mxu0 0
      %919 = vmatpush2.bf16.msra.mxu0 0
      %920 = vmatprep.subr.bf16.mxu0 0
      %921 = vmatpush2.bf16.msra.mxu0 0
      %922 = vmatprep.mubr.bf16.mxu0 0
      %923 = vmatmul.mubr.bf16.gmra.mxu0 %v885
      %v924 = vpop.f32.mrf.mxu0
      %v925 = vadd.f32 0.0, %v924
      %v926 = vpop.f32.mrf.mxu0
      %v927 = vpop.f32.mrf.mxu0
      %v928 = vpop.f32.mrf.mxu0
      %929 = vdwg.mxu0
      %v930 = vpack.c.bf16 %v925, %v925
      %v931 = vpack.c.bf16 %v698, %v697
      %v933 = vsel %vm709, %v930, 0
      %935 = vmatprep.subr.bf16.mxu0 0
      %936 = vmatpush1.bf16.msra.mxu0 0
      %937 = vmatprep.subr.bf16.mxu0 0
      %938 = vmatpush1.bf16.msra.mxu0 0
      %939 = vmatprep.subr.bf16.mxu0 0
      %940 = vmatpush1.bf16.msra.mxu0 0
      %941 = vmatprep.subr.bf16.mxu0 0
      %942 = vmatpush1.bf16.msra.mxu0 0
      %943 = vmatprep.subr.bf16.mxu0 0
      %944 = vmatpush1.bf16.msra.mxu0 0
      %945 = vmatprep.subr.bf16.mxu0 0
      %946 = vmatpush1.bf16.msra.mxu0 0
      %947 = vmatprep.subr.bf16.mxu0 0
      %948 = vmatpush1.bf16.msra.mxu0 0
      %949 = vmatprep.subr.bf16.mxu0 0
      %950 = vmatpush1.bf16.msra.mxu0 %v931
      %951 = vmatprep.subr.bf16.mxu0 0
      %952 = vmatpush2.bf16.msra.mxu0 0
      %953 = vmatprep.subr.bf16.mxu0 0
      %954 = vmatpush2.bf16.msra.mxu0 0
      %955 = vmatprep.subr.bf16.mxu0 0
      %956 = vmatpush2.bf16.msra.mxu0 0
      %957 = vmatprep.subr.bf16.mxu0 0
      %958 = vmatpush2.bf16.msra.mxu0 0
      %959 = vmatprep.subr.bf16.mxu0 0
      %960 = vmatpush2.bf16.msra.mxu0 0
      %961 = vmatprep.subr.bf16.mxu0 0
      %962 = vmatpush2.bf16.msra.mxu0 0
      %963 = vmatprep.subr.bf16.mxu0 0
      %964 = vmatpush2.bf16.msra.mxu0 0
      %965 = vmatprep.subr.bf16.mxu0 0
      %966 = vmatpush2.bf16.msra.mxu0 0
      %967 = vmatprep.mubr.bf16.mxu0 0
      %968 = vmatmul.mubr.bf16.gmra.mxu0 %v933
      %v969 = vpop.f32.mrf.mxu0
      %v970 = vadd.f32 0.0, %v969
      %v971 = vpop.f32.mrf.mxu0
      %v972 = vpop.f32.mrf.mxu0
      %v973 = vpop.f32.mrf.mxu0
      %974 = vdwg.mxu0
      %v976 = vsel %vm709, %v817, 0
      %978 = vmatprep.subr.bf16.mxu0 0
      %979 = vmatpush1.bf16.msra.mxu0 0
      %980 = vmatprep.subr.bf16.mxu0 0
      %981 = vmatpush1.bf16.msra.mxu0 0
      %982 = vmatprep.subr.bf16.mxu0 0
      %983 = vmatpush1.bf16.msra.mxu0 0
      %984 = vmatprep.subr.bf16.mxu0 0
      %985 = vmatpush1.bf16.msra.mxu0 0
      %986 = vmatprep.subr.bf16.mxu0 0
      %987 = vmatpush1.bf16.msra.mxu0 0
      %988 = vmatprep.subr.bf16.mxu0 0
      %989 = vmatpush1.bf16.msra.mxu0 0
      %990 = vmatprep.subr.bf16.mxu0 0
      %991 = vmatpush1.bf16.msra.mxu0 0
      %992 = vmatprep.subr.bf16.mxu0 0
      %993 = vmatpush1.bf16.msra.mxu0 %v818
      %994 = vmatprep.subr.bf16.mxu0 0
      %995 = vmatpush2.bf16.msra.mxu0 0
      %996 = vmatprep.subr.bf16.mxu0 0
      %997 = vmatpush2.bf16.msra.mxu0 0
      %998 = vmatprep.subr.bf16.mxu0 0
      %999 = vmatpush2.bf16.msra.mxu0 0
      %1000 = vmatprep.subr.bf16.mxu0 0
      %1001 = vmatpush2.bf16.msra.mxu0 0
      %1002 = vmatprep.subr.bf16.mxu0 0
      %1003 = vmatpush2.bf16.msra.mxu0 0
      %1004 = vmatprep.subr.bf16.mxu0 0
      %1005 = vmatpush2.bf16.msra.mxu0 0
      %1006 = vmatprep.subr.bf16.mxu0 0
      %1007 = vmatpush2.bf16.msra.mxu0 0
      %1008 = vmatprep.subr.bf16.mxu0 0
      %1009 = vmatpush2.bf16.msra.mxu0 0
      %1010 = vmatprep.mubr.bf16.mxu0 0
      %1011 = vmatmul.mubr.bf16.gmra.mxu0 %v976
      %v1012 = vpop.f32.mrf.mxu0
      %v1013 = vadd.f32 %v970, %v1012
      %v1014 = vpop.f32.mrf.mxu0
      %v1015 = vpop.f32.mrf.mxu0
      %v1016 = vpop.f32.mrf.mxu0
      %1017 = vdwg.mxu0
      %v1018 = vadd.f32 %v576, %v1013
      %v1019 = vld [vmem:[%s8] sm:$0x1]
      %v1021 = vlaneseq
      %v1022 = vshrl.u32 %v1021, 7
      %v1023 = vsub.s32 0, %v1022
      %v1024 = vrot.slane %v1019, %v1023
      %v1026 = vadd.f32 %v1018, %v1024
      %v1027 = vld [vmem:[%s9] sm:$0x1]
      %v1028 = vld [vmem:[%s10] sm:$0x1]
      %v1029 = vsel %vm593, %v1026, 0.0
      %1030 = vadd.xlane.f32.xlu0 %v1029
      %v1031 = vpop.xlane.xlu0 %1030
      %v1032 = vrcp.pop 32.0
      %v1033 = vmul.f32 %v1031, %v1032
      %v1034 = vsub.f32 %v1026, %v1033
      %v1035 = vmul.f32 %v1034, %v1034
      %v1036 = vsel %vm593, %v1035, 0.0
      %1037 = vadd.xlane.f32.xlu0 %v1036
      %v1038 = vpop.xlane.xlu0 %1037
      %v1039 = vmul.f32 %v1038, %v1032
      %v1040 = vadd.f32 %v1039, 1e-05
      %v1041 = vrsqrt.pop %v1040
      %v1042 = vmul.f32 %v1034, %v1041
      %v1044 = vlaneseq
      %v1045 = vshrl.u32 %v1044, 7
      %v1046 = vsub.s32 0, %v1045
      %v1047 = vrot.slane %v1027, %v1046
      %v1049 = vmul.f32 %v1042, %v1047
      %v1051 = vlaneseq
      %v1052 = vshrl.u32 %v1051, 7
      %v1053 = vsub.s32 0, %v1052
      %v1054 = vrot.slane %v1028, %v1053
      %v1056 = vadd.f32 %v1049, %v1054
      %v1057 = vpack.c.bf16 %v1056, %v1056
      %v1058 = vld [vmem:[%s11] sm:$0xff]
      %v1059 = vld [vmem:[%s11 + $0x8] sm:$0xff]
      %v1060 = vld [vmem:[%s11 + $0x10] sm:$0xff]
      %v1061 = vld [vmem:[%s11 + $0x18] sm:$0xff]
      %v1062 = vpack.c.bf16 %v1059, %v1058
      %v1063 = vpack.c.bf16 %v1061, %v1060
      %v1064 = vld [vmem:[%s12] sm:$0x1]
      %v1066 = vlaneseq
      %v1067 = vshrl.u32 %v1066, 7
      %v1068 = vsub.s32 0, %v1067
      %v1069 = vrot.slane %v1064, %v1068
      %v1072 = vsel %vm593, %v1057, 0
      %1074 = vmatprep.subr.bf16.mxu0 0
      %1075 = vmatpush1.bf16.msra.mxu0 0
      %1076 = vmatprep.subr.bf16.mxu0 0
      %1077 = vmatpush1.bf16.msra.mxu0 0
      %1078 = vmatprep.subr.bf16.mxu0 0
      %1079 = vmatpush1.bf16.msra.mxu0 0
      %1080 = vmatprep.subr.bf16.mxu0 0
      %1081 = vmatpush1.bf16.msra.mxu0 0
      %1082 = vmatprep.subr.bf16.mxu0 0
      %1083 = vmatpush1.bf16.msra.mxu0 0
      %1084 = vmatprep.subr.bf16.mxu0 0
      %1085 = vmatpush1.bf16.msra.mxu0 0
      %1086 = vmatprep.subr.bf16.mxu0 0
      %1087 = vmatpush1.bf16.msra.mxu0 %v1063
      %1088 = vmatprep.subr.bf16.mxu0 0
      %1089 = vmatpush1.bf16.msra.mxu0 %v1062
      %1090 = vmatprep.subr.bf16.mxu0 0
      %1091 = vmatpush2.bf16.msra.mxu0 0
      %1092 = vmatprep.subr.bf16.mxu0 0
      %1093 = vmatpush2.bf16.msra.mxu0 0
      %1094 = vmatprep.subr.bf16.mxu0 0
      %1095 = vmatpush2.bf16.msra.mxu0 0
      %1096 = vmatprep.subr.bf16.mxu0 0
      %1097 = vmatpush2.bf16.msra.mxu0 0
      %1098 = vmatprep.subr.bf16.mxu0 0
      %1099 = vmatpush2.bf16.msra.mxu0 0
      %1100 = vmatprep.subr.bf16.mxu0 0
      %1101 = vmatpush2.bf16.msra.mxu0 0
      %1102 = vmatprep.subr.bf16.mxu0 0
      %1103 = vmatpush2.bf16.msra.mxu0 0
      %1104 = vmatprep.subr.bf16.mxu0 0
      %1105 = vmatpush2.bf16.msra.mxu0 0
      %1106 = vmatprep.mubr.bf16.mxu0 0
      %1107 = vmatmul.mubr.bf16.gmra.mxu0 %v1072
      %v1108 = vpop.f32.mrf.mxu0
      %v1109 = vadd.f32 %v1069, %v1108
      %v1110 = vpop.f32.mrf.mxu0
      %v1111 = vpop.f32.mrf.mxu0
      %v1112 = vpop.f32.mrf.mxu0
      %1113 = vdwg.mxu0
      %v1114 = vmax.f32 %v1109, 0.0
      %v1115 = vpack.c.bf16 %v1114, %v1114
      %v1116 = vld [vmem:[%s13] sm:$0xff]
      %v1117 = vld [vmem:[%s13 + $0x8] sm:$0xff]
      %v1118 = vld [vmem:[%s13 + $0x10] sm:$0xff]
      %v1119 = vld [vmem:[%s13 + $0x18] sm:$0xff]
      %v1120 = vld [vmem:[%s13 + $0x20] sm:$0xff]
      %v1121 = vld [vmem:[%s13 + $0x28] sm:$0xff]
      %v1122 = vld [vmem:[%s13 + $0x30] sm:$0xff]
      %v1123 = vld [vmem:[%s13 + $0x38] sm:$0xff]
      %v1124 = vld [vmem:[%s13 + $0x40] sm:$0xff]
      %v1125 = vld [vmem:[%s13 + $0x48] sm:$0xff]
      %v1126 = vld [vmem:[%s13 + $0x50] sm:$0xff]
      %v1127 = vld [vmem:[%s13 + $0x58] sm:$0xff]
      %v1128 = vld [vmem:[%s13 + $0x60] sm:$0xff]
      %v1129 = vld [vmem:[%s13 + $0x68] sm:$0xff]
      %v1130 = vld [vmem:[%s13 + $0x70] sm:$0xff]
      %v1131 = vld [vmem:[%s13 + $0x78] sm:$0xff]
      %v1132 = vpack.c.bf16 %v1117, %v1116
      %v1133 = vpack.c.bf16 %v1119, %v1118
      %v1134 = vpack.c.bf16 %v1121, %v1120
      %v1135 = vpack.c.bf16 %v1123, %v1122
      %v1136 = vpack.c.bf16 %v1125, %v1124
      %v1137 = vpack.c.bf16 %v1127, %v1126
      %v1138 = vpack.c.bf16 %v1129, %v1128
      %v1139 = vpack.c.bf16 %v1131, %v1130
      %v1140 = vld [vmem:[%s14] sm:$0x1]
      %v1142 = vlaneseq
      %v1143 = vshrl.u32 %v1142, 7
      %v1144 = vsub.s32 0, %v1143
      %v1145 = vrot.slane %v1140, %v1144
      %1147 = vmatprep.subr.bf16.mxu0 0
      %1148 = vmatpush1.bf16.msra.mxu0 %v1139
      %1149 = vmatprep.subr.bf16.mxu0 0
      %1150 = vmatpush1.bf16.msra.mxu0 %v1138
      %1151 = vmatprep.subr.bf16.mxu0 0
      %1152 = vmatpush1.bf16.msra.mxu0 %v1137
      %1153 = vmatprep.subr.bf16.mxu0 0
      %1154 = vmatpush1.bf16.msra.mxu0 %v1136
      %1155 = vmatprep.subr.bf16.mxu0 0
      %1156 = vmatpush1.bf16.msra.mxu0 %v1135
      %1157 = vmatprep.subr.bf16.mxu0 0
      %1158 = vmatpush1.bf16.msra.mxu0 %v1134
      %1159 = vmatprep.subr.bf16.mxu0 0
      %1160 = vmatpush1.bf16.msra.mxu0 %v1133
      %1161 = vmatprep.subr.bf16.mxu0 0
      %1162 = vmatpush1.bf16.msra.mxu0 %v1132
      %1163 = vmatprep.subr.bf16.mxu0 0
      %1164 = vmatpush2.bf16.msra.mxu0 0
      %1165 = vmatprep.subr.bf16.mxu0 0
      %1166 = vmatpush2.bf16.msra.mxu0 0
      %1167 = vmatprep.subr.bf16.mxu0 0
      %1168 = vmatpush2.bf16.msra.mxu0 0
      %1169 = vmatprep.subr.bf16.mxu0 0
      %1170 = vmatpush2.bf16.msra.mxu0 0
      %1171 = vmatprep.subr.bf16.mxu0 0
      %1172 = vmatpush2.bf16.msra.mxu0 0
      %1173 = vmatprep.subr.bf16.mxu0 0
      %1174 = vmatpush2.bf16.msra.mxu0 0
      %1175 = vmatprep.subr.bf16.mxu0 0
      %1176 = vmatpush2.bf16.msra.mxu0 0
      %1177 = vmatprep.subr.bf16.mxu0 0
      %1178 = vmatpush2.bf16.msra.mxu0 0
      %1179 = vmatprep.mubr.bf16.mxu0 0
      %1180 = vmatmul.mubr.bf16.gmra.mxu0 %v1115
      %v1181 = vpop.f32.mrf.mxu0
      %v1182 = vadd.f32 %v1145, %v1181
      %v1183 = vpop.f32.mrf.mxu0
      %v1184 = vpop.f32.mrf.mxu0
      %v1185 = vpop.f32.mrf.mxu0
      %1186 = vdwg.mxu0
      %v1187 = vadd.f32 %v1056, %v1182
      %v1188 = vld [vmem:[%s15] sm:$0x1]
      %v1189 = vld [vmem:[%s16] sm:$0x1]
      %v1190 = vsel %vm593, %v1187, 0.0
      %1191 = vadd.xlane.f32.xlu0 %v1190
      %v1192 = vpop.xlane.xlu0 %1191
      %v1193 = vmul.f32 %v1192, %v1032
      %v1194 = vsub.f32 %v1187, %v1193
      %v1195 = vmul.f32 %v1194, %v1194
      %v1196 = vsel %vm593, %v1195, 0.0
      %1197 = vadd.xlane.f32.xlu0 %v1196
      %v1198 = vpop.xlane.xlu0 %1197
      %v1199 = vmul.f32 %v1198, %v1032
      %v1200 = vadd.f32 %v1199, 1e-05
      %v1201 = vrsqrt.pop %v1200
      %v1202 = vmul.f32 %v1194, %v1201
      %v1204 = vlaneseq
      %v1205 = vshrl.u32 %v1204, 7
      %v1206 = vsub.s32 0, %v1205
      %v1207 = vrot.slane %v1188, %v1206
      %v1209 = vmul.f32 %v1202, %v1207
      %v1211 = vlaneseq
      %v1212 = vshrl.u32 %v1211, 7
      %v1213 = vsub.s32 0, %v1212
      %v1214 = vrot.slane %v1189, %v1213
      %v1216 = vadd.f32 %v1209, %v1214
      %1217 = vst.msk [vmem:[%s574] sm:$0xff] %vm593, %v1216
      %p1218 = scmp.lt.s32.totalorder %s28, 1
      %s1219 = scalar_select %p1218, %s28, 1
      %s1220 = smul.addr %s1219, 8
      %s1221 = scalar_lea.vmem %s17, %s1220
      // Predicated region
      $region89: #{mtr_encoder_forward.6} parent=87 // pred_check
        %p1222 = pneg %p418
      $region90: #{mtr_encoder_forward.6} parent=87 // pred_check_branch
        %1224 = sbr.rel (%p1222) target = $region92
      $region91: #{mtr_encoder_forward.6} parent=87 // pred_region
        _
      $region92: #{mtr_encoder_forward.6} parent=87 // pred_fallthru
        _
    $region88: #{mtr_encoder_forward.6} parent=5 // pred_fallthru
      _
    %p1225 = scmp.le.s32.totalorder 2, %s23
    // Predicated region
    $region93: #{mtr_encoder_forward.6} parent=5 // pred_check
      %p1226 = pneg %p1225
    $region94: #{mtr_encoder_forward.6} parent=5 // pred_check_branch
      %1228 = sbr.rel (%p1226) target = $region96
    $region95: #{mtr_encoder_forward.6} parent=5 // pred_region
      %s1229 = ssub.s32 %s23, 2
      // Predicated region
      $region97: #{mtr_encoder_forward.6} parent=95 // pred_check
        %p1230 = pneg %p424
      $region98: #{mtr_encoder_forward.6} parent=95 // pred_check_branch
        %1232 = sbr.rel (%p1230) target = $region100
      $region99: #{mtr_encoder_forward.6} parent=95 // pred_region
        %p1233 = scmp.lt.s32.totalorder %s29, 1
        %s1234 = scalar_select %p1233, %s29, 1
        %s1235 = smul.addr %s1234, 8
        %s1236 = scalar_lea.vmem %s17, %s1235
      $region100: #{mtr_encoder_forward.6} parent=95 // pred_fallthru
        _
    $region96: #{mtr_encoder_forward.6} parent=5 // pred_fallthru
      _
  $region6: #{mtr_encoder_forward.6} parent=0 // loop_footer
    %s27 = sadd.s32 1, %s23
  $region7: #{mtr_encoder_forward.6} parent=0 // loop_footer_branch
    %22 = sbr.rel target = $region3
  $region8: #{mtr_encoder_forward.6} parent=0 // loop_exit
    _

</llo_original>
